<compile_context>
chip_gen: v5e
topology: v5e:2x2
jax: 0.10.0
libtpu: 0.0.40
codegen_flags: <defaults>
</compile_context>

<pallas_src>
import functools
import math

import jax
import jax.numpy as jnp
from jax import lax
from jax.experimental import pallas as pl
from jax.experimental.pallas import tpu as pltpu

EPS_LN = 1e-5
EPS_BN = 1e-5


# ----------------------- in-kernel math helpers (on values) -----------------------
def _layer_norm(x, g, b):
    mu = jnp.mean(x, axis=-1, keepdims=True)
    var = jnp.mean((x - mu) ** 2, axis=-1, keepdims=True)
    return (x - mu) * jax.lax.rsqrt(var + EPS_LN) * g + b


def _softmax(s):
    m = jnp.max(s, axis=-1, keepdims=True)
    e = jnp.exp(s - m)
    # Exact divide: the approx EUP reciprocal was the source of the 4e-3 error.
    return e / jnp.sum(e, axis=-1, keepdims=True)


def _silu(x):
    return x * jax.nn.sigmoid(x)


# ------------------------------ fused Pallas kernel --------------------------------
def conformer_kernel(
    x_ref,
    # shared feed-forward (used twice)
    ff_g, ff_b, ff_w1, ff_b1, ff_w2, ff_b2,
    # token self-attention (embed_dim = D)
    ln1_g, ln1_b, pe_ref,
    tq_w, tq_b, tk_w, tk_b, tv_w, tv_b, to_w, to_b,
    # embedding self-attention (embed_dim = L)
    ln2_g, ln2_b,
    eq_w, eq_b, ek_w, ek_b, ev_w, ev_b, eo_w, eo_bc,
    # conv module (BN already folded into wd/bd on host)
    cv_g, cv_b, wa, ba, wg, bg, wd, bd, wp, bp,
    # final layer norm
    fin_g, fin_b,
    o_ref,
):
    x = x_ref[0]                                                          # (L, D)
    L, D = x.shape

    def ffn(x):
        # ResidualConnection(LN -> Linear -> SiLU -> Linear, scale=0.5)
        h = _layer_norm(x, ff_g[...], ff_b[...])
        h = jnp.dot(h, ff_w1[...], preferred_element_type=jnp.float32) + ff_b1[...]
        h = _silu(h)
        h = jnp.dot(h, ff_w2[...], preferred_element_type=jnp.float32) + ff_b2[...]
        return x + 0.5 * h

    # ---------------- feed_forward #1 ----------------
    x = ffn(x)

    # ---------------- token self-attention (over L, embed_dim = D) ----------------
    h = _layer_norm(x, ln1_g[...], ln1_b[...]) + pe_ref[...]
    q = jnp.dot(h, tq_w[...], preferred_element_type=jnp.float32) + tq_b[...]
    k = jnp.dot(h, tk_w[...], preferred_element_type=jnp.float32) + tk_b[...]
    v = jnp.dot(h, tv_w[...], preferred_element_type=jnp.float32) + tv_b[...]
    s = lax.dot_general(q, k, (((1,), (1,)), ((), ())),
                        preferred_element_type=jnp.float32) * (1.0 / math.sqrt(D))
    a = _softmax(s)                                                       # (L, L)
    c = jnp.dot(a, v, preferred_element_type=jnp.float32)
    x = x + jnp.dot(c, to_w[...], preferred_element_type=jnp.float32) + to_b[...]

    # ------------- embedding self-attention (over D, embed_dim = L) -------------
    # Permute(0,2,1) is folded into dot_general contractions: no explicit h.T / out.T.
    h = _layer_norm(x, ln2_g[...], ln2_b[...]) + pe_ref[...]              # (L, D)
    q = lax.dot_general(h, eq_w[...], (((0,), (0,)), ((), ())),
                        preferred_element_type=jnp.float32) + eq_b[...]   # (D, L)
    k = lax.dot_general(h, ek_w[...], (((0,), (0,)), ((), ())),
                        preferred_element_type=jnp.float32) + ek_b[...]   # (D, L)
    v = lax.dot_general(h, ev_w[...], (((0,), (0,)), ((), ())),
                        preferred_element_type=jnp.float32) + ev_b[...]   # (D, L)
    s = lax.dot_general(q, k, (((1,), (1,)), ((), ())),
                        preferred_element_type=jnp.float32) * (1.0 / math.sqrt(L))
    a = _softmax(s)                                                       # (D, D)
    c = jnp.dot(a, v, preferred_element_type=jnp.float32)                 # (D, L)
    # (c @ eo_w).T computed directly in (L, D) orientation.
    out_t = lax.dot_general(eo_w[...], c, (((0,), (1,)), ((), ())),
                            preferred_element_type=jnp.float32)           # (L, D)
    x = x + out_t + eo_bc[...]                                            # (L,1) column bias

    # ---------------- conv module (residual scale = 1.0) ----------------
    h = _layer_norm(x, cv_g[...], cv_b[...])
    a_val = jnp.dot(h, wa[...], preferred_element_type=jnp.float32) + ba[...]
    gate = jnp.dot(h, wg[...], preferred_element_type=jnp.float32) + bg[...]
    u = a_val * jax.nn.sigmoid(gate)                                      # GLU over channels
    # depthwise conv along L: XLU rotates + edge masks (zero 'same' padding, odd K).
    wd_v = wd[...]                                                        # (K, D) taps (BN folded)
    K = wd_v.shape[0]
    pad = (K - 1) // 2
    row = jax.lax.broadcasted_iota(jnp.int32, (L, 1), 0)
    y = jnp.zeros_like(u)
    for t in range(K):                                                    # static unroll over taps
        d = t - pad
        shifted = pltpu.roll(u, (-d) % L, 0) if d != 0 else u             # shifted[l] = u[(l+d)%L]
        tap = shifted * wd_v[t:t + 1, :]
        if d < 0:
            tap = jnp.where(row >= -d, tap, 0.0)
        elif d > 0:
            tap = jnp.where(row < L - d, tap, 0.0)
        y = y + tap
    y = y + bd[...]                                                       # BN folded into bd
    y = _silu(y)
    y = jnp.dot(y, wp[...], preferred_element_type=jnp.float32) + bp[...]
    x = x + y

    # ---------------- feed_forward #2 (same weights) ----------------
    x = ffn(x)

    # ---------------- final layer norm ----------------
    o_ref[0] = _layer_norm(x, fin_g[...], fin_b[...]).astype(o_ref.dtype)


# ------------------------------- pallas_call wrapper -------------------------------
def _zero_map(nd, b):
    return (0,) * nd


def conformer_block_forward(x, p, pe):
    B, L, D = x.shape
    # Fold eval-mode BatchNorm affine into the (linear) depthwise conv taps/bias.
    bn_s = p["bn_g"] * jax.lax.rsqrt(p["bn_v"] + EPS_BN)                  # (1, D)
    wd_f = p["dw_w"] * bn_s
    bd_f = (p["dw_b"] - p["bn_m"]) * bn_s + p["bn_b"]
    eo_bc = p["eo_b"].reshape(L, 1)                                       # column bias for (L, D)

    params = (
        p["ff_g"], p["ff_b"], p["ff_w1"], p["ff_b1"], p["ff_w2"], p["ff_b2"],
        p["ln1_g"], p["ln1_b"], pe,
        p["tq_w"], p["tq_b"], p["tk_w"], p["tk_b"],
        p["tv_w"], p["tv_b"], p["to_w"], p["to_b"],
        p["ln2_g"], p["ln2_b"],
        p["eq_w"], p["eq_b"], p["ek_w"], p["ek_b"],
        p["ev_w"], p["ev_b"], p["eo_w"], eo_bc,
        p["cv_g"], p["cv_b"], p["pw1a_w"], p["pw1a_b"], p["pw1g_w"], p["pw1g_b"],
        wd_f, bd_f, p["pw2_w"], p["pw2_b"],
        p["fin_g"], p["fin_b"],
    )

    in_specs = [pl.BlockSpec((1, L, D), lambda b: (b, 0, 0))]
    for q in params:
        in_specs.append(pl.BlockSpec(q.shape, functools.partial(_zero_map, q.ndim)))

    return pl.pallas_call(
        conformer_kernel,
        out_shape=jax.ShapeDtypeStruct((B, L, D), x.dtype),
        grid=(B,),
        in_specs=in_specs,
        out_specs=pl.BlockSpec((1, L, D), lambda b: (b, 0, 0)),
        compiler_params=pltpu.CompilerParams(
            dimension_semantics=("parallel",),          # megacore sharding on v7x
            vmem_limit_bytes=32 * 1024 * 1024,
        ),
    )(x, *params)


# ------------------------------- model glue (host JAX) -----------------------------
def sinusoidal_pe(max_len, d):
    pos = jnp.arange(max_len, dtype=jnp.float32)[:, None]
    div = jnp.exp(jnp.arange(0, d, 2, dtype=jnp.float32) * (-math.log(10000.0) / d))
    pe = jnp.zeros((max_len, d), jnp.float32)
    pe = pe.at[:, 0::2].set(jnp.sin(pos * div))
    pe = pe.at[:, 1::2].set(jnp.cos(pos * div))
    return pe


def init_params(key, L, D, F, K):
    ks = iter(jax.random.split(key, 64))

    def w(shape, scale=0.1):
        return jax.random.normal(next(ks), shape, jnp.float32) * scale

    def ln(dim):
        return 1.0 + w((1, dim), 0.05), w((1, dim), 0.05)

    p = {}
    # shared feed-forward block (used twice with the same weights)
    p["ff_g"], p["ff_b"] = ln(D)
    p["ff_w1"], p["ff_b1"] = w((D, F)), w((1, F))
    p["ff_w2"], p["ff_b2"] = w((F, D)), w((1, D))
    # token self-attention (embed_dim = D, 1 head)
    p["ln1_g"], p["ln1_b"] = ln(D)
    for n in ("tq", "tk", "tv", "to"):
        p[n + "_w"], p[n + "_b"] = w((D, D)), w((1, D))
    # embedding self-attention (embed_dim = L, 1 head)
    p["ln2_g"], p["ln2_b"] = ln(D)
    for n in ("eq", "ek", "ev", "eo"):
        p[n + "_w"], p[n + "_b"] = w((L, L)), w((1, L))
    # conv module
    p["cv_g"], p["cv_b"] = ln(D)
    p["pw1a_w"], p["pw1a_b"] = w((D, D)), w((1, D))   # 1x1 conv, "value" half of GLU
    p["pw1g_w"], p["pw1g_b"] = w((D, D)), w((1, D))   # 1x1 conv, "gate" half of GLU
    p["dw_w"], p["dw_b"] = w((K, D)), w((1, D))       # depthwise taps (tap-major, channel-last)
    p["bn_g"] = 1.0 + w((1, D), 0.05)
    p["bn_b"] = w((1, D), 0.05)
    p["bn_m"] = w((1, D), 0.05)
    p["bn_v"] = 1.0 + jnp.abs(w((1, D), 0.1))
    p["pw2_w"], p["pw2_b"] = w((D, D)), w((1, D))
    # final layer norm
    p["fin_g"], p["fin_b"] = ln(D)
    return p


# ------------------------------ pure-JAX reference ---------------------------------
def _ref_ln(x, g, b):
    mu = x.mean(-1, keepdims=True)
    var = ((x - mu) ** 2).mean(-1, keepdims=True)
    return (x - mu) / jnp.sqrt(var + EPS_LN) * g + b


def _ref_attn(h, wq, bq, wk, bk, wv, bv, wo, bo):
    q = h @ wq + bq
    k = h @ wk + bk
    v = h @ wv + bv
    s = q @ jnp.swapaxes(k, -1, -2) / math.sqrt(q.shape[-1])
    a = jax.nn.softmax(s, axis=-1)
    return (a @ v) @ wo + bo


def reference_forward(x, p, pe):
    def ffn(x):
        h = _ref_ln(x, p["ff_g"], p["ff_b"])
        h = jax.nn.silu(h @ p["ff_w1"] + p["ff_b1"])
        h = h @ p["ff_w2"] + p["ff_b2"]
        return x + 0.5 * h

    x = ffn(x)
    h = _ref_ln(x, p["ln1_g"], p["ln1_b"]) + pe
    x = x + _ref_attn(h, p["tq_w"], p["tq_b"], p["tk_w"], p["tk_b"],
                      p["tv_w"], p["tv_b"], p["to_w"], p["to_b"])
    h = _ref_ln(x, p["ln2_g"], p["ln2_b"]) + pe
    z = jnp.swapaxes(h, 1, 2)
    x = x + jnp.swapaxes(
        _ref_attn(z, p["eq_w"], p["eq_b"], p["ek_w"], p["ek_b"],
                  p["ev_w"], p["ev_b"], p["eo_w"], p["eo_b"]), 1, 2)
    # conv module
    h = _ref_ln(x, p["cv_g"], p["cv_b"])
    a = h @ p["pw1a_w"] + p["pw1a_b"]
    g = h @ p["pw1g_w"] + p["pw1g_b"]
    u = a * jax.nn.sigmoid(g)
    K = p["dw_w"].shape[0]
    pad = (K - 1) // 2
    Lq = x.shape[1]
    u_pad = jnp.pad(u, ((0, 0), (pad, pad), (0, 0)))
    y = sum(u_pad[:, t:t + Lq, :] * p["dw_w"][t] for t in range(K)) + p["dw_b"]
    y = (y - p["bn_m"]) / jnp.sqrt(p["bn_v"] + EPS_BN) * p["bn_g"] + p["bn_b"]
    y = jax.nn.silu(y)
    y = y @ p["pw2_w"] + p["pw2_b"]
    x = x + y
    x = ffn(x)
    return _ref_ln(x, p["fin_g"], p["fin_b"])


# ----------------------------------- main -------------------------------------------
if __name__ == "__main__":
    # batch, input_length, input_dim, feed_forward_expansion, depth_kernel_size
    # D and F chosen lane-dense (multiples of 128) so all stores are unmasked.
    B, L, D, F, K = 2, 8, 128, 128, 3
    key = jax.random.PRNGKey(0)
    kx, kp = jax.random.split(key)
    x = jax.random.normal(kx, (B, L, D), jnp.float32)
    params = init_params(kp, L, D, F, K)
    pe = sinusoidal_pe(1000, D)[:L]

    ref = reference_forward(x, params, pe)

    out = conformer_block_forward(x, params, pe)
    out = jax.block_until_ready(out)

    assert out.shape == (B, L, D)
    err = float(jnp.max(jnp.abs(out - ref)))
    # All-f32 exact math (softmax uses an exact divide now) — expect ~1e-5 max error.
    assert jnp.allclose(out, ref, atol=2e-3, rtol=2e-3), f"max abs err = {err}"
    print("KERNEL_OK")
</pallas_src>

<mosaic_0001>
module attributes {stable_mosaic.version = 11 : i64} {
  func.func @conformer_kernel(%arg0: i32, %arg1: memref<1x8x128xf32, #tpu.memory_space<vmem>>, %arg2: memref<1x128xf32, #tpu.memory_space<vmem>>, %arg3: memref<1x128xf32, #tpu.memory_space<vmem>>, %arg4: memref<128x128xf32, #tpu.memory_space<vmem>>, %arg5: memref<1x128xf32, #tpu.memory_space<vmem>>, %arg6: memref<128x128xf32, #tpu.memory_space<vmem>>, %arg7: memref<1x128xf32, #tpu.memory_space<vmem>>, %arg8: memref<1x128xf32, #tpu.memory_space<vmem>>, %arg9: memref<1x128xf32, #tpu.memory_space<vmem>>, %arg10: memref<8x128xf32, #tpu.memory_space<vmem>>, %arg11: memref<128x128xf32, #tpu.memory_space<vmem>>, %arg12: memref<1x128xf32, #tpu.memory_space<vmem>>, %arg13: memref<128x128xf32, #tpu.memory_space<vmem>>, %arg14: memref<1x128xf32, #tpu.memory_space<vmem>>, %arg15: memref<128x128xf32, #tpu.memory_space<vmem>>, %arg16: memref<1x128xf32, #tpu.memory_space<vmem>>, %arg17: memref<128x128xf32, #tpu.memory_space<vmem>>, %arg18: memref<1x128xf32, #tpu.memory_space<vmem>>, %arg19: memref<1x128xf32, #tpu.memory_space<vmem>>, %arg20: memref<1x128xf32, #tpu.memory_space<vmem>>, %arg21: memref<8x8xf32, #tpu.memory_space<vmem>>, %arg22: memref<1x8xf32, #tpu.memory_space<vmem>>, %arg23: memref<8x8xf32, #tpu.memory_space<vmem>>, %arg24: memref<1x8xf32, #tpu.memory_space<vmem>>, %arg25: memref<8x8xf32, #tpu.memory_space<vmem>>, %arg26: memref<1x8xf32, #tpu.memory_space<vmem>>, %arg27: memref<8x8xf32, #tpu.memory_space<vmem>>, %arg28: memref<8x1xf32, #tpu.memory_space<vmem>>, %arg29: memref<1x128xf32, #tpu.memory_space<vmem>>, %arg30: memref<1x128xf32, #tpu.memory_space<vmem>>, %arg31: memref<128x128xf32, #tpu.memory_space<vmem>>, %arg32: memref<1x128xf32, #tpu.memory_space<vmem>>, %arg33: memref<128x128xf32, #tpu.memory_space<vmem>>, %arg34: memref<1x128xf32, #tpu.memory_space<vmem>>, %arg35: memref<3x128xf32, #tpu.memory_space<vmem>>, %arg36: memref<1x128xf32, #tpu.memory_space<vmem>>, %arg37: memref<128x128xf32, #tpu.memory_space<vmem>>, %arg38: memref<1x128xf32, #tpu.memory_space<vmem>>, %arg39: memref<1x128xf32, #tpu.memory_space<vmem>>, %arg40: memref<1x128xf32, #tpu.memory_space<vmem>>, %arg41: memref<1x8x128xf32, #tpu.memory_space<vmem>>) attributes {dimension_semantics = [#tpu.dimension_semantics<parallel>], iteration_bounds = array<i64: 2>, scalar_prefetch = 0 : i64, scratch_operands = 0 : i64, tpu.core_type = #tpu.core_type<tc>, window_params = [{transform_indices = @transform_0, window_bounds = array<i64: 1, 8, 128>}, {pipeline_mode = #tpu.pipeline_mode<synchronous>, transform_indices = @transform_1, window_bounds = array<i64: 1, 128>}, {pipeline_mode = #tpu.pipeline_mode<synchronous>, transform_indices = @transform_2, window_bounds = array<i64: 1, 128>}, {pipeline_mode = #tpu.pipeline_mode<synchronous>, transform_indices = @transform_3, window_bounds = array<i64: 128, 128>}, {pipeline_mode = #tpu.pipeline_mode<synchronous>, transform_indices = @transform_4, window_bounds = array<i64: 1, 128>}, {pipeline_mode = #tpu.pipeline_mode<synchronous>, transform_indices = @transform_5, window_bounds = array<i64: 128, 128>}, {pipeline_mode = #tpu.pipeline_mode<synchronous>, transform_indices = @transform_6, window_bounds = array<i64: 1, 128>}, {pipeline_mode = #tpu.pipeline_mode<synchronous>, transform_indices = @transform_7, window_bounds = array<i64: 1, 128>}, {pipeline_mode = #tpu.pipeline_mode<synchronous>, transform_indices = @transform_8, window_bounds = array<i64: 1, 128>}, {pipeline_mode = #tpu.pipeline_mode<synchronous>, transform_indices = @transform_9, window_bounds = array<i64: 8, 128>}, {pipeline_mode = #tpu.pipeline_mode<synchronous>, transform_indices = @transform_10, window_bounds = array<i64: 128, 128>}, {pipeline_mode = #tpu.pipeline_mode<synchronous>, transform_indices = @transform_11, window_bounds = array<i64: 1, 128>}, {pipeline_mode = #tpu.pipeline_mode<synchronous>, transform_indices = @transform_12, window_bounds = array<i64: 128, 128>}, {pipeline_mode = #tpu.pipeline_mode<synchronous>, transform_indices = @transform_13, window_bounds = array<i64: 1, 128>}, {pipeline_mode = #tpu.pipeline_mode<synchronous>, transform_indices = @transform_14, window_bounds = array<i64: 128, 128>}, {pipeline_mode = #tpu.pipeline_mode<synchronous>, transform_indices = @transform_15, window_bounds = array<i64: 1, 128>}, {pipeline_mode = #tpu.pipeline_mode<synchronous>, transform_indices = @transform_16, window_bounds = array<i64: 128, 128>}, {pipeline_mode = #tpu.pipeline_mode<synchronous>, transform_indices = @transform_17, window_bounds = array<i64: 1, 128>}, {pipeline_mode = #tpu.pipeline_mode<synchronous>, transform_indices = @transform_18, window_bounds = array<i64: 1, 128>}, {pipeline_mode = #tpu.pipeline_mode<synchronous>, transform_indices = @transform_19, window_bounds = array<i64: 1, 128>}, {pipeline_mode = #tpu.pipeline_mode<synchronous>, transform_indices = @transform_20, window_bounds = array<i64: 8, 8>}, {pipeline_mode = #tpu.pipeline_mode<synchronous>, transform_indices = @transform_21, window_bounds = array<i64: 1, 8>}, {pipeline_mode = #tpu.pipeline_mode<synchronous>, transform_indices = @transform_22, window_bounds = array<i64: 8, 8>}, {pipeline_mode = #tpu.pipeline_mode<synchronous>, transform_indices = @transform_23, window_bounds = array<i64: 1, 8>}, {pipeline_mode = #tpu.pipeline_mode<synchronous>, transform_indices = @transform_24, window_bounds = array<i64: 8, 8>}, {pipeline_mode = #tpu.pipeline_mode<synchronous>, transform_indices = @transform_25, window_bounds = array<i64: 1, 8>}, {pipeline_mode = #tpu.pipeline_mode<synchronous>, transform_indices = @transform_26, window_bounds = array<i64: 8, 8>}, {pipeline_mode = #tpu.pipeline_mode<synchronous>, transform_indices = @transform_27, window_bounds = array<i64: 8, 1>}, {pipeline_mode = #tpu.pipeline_mode<synchronous>, transform_indices = @transform_28, window_bounds = array<i64: 1, 128>}, {pipeline_mode = #tpu.pipeline_mode<synchronous>, transform_indices = @transform_29, window_bounds = array<i64: 1, 128>}, {pipeline_mode = #tpu.pipeline_mode<synchronous>, transform_indices = @transform_30, window_bounds = array<i64: 128, 128>}, {pipeline_mode = #tpu.pipeline_mode<synchronous>, transform_indices = @transform_31, window_bounds = array<i64: 1, 128>}, {pipeline_mode = #tpu.pipeline_mode<synchronous>, transform_indices = @transform_32, window_bounds = array<i64: 128, 128>}, {pipeline_mode = #tpu.pipeline_mode<synchronous>, transform_indices = @transform_33, window_bounds = array<i64: 1, 128>}, {pipeline_mode = #tpu.pipeline_mode<synchronous>, transform_indices = @transform_34, window_bounds = array<i64: 3, 128>}, {pipeline_mode = #tpu.pipeline_mode<synchronous>, transform_indices = @transform_35, window_bounds = array<i64: 1, 128>}, {pipeline_mode = #tpu.pipeline_mode<synchronous>, transform_indices = @transform_36, window_bounds = array<i64: 128, 128>}, {pipeline_mode = #tpu.pipeline_mode<synchronous>, transform_indices = @transform_37, window_bounds = array<i64: 1, 128>}, {pipeline_mode = #tpu.pipeline_mode<synchronous>, transform_indices = @transform_38, window_bounds = array<i64: 1, 128>}, {pipeline_mode = #tpu.pipeline_mode<synchronous>, transform_indices = @transform_39, window_bounds = array<i64: 1, 128>}, {transform_indices = @transform_40, window_bounds = array<i64: 1, 8, 128>}]} {
    %c0 = arith.constant 0 : index
    %c0_0 = arith.constant 0 : index
    %c0_1 = arith.constant 0 : index
    %0 = vector.load %arg1[%c0, %c0_0, %c0_1] : memref<1x8x128xf32, #tpu.memory_space<vmem>>, vector<1x8x128xf32>
    %1 = vector.shape_cast %0 : vector<1x8x128xf32> to vector<8x128xf32>
    %c0_2 = arith.constant 0 : index
    %c0_3 = arith.constant 0 : index
    %2 = vector.load %arg2[%c0_2, %c0_3] : memref<1x128xf32, #tpu.memory_space<vmem>>, vector<1x128xf32>
    %c0_4 = arith.constant 0 : index
    %c0_5 = arith.constant 0 : index
    %3 = vector.load %arg3[%c0_4, %c0_5] : memref<1x128xf32, #tpu.memory_space<vmem>>, vector<1x128xf32>
    %cst = arith.constant dense<0.000000e+00> : vector<8xf32>
    %4 = vector.multi_reduction <add>, %1, %cst [1] : vector<8x128xf32> to vector<8xf32>
    %5 = vector.shape_cast %4 : vector<8xf32> to vector<8x1xf32>
    %cst_6 = arith.constant 1.280000e+02 : f32
    %6 = vector.broadcast %cst_6 : f32 to vector<8x1xf32>
    %7 = arith.divf %5, %6 : vector<8x1xf32>
    %8 = vector.broadcast %7 : vector<8x1xf32> to vector<8x128xf32>
    %9 = arith.subf %1, %8 : vector<8x128xf32>
    %10 = arith.mulf %9, %9 : vector<8x128xf32>
    %cst_7 = arith.constant dense<0.000000e+00> : vector<8xf32>
    %11 = vector.multi_reduction <add>, %10, %cst_7 [1] : vector<8x128xf32> to vector<8xf32>
    %12 = vector.shape_cast %11 : vector<8xf32> to vector<8x1xf32>
    %cst_8 = arith.constant 1.280000e+02 : f32
    %13 = vector.broadcast %cst_8 : f32 to vector<8x1xf32>
    %14 = arith.divf %12, %13 : vector<8x1xf32>
    %15 = vector.broadcast %7 : vector<8x1xf32> to vector<8x128xf32>
    %16 = arith.subf %1, %15 : vector<8x128xf32>
    %cst_9 = arith.constant 9.99999974E-6 : f32
    %17 = vector.broadcast %cst_9 : f32 to vector<8x1xf32>
    %18 = arith.addf %14, %17 : vector<8x1xf32>
    %19 = math.rsqrt %18 : vector<8x1xf32>
    %20 = vector.broadcast %19 : vector<8x1xf32> to vector<8x128xf32>
    %21 = arith.mulf %16, %20 : vector<8x128xf32>
    %22 = vector.broadcast %2 : vector<1x128xf32> to vector<8x128xf32>
    %23 = arith.mulf %21, %22 : vector<8x128xf32>
    %24 = vector.broadcast %3 : vector<1x128xf32> to vector<8x128xf32>
    %25 = arith.addf %23, %24 : vector<8x128xf32>
    %c0_10 = arith.constant 0 : index
    %c0_11 = arith.constant 0 : index
    %26 = vector.load %arg4[%c0_10, %c0_11] : memref<128x128xf32, #tpu.memory_space<vmem>>, vector<128x128xf32>
    %cst_12 = arith.constant dense<0.000000e+00> : vector<8x128xf32>
    %27 = tpu.matmul %25, %26, %cst_12 {dimension_numbers = #tpu.dot_dimension_numbers<[1], [0], [0], [1], [0, 0, 1, 1], [], []>} : vector<8x128xf32>, vector<128x128xf32>, vector<8x128xf32> -> vector<8x128xf32>
    %c0_13 = arith.constant 0 : index
    %c0_14 = arith.constant 0 : index
    %28 = vector.load %arg5[%c0_13, %c0_14] : memref<1x128xf32, #tpu.memory_space<vmem>>, vector<1x128xf32>
    %29 = vector.broadcast %28 : vector<1x128xf32> to vector<8x128xf32>
    %30 = arith.addf %27, %29 : vector<8x128xf32>
    %31 = arith.negf %30 : vector<8x128xf32>
    %32 = math.exp %31 : vector<8x128xf32>
    %cst_15 = arith.constant 1.000000e+00 : f32
    %33 = vector.broadcast %cst_15 : f32 to vector<8x128xf32>
    %34 = arith.addf %33, %32 : vector<8x128xf32>
    %35 = arith.divf %33, %34 : vector<8x128xf32>
    %36 = arith.mulf %30, %35 : vector<8x128xf32>
    %c0_16 = arith.constant 0 : index
    %c0_17 = arith.constant 0 : index
    %37 = vector.load %arg6[%c0_16, %c0_17] : memref<128x128xf32, #tpu.memory_space<vmem>>, vector<128x128xf32>
    %cst_18 = arith.constant dense<0.000000e+00> : vector<8x128xf32>
    %38 = tpu.matmul %36, %37, %cst_18 {dimension_numbers = #tpu.dot_dimension_numbers<[1], [0], [0], [1], [0, 0, 1, 1], [], []>} : vector<8x128xf32>, vector<128x128xf32>, vector<8x128xf32> -> vector<8x128xf32>
    %c0_19 = arith.constant 0 : index
    %c0_20 = arith.constant 0 : index
    %39 = vector.load %arg7[%c0_19, %c0_20] : memref<1x128xf32, #tpu.memory_space<vmem>>, vector<1x128xf32>
    %40 = vector.broadcast %39 : vector<1x128xf32> to vector<8x128xf32>
    %41 = arith.addf %38, %40 : vector<8x128xf32>
    %cst_21 = arith.constant 5.000000e-01 : f32
    %42 = vector.broadcast %cst_21 : f32 to vector<8x128xf32>
    %43 = arith.mulf %42, %41 : vector<8x128xf32>
    %44 = arith.addf %1, %43 : vector<8x128xf32>
    %c0_22 = arith.constant 0 : index
    %c0_23 = arith.constant 0 : index
    %45 = vector.load %arg8[%c0_22, %c0_23] : memref<1x128xf32, #tpu.memory_space<vmem>>, vector<1x128xf32>
    %c0_24 = arith.constant 0 : index
    %c0_25 = arith.constant 0 : index
    %46 = vector.load %arg9[%c0_24, %c0_25] : memref<1x128xf32, #tpu.memory_space<vmem>>, vector<1x128xf32>
    %cst_26 = arith.constant dense<0.000000e+00> : vector<8xf32>
    %47 = vector.multi_reduction <add>, %44, %cst_26 [1] : vector<8x128xf32> to vector<8xf32>
    %48 = vector.shape_cast %47 : vector<8xf32> to vector<8x1xf32>
    %cst_27 = arith.constant 1.280000e+02 : f32
    %49 = vector.broadcast %cst_27 : f32 to vector<8x1xf32>
    %50 = arith.divf %48, %49 : vector<8x1xf32>
    %51 = vector.broadcast %50 : vector<8x1xf32> to vector<8x128xf32>
    %52 = arith.subf %44, %51 : vector<8x128xf32>
    %53 = arith.mulf %52, %52 : vector<8x128xf32>
    %cst_28 = arith.constant dense<0.000000e+00> : vector<8xf32>
    %54 = vector.multi_reduction <add>, %53, %cst_28 [1] : vector<8x128xf32> to vector<8xf32>
    %55 = vector.shape_cast %54 : vector<8xf32> to vector<8x1xf32>
    %cst_29 = arith.constant 1.280000e+02 : f32
    %56 = vector.broadcast %cst_29 : f32 to vector<8x1xf32>
    %57 = arith.divf %55, %56 : vector<8x1xf32>
    %58 = vector.broadcast %50 : vector<8x1xf32> to vector<8x128xf32>
    %59 = arith.subf %44, %58 : vector<8x128xf32>
    %cst_30 = arith.constant 9.99999974E-6 : f32
    %60 = vector.broadcast %cst_30 : f32 to vector<8x1xf32>
    %61 = arith.addf %57, %60 : vector<8x1xf32>
    %62 = math.rsqrt %61 : vector<8x1xf32>
    %63 = vector.broadcast %62 : vector<8x1xf32> to vector<8x128xf32>
    %64 = arith.mulf %59, %63 : vector<8x128xf32>
    %65 = vector.broadcast %45 : vector<1x128xf32> to vector<8x128xf32>
    %66 = arith.mulf %64, %65 : vector<8x128xf32>
    %67 = vector.broadcast %46 : vector<1x128xf32> to vector<8x128xf32>
    %68 = arith.addf %66, %67 : vector<8x128xf32>
    %c0_31 = arith.constant 0 : index
    %c0_32 = arith.constant 0 : index
    %69 = vector.load %arg10[%c0_31, %c0_32] : memref<8x128xf32, #tpu.memory_space<vmem>>, vector<8x128xf32>
    %70 = arith.addf %68, %69 : vector<8x128xf32>
    %c0_33 = arith.constant 0 : index
    %c0_34 = arith.constant 0 : index
    %71 = vector.load %arg11[%c0_33, %c0_34] : memref<128x128xf32, #tpu.memory_space<vmem>>, vector<128x128xf32>
    %cst_35 = arith.constant dense<0.000000e+00> : vector<8x128xf32>
    %72 = tpu.matmul %70, %71, %cst_35 {dimension_numbers = #tpu.dot_dimension_numbers<[1], [0], [0], [1], [0, 0, 1, 1], [], []>} : vector<8x128xf32>, vector<128x128xf32>, vector<8x128xf32> -> vector<8x128xf32>
    %c0_36 = arith.constant 0 : index
    %c0_37 = arith.constant 0 : index
    %73 = vector.load %arg12[%c0_36, %c0_37] : memref<1x128xf32, #tpu.memory_space<vmem>>, vector<1x128xf32>
    %74 = vector.broadcast %73 : vector<1x128xf32> to vector<8x128xf32>
    %75 = arith.addf %72, %74 : vector<8x128xf32>
    %c0_38 = arith.constant 0 : index
    %c0_39 = arith.constant 0 : index
    %76 = vector.load %arg13[%c0_38, %c0_39] : memref<128x128xf32, #tpu.memory_space<vmem>>, vector<128x128xf32>
    %cst_40 = arith.constant dense<0.000000e+00> : vector<8x128xf32>
    %77 = tpu.matmul %70, %76, %cst_40 {dimension_numbers = #tpu.dot_dimension_numbers<[1], [0], [0], [1], [0, 0, 1, 1], [], []>} : vector<8x128xf32>, vector<128x128xf32>, vector<8x128xf32> -> vector<8x128xf32>
    %c0_41 = arith.constant 0 : index
    %c0_42 = arith.constant 0 : index
    %78 = vector.load %arg14[%c0_41, %c0_42] : memref<1x128xf32, #tpu.memory_space<vmem>>, vector<1x128xf32>
    %79 = vector.broadcast %78 : vector<1x128xf32> to vector<8x128xf32>
    %80 = arith.addf %77, %79 : vector<8x128xf32>
    %c0_43 = arith.constant 0 : index
    %c0_44 = arith.constant 0 : index
    %81 = vector.load %arg15[%c0_43, %c0_44] : memref<128x128xf32, #tpu.memory_space<vmem>>, vector<128x128xf32>
    %cst_45 = arith.constant dense<0.000000e+00> : vector<8x128xf32>
    %82 = tpu.matmul %70, %81, %cst_45 {dimension_numbers = #tpu.dot_dimension_numbers<[1], [0], [0], [1], [0, 0, 1, 1], [], []>} : vector<8x128xf32>, vector<128x128xf32>, vector<8x128xf32> -> vector<8x128xf32>
    %c0_46 = arith.constant 0 : index
    %c0_47 = arith.constant 0 : index
    %83 = vector.load %arg16[%c0_46, %c0_47] : memref<1x128xf32, #tpu.memory_space<vmem>>, vector<1x128xf32>
    %84 = vector.broadcast %83 : vector<1x128xf32> to vector<8x128xf32>
    %85 = arith.addf %82, %84 : vector<8x128xf32>
    %cst_48 = arith.constant dense<0.000000e+00> : vector<8x8xf32>
    %86 = tpu.matmul %75, %80, %cst_48 {dimension_numbers = #tpu.dot_dimension_numbers<[1], [1], [0], [0], [0, 0, 1, 0], [], []>} : vector<8x128xf32>, vector<8x128xf32>, vector<8x8xf32> -> vector<8x8xf32>
    %cst_49 = arith.constant 0.0883883461 : f32
    %87 = vector.broadcast %cst_49 : f32 to vector<8x8xf32>
    %88 = arith.mulf %86, %87 : vector<8x8xf32>
    %cst_50 = arith.constant dense<0xFF800000> : vector<8xf32>
    %89 = vector.multi_reduction <maximumf>, %88, %cst_50 [1] : vector<8x8xf32> to vector<8xf32>
    %90 = vector.shape_cast %89 : vector<8xf32> to vector<8x1xf32>
    %91 = vector.broadcast %90 : vector<8x1xf32> to vector<8x8xf32>
    %92 = arith.subf %88, %91 : vector<8x8xf32>
    %93 = math.exp %92 : vector<8x8xf32>
    %cst_51 = arith.constant dense<0.000000e+00> : vector<8xf32>
    %94 = vector.multi_reduction <add>, %93, %cst_51 [1] : vector<8x8xf32> to vector<8xf32>
    %95 = vector.shape_cast %94 : vector<8xf32> to vector<8x1xf32>
    %96 = vector.broadcast %95 : vector<8x1xf32> to vector<8x8xf32>
    %97 = arith.divf %93, %96 : vector<8x8xf32>
    %cst_52 = arith.constant dense<0.000000e+00> : vector<8x128xf32>
    %98 = tpu.matmul %97, %85, %cst_52 {dimension_numbers = #tpu.dot_dimension_numbers<[1], [0], [0], [1], [0, 0, 1, 1], [], []>} : vector<8x8xf32>, vector<8x128xf32>, vector<8x128xf32> -> vector<8x128xf32>
    %c0_53 = arith.constant 0 : index
    %c0_54 = arith.constant 0 : index
    %99 = vector.load %arg17[%c0_53, %c0_54] : memref<128x128xf32, #tpu.memory_space<vmem>>, vector<128x128xf32>
    %cst_55 = arith.constant dense<0.000000e+00> : vector<8x128xf32>
    %100 = tpu.matmul %98, %99, %cst_55 {dimension_numbers = #tpu.dot_dimension_numbers<[1], [0], [0], [1], [0, 0, 1, 1], [], []>} : vector<8x128xf32>, vector<128x128xf32>, vector<8x128xf32> -> vector<8x128xf32>
    %101 = arith.addf %44, %100 : vector<8x128xf32>
    %c0_56 = arith.constant 0 : index
    %c0_57 = arith.constant 0 : index
    %102 = vector.load %arg18[%c0_56, %c0_57] : memref<1x128xf32, #tpu.memory_space<vmem>>, vector<1x128xf32>
    %103 = vector.broadcast %102 : vector<1x128xf32> to vector<8x128xf32>
    %104 = arith.addf %101, %103 : vector<8x128xf32>
    %c0_58 = arith.constant 0 : index
    %c0_59 = arith.constant 0 : index
    %105 = vector.load %arg19[%c0_58, %c0_59] : memref<1x128xf32, #tpu.memory_space<vmem>>, vector<1x128xf32>
    %c0_60 = arith.constant 0 : index
    %c0_61 = arith.constant 0 : index
    %106 = vector.load %arg20[%c0_60, %c0_61] : memref<1x128xf32, #tpu.memory_space<vmem>>, vector<1x128xf32>
    %cst_62 = arith.constant dense<0.000000e+00> : vector<8xf32>
    %107 = vector.multi_reduction <add>, %104, %cst_62 [1] : vector<8x128xf32> to vector<8xf32>
    %108 = vector.shape_cast %107 : vector<8xf32> to vector<8x1xf32>
    %cst_63 = arith.constant 1.280000e+02 : f32
    %109 = vector.broadcast %cst_63 : f32 to vector<8x1xf32>
    %110 = arith.divf %108, %109 : vector<8x1xf32>
    %111 = vector.broadcast %110 : vector<8x1xf32> to vector<8x128xf32>
    %112 = arith.subf %104, %111 : vector<8x128xf32>
    %113 = arith.mulf %112, %112 : vector<8x128xf32>
    %cst_64 = arith.constant dense<0.000000e+00> : vector<8xf32>
    %114 = vector.multi_reduction <add>, %113, %cst_64 [1] : vector<8x128xf32> to vector<8xf32>
    %115 = vector.shape_cast %114 : vector<8xf32> to vector<8x1xf32>
    %cst_65 = arith.constant 1.280000e+02 : f32
    %116 = vector.broadcast %cst_65 : f32 to vector<8x1xf32>
    %117 = arith.divf %115, %116 : vector<8x1xf32>
    %118 = vector.broadcast %110 : vector<8x1xf32> to vector<8x128xf32>
    %119 = arith.subf %104, %118 : vector<8x128xf32>
    %cst_66 = arith.constant 9.99999974E-6 : f32
    %120 = vector.broadcast %cst_66 : f32 to vector<8x1xf32>
    %121 = arith.addf %117, %120 : vector<8x1xf32>
    %122 = math.rsqrt %121 : vector<8x1xf32>
    %123 = vector.broadcast %122 : vector<8x1xf32> to vector<8x128xf32>
    %124 = arith.mulf %119, %123 : vector<8x128xf32>
    %125 = vector.broadcast %105 : vector<1x128xf32> to vector<8x128xf32>
    %126 = arith.mulf %124, %125 : vector<8x128xf32>
    %127 = vector.broadcast %106 : vector<1x128xf32> to vector<8x128xf32>
    %128 = arith.addf %126, %127 : vector<8x128xf32>
    %c0_67 = arith.constant 0 : index
    %c0_68 = arith.constant 0 : index
    %129 = vector.load %arg10[%c0_67, %c0_68] : memref<8x128xf32, #tpu.memory_space<vmem>>, vector<8x128xf32>
    %130 = arith.addf %128, %129 : vector<8x128xf32>
    %c0_69 = arith.constant 0 : index
    %c0_70 = arith.constant 0 : index
    %131 = vector.load %arg21[%c0_69, %c0_70] : memref<8x8xf32, #tpu.memory_space<vmem>>, vector<8x8xf32>
    %cst_71 = arith.constant dense<0.000000e+00> : vector<128x8xf32>
    %132 = tpu.matmul %130, %131, %cst_71 {dimension_numbers = #tpu.dot_dimension_numbers<[0], [0], [1], [1], [0, 1, 1, 1], [], []>} : vector<8x128xf32>, vector<8x8xf32>, vector<128x8xf32> -> vector<128x8xf32>
    %c0_72 = arith.constant 0 : index
    %c0_73 = arith.constant 0 : index
    %133 = vector.load %arg22[%c0_72, %c0_73] : memref<1x8xf32, #tpu.memory_space<vmem>>, vector<1x8xf32>
    %134 = vector.broadcast %133 : vector<1x8xf32> to vector<128x8xf32>
    %135 = arith.addf %132, %134 : vector<128x8xf32>
    %c0_74 = arith.constant 0 : index
    %c0_75 = arith.constant 0 : index
    %136 = vector.load %arg23[%c0_74, %c0_75] : memref<8x8xf32, #tpu.memory_space<vmem>>, vector<8x8xf32>
    %cst_76 = arith.constant dense<0.000000e+00> : vector<128x8xf32>
    %137 = tpu.matmul %130, %136, %cst_76 {dimension_numbers = #tpu.dot_dimension_numbers<[0], [0], [1], [1], [0, 1, 1, 1], [], []>} : vector<8x128xf32>, vector<8x8xf32>, vector<128x8xf32> -> vector<128x8xf32>
    %c0_77 = arith.constant 0 : index
    %c0_78 = arith.constant 0 : index
    %138 = vector.load %arg24[%c0_77, %c0_78] : memref<1x8xf32, #tpu.memory_space<vmem>>, vector<1x8xf32>
    %139 = vector.broadcast %138 : vector<1x8xf32> to vector<128x8xf32>
    %140 = arith.addf %137, %139 : vector<128x8xf32>
    %c0_79 = arith.constant 0 : index
    %c0_80 = arith.constant 0 : index
    %141 = vector.load %arg25[%c0_79, %c0_80] : memref<8x8xf32, #tpu.memory_space<vmem>>, vector<8x8xf32>
    %cst_81 = arith.constant dense<0.000000e+00> : vector<128x8xf32>
    %142 = tpu.matmul %130, %141, %cst_81 {dimension_numbers = #tpu.dot_dimension_numbers<[0], [0], [1], [1], [0, 1, 1, 1], [], []>} : vector<8x128xf32>, vector<8x8xf32>, vector<128x8xf32> -> vector<128x8xf32>
    %c0_82 = arith.constant 0 : index
    %c0_83 = arith.constant 0 : index
    %143 = vector.load %arg26[%c0_82, %c0_83] : memref<1x8xf32, #tpu.memory_space<vmem>>, vector<1x8xf32>
    %144 = vector.broadcast %143 : vector<1x8xf32> to vector<128x8xf32>
    %145 = arith.addf %142, %144 : vector<128x8xf32>
    %cst_84 = arith.constant dense<0.000000e+00> : vector<128x128xf32>
    %146 = tpu.matmul %135, %140, %cst_84 {dimension_numbers = #tpu.dot_dimension_numbers<[1], [1], [0], [0], [0, 0, 1, 0], [], []>} : vector<128x8xf32>, vector<128x8xf32>, vector<128x128xf32> -> vector<128x128xf32>
    %cst_85 = arith.constant 0.353553385 : f32
    %147 = vector.broadcast %cst_85 : f32 to vector<128x128xf32>
    %148 = arith.mulf %146, %147 : vector<128x128xf32>
    %cst_86 = arith.constant dense<0xFF800000> : vector<128xf32>
    %149 = vector.multi_reduction <maximumf>, %148, %cst_86 [1] : vector<128x128xf32> to vector<128xf32>
    %150 = vector.shape_cast %149 : vector<128xf32> to vector<128x1xf32>
    %151 = vector.broadcast %150 : vector<128x1xf32> to vector<128x128xf32>
    %152 = arith.subf %148, %151 : vector<128x128xf32>
    %153 = math.exp %152 : vector<128x128xf32>
    %cst_87 = arith.constant dense<0.000000e+00> : vector<128xf32>
    %154 = vector.multi_reduction <add>, %153, %cst_87 [1] : vector<128x128xf32> to vector<128xf32>
    %155 = vector.shape_cast %154 : vector<128xf32> to vector<128x1xf32>
    %156 = vector.broadcast %155 : vector<128x1xf32> to vector<128x128xf32>
    %157 = arith.divf %153, %156 : vector<128x128xf32>
    %cst_88 = arith.constant dense<0.000000e+00> : vector<128x8xf32>
    %158 = tpu.matmul %157, %145, %cst_88 {dimension_numbers = #tpu.dot_dimension_numbers<[1], [0], [0], [1], [0, 0, 1, 1], [], []>} : vector<128x128xf32>, vector<128x8xf32>, vector<128x8xf32> -> vector<128x8xf32>
    %c0_89 = arith.constant 0 : index
    %c0_90 = arith.constant 0 : index
    %159 = vector.load %arg27[%c0_89, %c0_90] : memref<8x8xf32, #tpu.memory_space<vmem>>, vector<8x8xf32>
    %cst_91 = arith.constant dense<0.000000e+00> : vector<8x128xf32>
    %160 = tpu.matmul %159, %158, %cst_91 {dimension_numbers = #tpu.dot_dimension_numbers<[0], [1], [1], [0], [0, 1, 1, 0], [], []>} : vector<8x8xf32>, vector<128x8xf32>, vector<8x128xf32> -> vector<8x128xf32>
    %161 = arith.addf %104, %160 : vector<8x128xf32>
    %c0_92 = arith.constant 0 : index
    %c0_93 = arith.constant 0 : index
    %162 = vector.load %arg28[%c0_92, %c0_93] : memref<8x1xf32, #tpu.memory_space<vmem>>, vector<8x1xf32>
    %163 = vector.broadcast %162 : vector<8x1xf32> to vector<8x128xf32>
    %164 = arith.addf %161, %163 : vector<8x128xf32>
    %c0_94 = arith.constant 0 : index
    %c0_95 = arith.constant 0 : index
    %165 = vector.load %arg29[%c0_94, %c0_95] : memref<1x128xf32, #tpu.memory_space<vmem>>, vector<1x128xf32>
    %c0_96 = arith.constant 0 : index
    %c0_97 = arith.constant 0 : index
    %166 = vector.load %arg30[%c0_96, %c0_97] : memref<1x128xf32, #tpu.memory_space<vmem>>, vector<1x128xf32>
    %cst_98 = arith.constant dense<0.000000e+00> : vector<8xf32>
    %167 = vector.multi_reduction <add>, %164, %cst_98 [1] : vector<8x128xf32> to vector<8xf32>
    %168 = vector.shape_cast %167 : vector<8xf32> to vector<8x1xf32>
    %cst_99 = arith.constant 1.280000e+02 : f32
    %169 = vector.broadcast %cst_99 : f32 to vector<8x1xf32>
    %170 = arith.divf %168, %169 : vector<8x1xf32>
    %171 = vector.broadcast %170 : vector<8x1xf32> to vector<8x128xf32>
    %172 = arith.subf %164, %171 : vector<8x128xf32>
    %173 = arith.mulf %172, %172 : vector<8x128xf32>
    %cst_100 = arith.constant dense<0.000000e+00> : vector<8xf32>
    %174 = vector.multi_reduction <add>, %173, %cst_100 [1] : vector<8x128xf32> to vector<8xf32>
    %175 = vector.shape_cast %174 : vector<8xf32> to vector<8x1xf32>
    %cst_101 = arith.constant 1.280000e+02 : f32
    %176 = vector.broadcast %cst_101 : f32 to vector<8x1xf32>
    %177 = arith.divf %175, %176 : vector<8x1xf32>
    %178 = vector.broadcast %170 : vector<8x1xf32> to vector<8x128xf32>
    %179 = arith.subf %164, %178 : vector<8x128xf32>
    %cst_102 = arith.constant 9.99999974E-6 : f32
    %180 = vector.broadcast %cst_102 : f32 to vector<8x1xf32>
    %181 = arith.addf %177, %180 : vector<8x1xf32>
    %182 = math.rsqrt %181 : vector<8x1xf32>
    %183 = vector.broadcast %182 : vector<8x1xf32> to vector<8x128xf32>
    %184 = arith.mulf %179, %183 : vector<8x128xf32>
    %185 = vector.broadcast %165 : vector<1x128xf32> to vector<8x128xf32>
    %186 = arith.mulf %184, %185 : vector<8x128xf32>
    %187 = vector.broadcast %166 : vector<1x128xf32> to vector<8x128xf32>
    %188 = arith.addf %186, %187 : vector<8x128xf32>
    %c0_103 = arith.constant 0 : index
    %c0_104 = arith.constant 0 : index
    %189 = vector.load %arg31[%c0_103, %c0_104] : memref<128x128xf32, #tpu.memory_space<vmem>>, vector<128x128xf32>
    %cst_105 = arith.constant dense<0.000000e+00> : vector<8x128xf32>
    %190 = tpu.matmul %188, %189, %cst_105 {dimension_numbers = #tpu.dot_dimension_numbers<[1], [0], [0], [1], [0, 0, 1, 1], [], []>} : vector<8x128xf32>, vector<128x128xf32>, vector<8x128xf32> -> vector<8x128xf32>
    %c0_106 = arith.constant 0 : index
    %c0_107 = arith.constant 0 : index
    %191 = vector.load %arg32[%c0_106, %c0_107] : memref<1x128xf32, #tpu.memory_space<vmem>>, vector<1x128xf32>
    %192 = vector.broadcast %191 : vector<1x128xf32> to vector<8x128xf32>
    %193 = arith.addf %190, %192 : vector<8x128xf32>
    %c0_108 = arith.constant 0 : index
    %c0_109 = arith.constant 0 : index
    %194 = vector.load %arg33[%c0_108, %c0_109] : memref<128x128xf32, #tpu.memory_space<vmem>>, vector<128x128xf32>
    %cst_110 = arith.constant dense<0.000000e+00> : vector<8x128xf32>
    %195 = tpu.matmul %188, %194, %cst_110 {dimension_numbers = #tpu.dot_dimension_numbers<[1], [0], [0], [1], [0, 0, 1, 1], [], []>} : vector<8x128xf32>, vector<128x128xf32>, vector<8x128xf32> -> vector<8x128xf32>
    %c0_111 = arith.constant 0 : index
    %c0_112 = arith.constant 0 : index
    %196 = vector.load %arg34[%c0_111, %c0_112] : memref<1x128xf32, #tpu.memory_space<vmem>>, vector<1x128xf32>
    %197 = vector.broadcast %196 : vector<1x128xf32> to vector<8x128xf32>
    %198 = arith.addf %195, %197 : vector<8x128xf32>
    %199 = arith.negf %198 : vector<8x128xf32>
    %200 = math.exp %199 : vector<8x128xf32>
    %cst_113 = arith.constant 1.000000e+00 : f32
    %201 = vector.broadcast %cst_113 : f32 to vector<8x128xf32>
    %202 = arith.addf %201, %200 : vector<8x128xf32>
    %203 = arith.divf %201, %202 : vector<8x128xf32>
    %204 = arith.mulf %193, %203 : vector<8x128xf32>
    %c0_114 = arith.constant 0 : index
    %c0_115 = arith.constant 0 : index
    %205 = vector.load %arg35[%c0_114, %c0_115] : memref<3x128xf32, #tpu.memory_space<vmem>>, vector<3x128xf32>
    %206 = tpu.iota {dimensions = array<i32: 0>} : vector<8x1xi32>
    %cst_116 = arith.constant 0.000000e+00 : f32
    %207 = vector.broadcast %cst_116 : f32 to vector<8x128xf32>
    %c1_i32 = arith.constant 1 : i32
    %208 = tpu.dynamic_rotate %204 by %c1_i32 dim 0 : vector<8x128xf32>, i32 -> vector<8x128xf32>
    %209 = vector.extract_strided_slice %205 {offsets = [0, 0], sizes = [1, 128], strides = [1, 1]} : vector<3x128xf32> to vector<1x128xf32>
    %210 = vector.broadcast %209 : vector<1x128xf32> to vector<8x128xf32>
    %211 = arith.mulf %208, %210 : vector<8x128xf32>
    %c1_i32_117 = arith.constant 1 : i32
    %212 = vector.broadcast %c1_i32_117 : i32 to vector<8x1xi32>
    %213 = arith.cmpi sge, %206, %212 : vector<8x1xi32>
    %cst_118 = arith.constant 0.000000e+00 : f32
    %214 = vector.shape_cast %213 : vector<8x1xi1> to vector<8x1xi1>
    %215 = vector.broadcast %214 : vector<8x1xi1> to vector<8x128xi1>
    %216 = vector.broadcast %cst_118 : f32 to vector<8x128xf32>
    %217 = arith.select %215, %211, %216 : vector<8x128xi1>, vector<8x128xf32>
    %218 = arith.addf %207, %217 : vector<8x128xf32>
    %219 = vector.extract_strided_slice %205 {offsets = [1, 0], sizes = [1, 128], strides = [1, 1]} : vector<3x128xf32> to vector<1x128xf32>
    %220 = vector.broadcast %219 : vector<1x128xf32> to vector<8x128xf32>
    %221 = arith.mulf %204, %220 : vector<8x128xf32>
    %222 = arith.addf %218, %221 : vector<8x128xf32>
    %c7_i32 = arith.constant 7 : i32
    %223 = tpu.dynamic_rotate %204 by %c7_i32 dim 0 : vector<8x128xf32>, i32 -> vector<8x128xf32>
    %224 = vector.extract_strided_slice %205 {offsets = [2, 0], sizes = [1, 128], strides = [1, 1]} : vector<3x128xf32> to vector<1x128xf32>
    %225 = vector.broadcast %224 : vector<1x128xf32> to vector<8x128xf32>
    %226 = arith.mulf %223, %225 : vector<8x128xf32>
    %c7_i32_119 = arith.constant 7 : i32
    %227 = vector.broadcast %c7_i32_119 : i32 to vector<8x1xi32>
    %228 = arith.cmpi slt, %206, %227 : vector<8x1xi32>
    %cst_120 = arith.constant 0.000000e+00 : f32
    %229 = vector.shape_cast %228 : vector<8x1xi1> to vector<8x1xi1>
    %230 = vector.broadcast %229 : vector<8x1xi1> to vector<8x128xi1>
    %231 = vector.broadcast %cst_120 : f32 to vector<8x128xf32>
    %232 = arith.select %230, %226, %231 : vector<8x128xi1>, vector<8x128xf32>
    %233 = arith.addf %222, %232 : vector<8x128xf32>
    %c0_121 = arith.constant 0 : index
    %c0_122 = arith.constant 0 : index
    %234 = vector.load %arg36[%c0_121, %c0_122] : memref<1x128xf32, #tpu.memory_space<vmem>>, vector<1x128xf32>
    %235 = vector.broadcast %234 : vector<1x128xf32> to vector<8x128xf32>
    %236 = arith.addf %233, %235 : vector<8x128xf32>
    %237 = arith.negf %236 : vector<8x128xf32>
    %238 = math.exp %237 : vector<8x128xf32>
    %cst_123 = arith.constant 1.000000e+00 : f32
    %239 = vector.broadcast %cst_123 : f32 to vector<8x128xf32>
    %240 = arith.addf %239, %238 : vector<8x128xf32>
    %241 = arith.divf %239, %240 : vector<8x128xf32>
    %242 = arith.mulf %236, %241 : vector<8x128xf32>
    %c0_124 = arith.constant 0 : index
    %c0_125 = arith.constant 0 : index
    %243 = vector.load %arg37[%c0_124, %c0_125] : memref<128x128xf32, #tpu.memory_space<vmem>>, vector<128x128xf32>
    %cst_126 = arith.constant dense<0.000000e+00> : vector<8x128xf32>
    %244 = tpu.matmul %242, %243, %cst_126 {dimension_numbers = #tpu.dot_dimension_numbers<[1], [0], [0], [1], [0, 0, 1, 1], [], []>} : vector<8x128xf32>, vector<128x128xf32>, vector<8x128xf32> -> vector<8x128xf32>
    %c0_127 = arith.constant 0 : index
    %c0_128 = arith.constant 0 : index
    %245 = vector.load %arg38[%c0_127, %c0_128] : memref<1x128xf32, #tpu.memory_space<vmem>>, vector<1x128xf32>
    %246 = vector.broadcast %245 : vector<1x128xf32> to vector<8x128xf32>
    %247 = arith.addf %244, %246 : vector<8x128xf32>
    %248 = arith.addf %164, %247 : vector<8x128xf32>
    %c0_129 = arith.constant 0 : index
    %c0_130 = arith.constant 0 : index
    %249 = vector.load %arg2[%c0_129, %c0_130] : memref<1x128xf32, #tpu.memory_space<vmem>>, vector<1x128xf32>
    %c0_131 = arith.constant 0 : index
    %c0_132 = arith.constant 0 : index
    %250 = vector.load %arg3[%c0_131, %c0_132] : memref<1x128xf32, #tpu.memory_space<vmem>>, vector<1x128xf32>
    %cst_133 = arith.constant dense<0.000000e+00> : vector<8xf32>
    %251 = vector.multi_reduction <add>, %248, %cst_133 [1] : vector<8x128xf32> to vector<8xf32>
    %252 = vector.shape_cast %251 : vector<8xf32> to vector<8x1xf32>
    %cst_134 = arith.constant 1.280000e+02 : f32
    %253 = vector.broadcast %cst_134 : f32 to vector<8x1xf32>
    %254 = arith.divf %252, %253 : vector<8x1xf32>
    %255 = vector.broadcast %254 : vector<8x1xf32> to vector<8x128xf32>
    %256 = arith.subf %248, %255 : vector<8x128xf32>
    %257 = arith.mulf %256, %256 : vector<8x128xf32>
    %cst_135 = arith.constant dense<0.000000e+00> : vector<8xf32>
    %258 = vector.multi_reduction <add>, %257, %cst_135 [1] : vector<8x128xf32> to vector<8xf32>
    %259 = vector.shape_cast %258 : vector<8xf32> to vector<8x1xf32>
    %cst_136 = arith.constant 1.280000e+02 : f32
    %260 = vector.broadcast %cst_136 : f32 to vector<8x1xf32>
    %261 = arith.divf %259, %260 : vector<8x1xf32>
    %262 = vector.broadcast %254 : vector<8x1xf32> to vector<8x128xf32>
    %263 = arith.subf %248, %262 : vector<8x128xf32>
    %cst_137 = arith.constant 9.99999974E-6 : f32
    %264 = vector.broadcast %cst_137 : f32 to vector<8x1xf32>
    %265 = arith.addf %261, %264 : vector<8x1xf32>
    %266 = math.rsqrt %265 : vector<8x1xf32>
    %267 = vector.broadcast %266 : vector<8x1xf32> to vector<8x128xf32>
    %268 = arith.mulf %263, %267 : vector<8x128xf32>
    %269 = vector.broadcast %249 : vector<1x128xf32> to vector<8x128xf32>
    %270 = arith.mulf %268, %269 : vector<8x128xf32>
    %271 = vector.broadcast %250 : vector<1x128xf32> to vector<8x128xf32>
    %272 = arith.addf %270, %271 : vector<8x128xf32>
    %c0_138 = arith.constant 0 : index
    %c0_139 = arith.constant 0 : index
    %273 = vector.load %arg4[%c0_138, %c0_139] : memref<128x128xf32, #tpu.memory_space<vmem>>, vector<128x128xf32>
    %cst_140 = arith.constant dense<0.000000e+00> : vector<8x128xf32>
    %274 = tpu.matmul %272, %273, %cst_140 {dimension_numbers = #tpu.dot_dimension_numbers<[1], [0], [0], [1], [0, 0, 1, 1], [], []>} : vector<8x128xf32>, vector<128x128xf32>, vector<8x128xf32> -> vector<8x128xf32>
    %c0_141 = arith.constant 0 : index
    %c0_142 = arith.constant 0 : index
    %275 = vector.load %arg5[%c0_141, %c0_142] : memref<1x128xf32, #tpu.memory_space<vmem>>, vector<1x128xf32>
    %276 = vector.broadcast %275 : vector<1x128xf32> to vector<8x128xf32>
    %277 = arith.addf %274, %276 : vector<8x128xf32>
    %278 = arith.negf %277 : vector<8x128xf32>
    %279 = math.exp %278 : vector<8x128xf32>
    %cst_143 = arith.constant 1.000000e+00 : f32
    %280 = vector.broadcast %cst_143 : f32 to vector<8x128xf32>
    %281 = arith.addf %280, %279 : vector<8x128xf32>
    %282 = arith.divf %280, %281 : vector<8x128xf32>
    %283 = arith.mulf %277, %282 : vector<8x128xf32>
    %c0_144 = arith.constant 0 : index
    %c0_145 = arith.constant 0 : index
    %284 = vector.load %arg6[%c0_144, %c0_145] : memref<128x128xf32, #tpu.memory_space<vmem>>, vector<128x128xf32>
    %cst_146 = arith.constant dense<0.000000e+00> : vector<8x128xf32>
    %285 = tpu.matmul %283, %284, %cst_146 {dimension_numbers = #tpu.dot_dimension_numbers<[1], [0], [0], [1], [0, 0, 1, 1], [], []>} : vector<8x128xf32>, vector<128x128xf32>, vector<8x128xf32> -> vector<8x128xf32>
    %c0_147 = arith.constant 0 : index
    %c0_148 = arith.constant 0 : index
    %286 = vector.load %arg7[%c0_147, %c0_148] : memref<1x128xf32, #tpu.memory_space<vmem>>, vector<1x128xf32>
    %287 = vector.broadcast %286 : vector<1x128xf32> to vector<8x128xf32>
    %288 = arith.addf %285, %287 : vector<8x128xf32>
    %cst_149 = arith.constant 5.000000e-01 : f32
    %289 = vector.broadcast %cst_149 : f32 to vector<8x128xf32>
    %290 = arith.mulf %289, %288 : vector<8x128xf32>
    %291 = arith.addf %248, %290 : vector<8x128xf32>
    %c0_150 = arith.constant 0 : index
    %c0_151 = arith.constant 0 : index
    %292 = vector.load %arg39[%c0_150, %c0_151] : memref<1x128xf32, #tpu.memory_space<vmem>>, vector<1x128xf32>
    %c0_152 = arith.constant 0 : index
    %c0_153 = arith.constant 0 : index
    %293 = vector.load %arg40[%c0_152, %c0_153] : memref<1x128xf32, #tpu.memory_space<vmem>>, vector<1x128xf32>
    %cst_154 = arith.constant dense<0.000000e+00> : vector<8xf32>
    %294 = vector.multi_reduction <add>, %291, %cst_154 [1] : vector<8x128xf32> to vector<8xf32>
    %295 = vector.shape_cast %294 : vector<8xf32> to vector<8x1xf32>
    %cst_155 = arith.constant 1.280000e+02 : f32
    %296 = vector.broadcast %cst_155 : f32 to vector<8x1xf32>
    %297 = arith.divf %295, %296 : vector<8x1xf32>
    %298 = vector.broadcast %297 : vector<8x1xf32> to vector<8x128xf32>
    %299 = arith.subf %291, %298 : vector<8x128xf32>
    %300 = arith.mulf %299, %299 : vector<8x128xf32>
    %cst_156 = arith.constant dense<0.000000e+00> : vector<8xf32>
    %301 = vector.multi_reduction <add>, %300, %cst_156 [1] : vector<8x128xf32> to vector<8xf32>
    %302 = vector.shape_cast %301 : vector<8xf32> to vector<8x1xf32>
    %cst_157 = arith.constant 1.280000e+02 : f32
    %303 = vector.broadcast %cst_157 : f32 to vector<8x1xf32>
    %304 = arith.divf %302, %303 : vector<8x1xf32>
    %305 = vector.broadcast %297 : vector<8x1xf32> to vector<8x128xf32>
    %306 = arith.subf %291, %305 : vector<8x128xf32>
    %cst_158 = arith.constant 9.99999974E-6 : f32
    %307 = vector.broadcast %cst_158 : f32 to vector<8x1xf32>
    %308 = arith.addf %304, %307 : vector<8x1xf32>
    %309 = math.rsqrt %308 : vector<8x1xf32>
    %310 = vector.broadcast %309 : vector<8x1xf32> to vector<8x128xf32>
    %311 = arith.mulf %306, %310 : vector<8x128xf32>
    %312 = vector.broadcast %292 : vector<1x128xf32> to vector<8x128xf32>
    %313 = arith.mulf %311, %312 : vector<8x128xf32>
    %314 = vector.broadcast %293 : vector<1x128xf32> to vector<8x128xf32>
    %315 = arith.addf %313, %314 : vector<8x128xf32>
    %c0_159 = arith.constant 0 : index
    %c0_160 = arith.constant 0 : index
    %c0_161 = arith.constant 0 : index
    %316 = vector.load %arg41[%c0_159, %c0_160, %c0_161] : memref<1x8x128xf32, #tpu.memory_space<vmem>>, vector<1x8x128xf32>
    %317 = vector.shape_cast %316 : vector<1x8x128xf32> to vector<8x128xf32>
    %318 = vector.shape_cast %315 : vector<8x128xf32> to vector<1x8x128xf32>
    tpu.vector_store %arg41[%c0_159, %c0_160, %c0_161], %318 {strides = array<i32>} : memref<1x8x128xf32, #tpu.memory_space<vmem>>, vector<1x8x128xf32>,
    return
  }
  func.func @transform_0(%arg0: i32) -> (i32, i32, i32) {
    %c0_i32 = arith.constant 0 : i32
    %c0_i32_0 = arith.constant 0 : i32
    %c0_i32_1 = arith.constant 0 : i32
    return %arg0, %c0_i32, %c0_i32_0 : i32, i32, i32
  }
  func.func @transform_1(%arg0: i32) -> (i32, i32) {
    %c0_i32 = arith.constant 0 : i32
    %c0_i32_0 = arith.constant 0 : i32
    %c0_i32_1 = arith.constant 0 : i32
    return %c0_i32, %c0_i32_0 : i32, i32
  }
  func.func @transform_2(%arg0: i32) -> (i32, i32) {
    %c0_i32 = arith.constant 0 : i32
    %c0_i32_0 = arith.constant 0 : i32
    %c0_i32_1 = arith.constant 0 : i32
    return %c0_i32, %c0_i32_0 : i32, i32
  }
  func.func @transform_3(%arg0: i32) -> (i32, i32) {
    %c0_i32 = arith.constant 0 : i32
    %c0_i32_0 = arith.constant 0 : i32
    %c0_i32_1 = arith.constant 0 : i32
    return %c0_i32, %c0_i32_0 : i32, i32
  }
  func.func @transform_4(%arg0: i32) -> (i32, i32) {
    %c0_i32 = arith.constant 0 : i32
    %c0_i32_0 = arith.constant 0 : i32
    %c0_i32_1 = arith.constant 0 : i32
    return %c0_i32, %c0_i32_0 : i32, i32
  }
  func.func @transform_5(%arg0: i32) -> (i32, i32) {
    %c0_i32 = arith.constant 0 : i32
    %c0_i32_0 = arith.constant 0 : i32
    %c0_i32_1 = arith.constant 0 : i32
    return %c0_i32, %c0_i32_0 : i32, i32
  }
  func.func @transform_6(%arg0: i32) -> (i32, i32) {
    %c0_i32 = arith.constant 0 : i32
    %c0_i32_0 = arith.constant 0 : i32
    %c0_i32_1 = arith.constant 0 : i32
    return %c0_i32, %c0_i32_0 : i32, i32
  }
  func.func @transform_7(%arg0: i32) -> (i32, i32) {
    %c0_i32 = arith.constant 0 : i32
    %c0_i32_0 = arith.constant 0 : i32
    %c0_i32_1 = arith.constant 0 : i32
    return %c0_i32, %c0_i32_0 : i32, i32
  }
  func.func @transform_8(%arg0: i32) -> (i32, i32) {
    %c0_i32 = arith.constant 0 : i32
    %c0_i32_0 = arith.constant 0 : i32
    %c0_i32_1 = arith.constant 0 : i32
    return %c0_i32, %c0_i32_0 : i32, i32
  }
  func.func @transform_9(%arg0: i32) -> (i32, i32) {
    %c0_i32 = arith.constant 0 : i32
    %c0_i32_0 = arith.constant 0 : i32
    %c0_i32_1 = arith.constant 0 : i32
    return %c0_i32, %c0_i32_0 : i32, i32
  }
  func.func @transform_10(%arg0: i32) -> (i32, i32) {
    %c0_i32 = arith.constant 0 : i32
    %c0_i32_0 = arith.constant 0 : i32
    %c0_i32_1 = arith.constant 0 : i32
    return %c0_i32, %c0_i32_0 : i32, i32
  }
  func.func @transform_11(%arg0: i32) -> (i32, i32) {
    %c0_i32 = arith.constant 0 : i32
    %c0_i32_0 = arith.constant 0 : i32
    %c0_i32_1 = arith.constant 0 : i32
    return %c0_i32, %c0_i32_0 : i32, i32
  }
  func.func @transform_12(%arg0: i32) -> (i32, i32) {
    %c0_i32 = arith.constant 0 : i32
    %c0_i32_0 = arith.constant 0 : i32
    %c0_i32_1 = arith.constant 0 : i32
    return %c0_i32, %c0_i32_0 : i32, i32
  }
  func.func @transform_13(%arg0: i32) -> (i32, i32) {
    %c0_i32 = arith.constant 0 : i32
    %c0_i32_0 = arith.constant 0 : i32
    %c0_i32_1 = arith.constant 0 : i32
    return %c0_i32, %c0_i32_0 : i32, i32
  }
  func.func @transform_14(%arg0: i32) -> (i32, i32) {
    %c0_i32 = arith.constant 0 : i32
    %c0_i32_0 = arith.constant 0 : i32
    %c0_i32_1 = arith.constant 0 : i32
    return %c0_i32, %c0_i32_0 : i32, i32
  }
  func.func @transform_15(%arg0: i32) -> (i32, i32) {
    %c0_i32 = arith.constant 0 : i32
    %c0_i32_0 = arith.constant 0 : i32
    %c0_i32_1 = arith.constant 0 : i32
    return %c0_i32, %c0_i32_0 : i32, i32
  }
  func.func @transform_16(%arg0: i32) -> (i32, i32) {
    %c0_i32 = arith.constant 0 : i32
    %c0_i32_0 = arith.constant 0 : i32
    %c0_i32_1 = arith.constant 0 : i32
    return %c0_i32, %c0_i32_0 : i32, i32
  }
  func.func @transform_17(%arg0: i32) -> (i32, i32) {
    %c0_i32 = arith.constant 0 : i32
    %c0_i32_0 = arith.constant 0 : i32
    %c0_i32_1 = arith.constant 0 : i32
    return %c0_i32, %c0_i32_0 : i32, i32
  }
  func.func @transform_18(%arg0: i32) -> (i32, i32) {
    %c0_i32 = arith.constant 0 : i32
    %c0_i32_0 = arith.constant 0 : i32
    %c0_i32_1 = arith.constant 0 : i32
    return %c0_i32, %c0_i32_0 : i32, i32
  }
  func.func @transform_19(%arg0: i32) -> (i32, i32) {
    %c0_i32 = arith.constant 0 : i32
    %c0_i32_0 = arith.constant 0 : i32
    %c0_i32_1 = arith.constant 0 : i32
    return %c0_i32, %c0_i32_0 : i32, i32
  }
  func.func @transform_20(%arg0: i32) -> (i32, i32) {
    %c0_i32 = arith.constant 0 : i32
    %c0_i32_0 = arith.constant 0 : i32
    %c0_i32_1 = arith.constant 0 : i32
    return %c0_i32, %c0_i32_0 : i32, i32
  }
  func.func @transform_21(%arg0: i32) -> (i32, i32) {
    %c0_i32 = arith.constant 0 : i32
    %c0_i32_0 = arith.constant 0 : i32
    %c0_i32_1 = arith.constant 0 : i32
    return %c0_i32, %c0_i32_0 : i32, i32
  }
  func.func @transform_22(%arg0: i32) -> (i32, i32) {
    %c0_i32 = arith.constant 0 : i32
    %c0_i32_0 = arith.constant 0 : i32
    %c0_i32_1 = arith.constant 0 : i32
    return %c0_i32, %c0_i32_0 : i32, i32
  }
  func.func @transform_23(%arg0: i32) -> (i32, i32) {
    %c0_i32 = arith.constant 0 : i32
    %c0_i32_0 = arith.constant 0 : i32
    %c0_i32_1 = arith.constant 0 : i32
    return %c0_i32, %c0_i32_0 : i32, i32
  }
  func.func @transform_24(%arg0: i32) -> (i32, i32) {
    %c0_i32 = arith.constant 0 : i32
    %c0_i32_0 = arith.constant 0 : i32
    %c0_i32_1 = arith.constant 0 : i32
    return %c0_i32, %c0_i32_0 : i32, i32
  }
  func.func @transform_25(%arg0: i32) -> (i32, i32) {
    %c0_i32 = arith.constant 0 : i32
    %c0_i32_0 = arith.constant 0 : i32
    %c0_i32_1 = arith.constant 0 : i32
    return %c0_i32, %c0_i32_0 : i32, i32
  }
  func.func @transform_26(%arg0: i32) -> (i32, i32) {
    %c0_i32 = arith.constant 0 : i32
    %c0_i32_0 = arith.constant 0 : i32
    %c0_i32_1 = arith.constant 0 : i32
    return %c0_i32, %c0_i32_0 : i32, i32
  }
  func.func @transform_27(%arg0: i32) -> (i32, i32) {
    %c0_i32 = arith.constant 0 : i32
    %c0_i32_0 = arith.constant 0 : i32
    %c0_i32_1 = arith.constant 0 : i32
    return %c0_i32, %c0_i32_0 : i32, i32
  }
  func.func @transform_28(%arg0: i32) -> (i32, i32) {
    %c0_i32 = arith.constant 0 : i32
    %c0_i32_0 = arith.constant 0 : i32
    %c0_i32_1 = arith.constant 0 : i32
    return %c0_i32, %c0_i32_0 : i32, i32
  }
  func.func @transform_29(%arg0: i32) -> (i32, i32) {
    %c0_i32 = arith.constant 0 : i32
    %c0_i32_0 = arith.constant 0 : i32
    %c0_i32_1 = arith.constant 0 : i32
    return %c0_i32, %c0_i32_0 : i32, i32
  }
  func.func @transform_30(%arg0: i32) -> (i32, i32) {
    %c0_i32 = arith.constant 0 : i32
    %c0_i32_0 = arith.constant 0 : i32
    %c0_i32_1 = arith.constant 0 : i32
    return %c0_i32, %c0_i32_0 : i32, i32
  }
  func.func @transform_31(%arg0: i32) -> (i32, i32) {
    %c0_i32 = arith.constant 0 : i32
    %c0_i32_0 = arith.constant 0 : i32
    %c0_i32_1 = arith.constant 0 : i32
    return %c0_i32, %c0_i32_0 : i32, i32
  }
  func.func @transform_32(%arg0: i32) -> (i32, i32) {
    %c0_i32 = arith.constant 0 : i32
    %c0_i32_0 = arith.constant 0 : i32
    %c0_i32_1 = arith.constant 0 : i32
    return %c0_i32, %c0_i32_0 : i32, i32
  }
  func.func @transform_33(%arg0: i32) -> (i32, i32) {
    %c0_i32 = arith.constant 0 : i32
    %c0_i32_0 = arith.constant 0 : i32
    %c0_i32_1 = arith.constant 0 : i32
    return %c0_i32, %c0_i32_0 : i32, i32
  }
  func.func @transform_34(%arg0: i32) -> (i32, i32) {
    %c0_i32 = arith.constant 0 : i32
    %c0_i32_0 = arith.constant 0 : i32
    %c0_i32_1 = arith.constant 0 : i32
    return %c0_i32, %c0_i32_0 : i32, i32
  }
  func.func @transform_35(%arg0: i32) -> (i32, i32) {
    %c0_i32 = arith.constant 0 : i32
    %c0_i32_0 = arith.constant 0 : i32
    %c0_i32_1 = arith.constant 0 : i32
    return %c0_i32, %c0_i32_0 : i32, i32
  }
  func.func @transform_36(%arg0: i32) -> (i32, i32) {
    %c0_i32 = arith.constant 0 : i32
    %c0_i32_0 = arith.constant 0 : i32
    %c0_i32_1 = arith.constant 0 : i32
    return %c0_i32, %c0_i32_0 : i32, i32
  }
  func.func @transform_37(%arg0: i32) -> (i32, i32) {
    %c0_i32 = arith.constant 0 : i32
    %c0_i32_0 = arith.constant 0 : i32
    %c0_i32_1 = arith.constant 0 : i32
    return %c0_i32, %c0_i32_0 : i32, i32
  }
  func.func @transform_38(%arg0: i32) -> (i32, i32) {
    %c0_i32 = arith.constant 0 : i32
    %c0_i32_0 = arith.constant 0 : i32
    %c0_i32_1 = arith.constant 0 : i32
    return %c0_i32, %c0_i32_0 : i32, i32
  }
  func.func @transform_39(%arg0: i32) -> (i32, i32) {
    %c0_i32 = arith.constant 0 : i32
    %c0_i32_0 = arith.constant 0 : i32
    %c0_i32_1 = arith.constant 0 : i32
    return %c0_i32, %c0_i32_0 : i32, i32
  }
  func.func @transform_40(%arg0: i32) -> (i32, i32, i32) {
    %c0_i32 = arith.constant 0 : i32
    %c0_i32_0 = arith.constant 0 : i32
    %c0_i32_1 = arith.constant 0 : i32
    return %arg0, %c0_i32, %c0_i32_0 : i32, i32, i32
  }
}

</mosaic_0001>

<llo_original>
// kernel: tpu_custom_call.1
$region0: #{tpu_custom_call.1}
  #allocation0 [shape = 'u32[]', space=smem, size = 0x4, offset = 0x4, fixed_abs, tag = 'smem constant byte address 0x4 - core index']
  #allocation1 [shape = 'u32[72,128]{1,0:T(1,128)}', space=vmem, size = 0x9000, scoped, tag = 'internal scratch']
  %s0 = inlined_call_operand.smem [shape: u32[41], index: -1, kind: input, shape index: {}]
  %s1 = sld [smem:[%s0]]
  %s2 = scalar_lea.smem %s0, 1
  %s3 = sld [smem:[%s2]]
  %s4 = scalar_lea.smem %s0, 2
  %s5 = sld [smem:[%s4]]
  %s6 = scalar_lea.smem %s0, 3
  %s7 = sld [smem:[%s6]]
  %s8 = scalar_lea.smem %s0, 4
  %s9 = sld [smem:[%s8]]
  %s10 = scalar_lea.smem %s0, 5
  %s11 = sld [smem:[%s10]]
  %s12 = scalar_lea.smem %s0, 6
  %s13 = sld [smem:[%s12]]
  %s14 = scalar_lea.smem %s0, 7
  %s15 = sld [smem:[%s14]]
  %s16 = scalar_lea.smem %s0, 8
  %s17 = sld [smem:[%s16]]
  %s18 = scalar_lea.smem %s0, 9
  %s19 = sld [smem:[%s18]]
  %s20 = scalar_lea.smem %s0, 10
  %s21 = sld [smem:[%s20]]
  %s22 = scalar_lea.smem %s0, 11
  %s23 = sld [smem:[%s22]]
  %s24 = scalar_lea.smem %s0, 12
  %s25 = sld [smem:[%s24]]
  %s26 = scalar_lea.smem %s0, 13
  %s27 = sld [smem:[%s26]]
  %s28 = scalar_lea.smem %s0, 14
  %s29 = sld [smem:[%s28]]
  %s30 = scalar_lea.smem %s0, 15
  %s31 = sld [smem:[%s30]]
  %s32 = scalar_lea.smem %s0, 16
  %s33 = sld [smem:[%s32]]
  %s34 = scalar_lea.smem %s0, 17
  %s35 = sld [smem:[%s34]]
  %s36 = scalar_lea.smem %s0, 18
  %s37 = sld [smem:[%s36]]
  %s38 = scalar_lea.smem %s0, 19
  %s39 = sld [smem:[%s38]]
  %s40 = scalar_lea.smem %s0, 20
  %s41 = sld [smem:[%s40]]
  %s42 = scalar_lea.smem %s0, 21
  %s43 = sld [smem:[%s42]]
  %s44 = scalar_lea.smem %s0, 22
  %s45 = sld [smem:[%s44]]
  %s46 = scalar_lea.smem %s0, 23
  %s47 = sld [smem:[%s46]]
  %s48 = scalar_lea.smem %s0, 24
  %s49 = sld [smem:[%s48]]
  %s50 = scalar_lea.smem %s0, 25
  %s51 = sld [smem:[%s50]]
  %s52 = scalar_lea.smem %s0, 26
  %s53 = sld [smem:[%s52]]
  %s54 = scalar_lea.smem %s0, 27
  %s55 = sld [smem:[%s54]]
  %s56 = scalar_lea.smem %s0, 28
  %s57 = sld [smem:[%s56]]
  %s58 = scalar_lea.smem %s0, 29
  %s59 = sld [smem:[%s58]]
  %s60 = scalar_lea.smem %s0, 30
  %s61 = sld [smem:[%s60]]
  %s62 = scalar_lea.smem %s0, 31
  %s63 = sld [smem:[%s62]]
  %s64 = scalar_lea.smem %s0, 32
  %s65 = sld [smem:[%s64]]
  %s66 = scalar_lea.smem %s0, 33
  %s67 = sld [smem:[%s66]]
  %s68 = scalar_lea.smem %s0, 34
  %s69 = sld [smem:[%s68]]
  %s70 = scalar_lea.smem %s0, 35
  %s71 = sld [smem:[%s70]]
  %s72 = scalar_lea.smem %s0, 36
  %s73 = sld [smem:[%s72]]
  %s74 = scalar_lea.smem %s0, 37
  %s75 = sld [smem:[%s74]]
  %s76 = scalar_lea.smem %s0, 38
  %s77 = sld [smem:[%s76]]
  %s78 = scalar_lea.smem %s0, 39
  %s79 = sld [smem:[%s78]]
  %s80 = scalar_lea.smem %s0, 40
  %s81 = sld [smem:[%s80]]
  %s82 = sld [smem:[#allocation0]]
  $region289: #{tpu_custom_call.1} parent=0
    _
  %s84 = ssub.s32 1, %s82
  %s85 = scalar_select 0, %s84, %s82
  $region1: #{tpu_custom_call.1} parent=0
    #allocation2 [shape = 'u8[8192]{0}', space=vmem, size = 0x2000, scoped, tag = 'input window, operand 0']
    #allocation3 [shape = 's32[2]{0}', space=sflag, size = 0x8, scoped, tag = 'scoped memory for tpu_custom_call.1']
    #allocation4 [shape = 's32[2]{0}', space=sflag, size = 0x8, scoped, tag = 'scoped memory for tpu_custom_call.1']
    #allocation5 [shape = 'u8[512]{0}', space=vmem, size = 0x400, scoped, tag = 'input window, operand 2, single buffered']
    #allocation6 [shape = 's32[1]{0}', space=sflag, size = 0x4, scoped, tag = 'scoped memory for tpu_custom_call.1']
    #allocation7 [shape = 'u8[65536]{0}', space=vmem, size = 0x10000, scoped, tag = 'input window, operand 3, single buffered']
    #allocation8 [shape = 'u8[512]{0}', space=vmem, size = 0x400, scoped, tag = 'input window, operand 4, single buffered']
    #allocation9 [shape = 's32[1]{0}', space=sflag, size = 0x4, scoped, tag = 'scoped memory for tpu_custom_call.1']
    #allocation10 [shape = 'u8[65536]{0}', space=vmem, size = 0x10000, scoped, tag = 'input window, operand 5, single buffered']
    #allocation11 [shape = 'u8[512]{0}', space=vmem, size = 0x400, scoped, tag = 'input window, operand 6, single buffered']
    #allocation12 [shape = 's32[1]{0}', space=sflag, size = 0x4, scoped, tag = 'scoped memory for tpu_custom_call.1']
    #allocation13 [shape = 'u8[512]{0}', space=vmem, size = 0x400, scoped, tag = 'input window, operand 7, single buffered']
    #allocation14 [shape = 'u8[512]{0}', space=vmem, size = 0x400, scoped, tag = 'input window, operand 8, single buffered']
    #allocation15 [shape = 's32[1]{0}', space=sflag, size = 0x4, scoped, tag = 'scoped memory for tpu_custom_call.1']
    #allocation16 [shape = 'u8[65536]{0}', space=vmem, size = 0x10000, scoped, tag = 'input window, operand 10, single buffered']
    #allocation17 [shape = 'u8[512]{0}', space=vmem, size = 0x400, scoped, tag = 'input window, operand 11, single buffered']
    #allocation18 [shape = 's32[1]{0}', space=sflag, size = 0x4, scoped, tag = 'scoped memory for tpu_custom_call.1']
    #allocation19 [shape = 'u8[65536]{0}', space=vmem, size = 0x10000, scoped, tag = 'input window, operand 12, single buffered']
    #allocation20 [shape = 'u8[512]{0}', space=vmem, size = 0x400, scoped, tag = 'input window, operand 13, single buffered']
    #allocation21 [shape = 's32[1]{0}', space=sflag, size = 0x4, scoped, tag = 'scoped memory for tpu_custom_call.1']
    #allocation22 [shape = 'u8[65536]{0}', space=vmem, size = 0x10000, scoped, tag = 'input window, operand 14, single buffered']
    #allocation23 [shape = 'u8[512]{0}', space=vmem, size = 0x400, scoped, tag = 'input window, operand 15, single buffered']
    #allocation24 [shape = 's32[1]{0}', space=sflag, size = 0x4, scoped, tag = 'scoped memory for tpu_custom_call.1']
    #allocation25 [shape = 'u8[65536]{0}', space=vmem, size = 0x10000, scoped, tag = 'input window, operand 16, single buffered']
    #allocation26 [shape = 'u8[512]{0}', space=vmem, size = 0x400, scoped, tag = 'input window, operand 17, single buffered']
    #allocation27 [shape = 's32[1]{0}', space=sflag, size = 0x4, scoped, tag = 'scoped memory for tpu_custom_call.1']
    #allocation28 [shape = 'u8[512]{0}', space=vmem, size = 0x400, scoped, tag = 'input window, operand 18, single buffered']
    #allocation29 [shape = 'u8[512]{0}', space=vmem, size = 0x400, scoped, tag = 'input window, operand 19, single buffered']
    #allocation30 [shape = 's32[1]{0}', space=sflag, size = 0x4, scoped, tag = 'scoped memory for tpu_custom_call.1']
    #allocation31 [shape = 'u8[512]{0}', space=vmem, size = 0x400, scoped, tag = 'input window, operand 21, single buffered']
    #allocation32 [shape = 'u8[4096]{0}', space=vmem, size = 0x1000, scoped, tag = 'input window, operand 24, single buffered']
    #allocation33 [shape = 's32[1]{0}', space=sflag, size = 0x4, scoped, tag = 'scoped memory for tpu_custom_call.1']
    #allocation34 [shape = 'u8[4096]{0}', space=vmem, size = 0x1000, scoped, tag = 'input window, operand 26, single buffered']
    #allocation35 [shape = 'u8[65536]{0}', space=vmem, size = 0x10000, scoped, tag = 'input window, operand 30, single buffered']
    #allocation36 [shape = 's32[1]{0}', space=sflag, size = 0x4, scoped, tag = 'scoped memory for tpu_custom_call.1']
    #allocation37 [shape = 'u8[65536]{0}', space=vmem, size = 0x10000, scoped, tag = 'input window, operand 32, single buffered']
    #allocation38 [shape = 'u8[65536]{0}', space=vmem, size = 0x10000, scoped, tag = 'input window, operand 36, single buffered']
    #allocation39 [shape = 's32[1]{0}', space=sflag, size = 0x4, scoped, tag = 'scoped memory for tpu_custom_call.1']
    #allocation40 [shape = 'u8[8192]{0}', space=vmem, size = 0x2000, scoped, tag = 'output window, operand 0']
    %86 = vsyncpa [#allocation3], 0
    %s87 = scalar_lea.sflag [#allocation3], 1
    %88 = vsyncpa %s87, 0
    %89 = vsyncpa [#allocation6], 0
    %90 = vsyncpa [#allocation9], 0
    %91 = vsyncpa [#allocation12], 0
    %92 = vsyncpa [#allocation15], 0
    %93 = vsyncpa [#allocation18], 0
    %94 = vsyncpa [#allocation21], 0
    %95 = vsyncpa [#allocation24], 0
    %96 = vsyncpa [#allocation27], 0
    %97 = vsyncpa [#allocation30], 0
    %98 = vsyncpa [#allocation33], 0
    %99 = vsyncpa [#allocation36], 0
    %100 = vsyncpa [#allocation39], 0
    %101 = vsyncpa [#allocation4], 0
    %s102 = scalar_lea.sflag [#allocation4], 1
    %103 = vsyncpa %s102, 0
    loop: start=0, step=1, limit=4
    $region2: #{tpu_custom_call.1} parent=1 // loop_pre_header
      _
    $region3: #{tpu_custom_call.1} parent=1 // loop_header
      %s105 = sphi 0, %s109
      %p106 = scmp.ge.s32.totalorder %s105, 4
      %s115 = sphi 0, %s117
      %s118 = sphi 0, %s115
      %s119 = sphi 0, %s118
      %s135 = sphi 0, %s119
      %s139 = sphi 0, %s139
      %s141 = sphi 0, %s139
      %s142 = sphi 0, %s141
      %s156 = sphi 0, %s142
      %s160 = sphi 0, %s160
      %s162 = sphi 0, %s160
      %s163 = sphi 0, %s162
      %s177 = sphi 0, %s163
      %s181 = sphi 0, %s181
      %s183 = sphi 0, %s181
      %s184 = sphi 0, %s183
      %s198 = sphi 0, %s184
      %s202 = sphi 0, %s202
      %s204 = sphi 0, %s202
      %s205 = sphi 0, %s204
      %s219 = sphi 0, %s205
      %s223 = sphi 0, %s223
      %s225 = sphi 0, %s223
      %s226 = sphi 0, %s225
      %s240 = sphi 0, %s226
      %s244 = sphi 0, %s244
      %s246 = sphi 0, %s244
      %s247 = sphi 0, %s246
      %s261 = sphi 0, %s247
      %s265 = sphi 0, %s265
      %s267 = sphi 0, %s265
      %s268 = sphi 0, %s267
      %s282 = sphi 0, %s268
      %s286 = sphi 0, %s286
      %s288 = sphi 0, %s286
      %s289 = sphi 0, %s288
      %s303 = sphi 0, %s289
      %s307 = sphi 0, %s307
      %s309 = sphi 0, %s307
      %s310 = sphi 0, %s309
      %s324 = sphi 0, %s310
      %s328 = sphi 0, %s328
      %s330 = sphi 0, %s328
      %s331 = sphi 0, %s330
      %s345 = sphi 0, %s331
      %s349 = sphi 0, %s349
      %s351 = sphi 0, %s349
      %s352 = sphi 0, %s351
      %s366 = sphi 0, %s352
      %s370 = sphi 0, %s370
      %s372 = sphi 0, %s370
      %s373 = sphi 0, %s372
      %s387 = sphi 0, %s373
      %s391 = sphi 0, %s391
      %s393 = sphi 0, %s391
      %s394 = sphi 0, %s393
      %s408 = sphi 0, %s394
      %s412 = sphi 0, %s412
      %s414 = sphi 0, %s412
      %s415 = sphi 0, %s414
      %s429 = sphi 0, %s415
      %s433 = sphi 0, %s433
      %s435 = sphi 0, %s433
      %s436 = sphi 0, %s435
      %s450 = sphi 0, %s436
      %s454 = sphi 0, %s454
      %s456 = sphi 0, %s454
      %s457 = sphi 0, %s456
      %s471 = sphi 0, %s457
      %s475 = sphi 0, %s475
      %s477 = sphi 0, %s475
      %s478 = sphi 0, %s477
      %s492 = sphi 0, %s478
      %s496 = sphi 0, %s496
      %s498 = sphi 0, %s496
      %s499 = sphi 0, %s498
      %s513 = sphi 0, %s499
      %s517 = sphi 0, %s517
      %s519 = sphi 0, %s517
      %s520 = sphi 0, %s519
      %s534 = sphi 0, %s520
      %s538 = sphi 0, %s538
      %s540 = sphi 0, %s538
      %s541 = sphi 0, %s540
      %s555 = sphi 0, %s541
      %s559 = sphi 0, %s559
      %s561 = sphi 0, %s559
      %s562 = sphi 0, %s561
      %s576 = sphi 0, %s562
      %s580 = sphi 0, %s580
      %s582 = sphi 0, %s580
      %s583 = sphi 0, %s582
      %s597 = sphi 0, %s583
      %s601 = sphi 0, %s601
      %s603 = sphi 0, %s601
      %s604 = sphi 0, %s603
      %s618 = sphi 0, %s604
      %s622 = sphi 0, %s622
      %s624 = sphi 0, %s622
      %s625 = sphi 0, %s624
      %s639 = sphi 0, %s625
      %s643 = sphi 0, %s643
      %s645 = sphi 0, %s643
      %s646 = sphi 0, %s645
      %s660 = sphi 0, %s646
      %s664 = sphi 0, %s664
      %s666 = sphi 0, %s664
      %s667 = sphi 0, %s666
      %s681 = sphi 0, %s667
      %s685 = sphi 0, %s685
      %s687 = sphi 0, %s685
      %s688 = sphi 0, %s687
      %s702 = sphi 0, %s688
      %s706 = sphi 0, %s706
      %s708 = sphi 0, %s706
      %s709 = sphi 0, %s708
      %s723 = sphi 0, %s709
      %s727 = sphi 0, %s727
      %s729 = sphi 0, %s727
      %s730 = sphi 0, %s729
      %s744 = sphi 0, %s730
      %s748 = sphi 0, %s748
      %s750 = sphi 0, %s748
      %s751 = sphi 0, %s750
      %s765 = sphi 0, %s751
      %s769 = sphi 0, %s769
      %s771 = sphi 0, %s769
      %s772 = sphi 0, %s771
      %s786 = sphi 0, %s772
      %s790 = sphi 0, %s790
      %s792 = sphi 0, %s790
      %s793 = sphi 0, %s792
      %s807 = sphi 0, %s793
      %s811 = sphi 0, %s811
      %s813 = sphi 0, %s811
      %s814 = sphi 0, %s813
      %s828 = sphi 0, %s814
      %s832 = sphi 0, %s832
      %s834 = sphi 0, %s832
      %s835 = sphi 0, %s834
      %s849 = sphi 0, %s835
      %s853 = sphi 0, %s853
      %s855 = sphi 0, %s853
      %s856 = sphi 0, %s855
      %s870 = sphi 0, %s856
      %s874 = sphi 0, %s874
      %s876 = sphi 0, %s874
      %s877 = sphi 0, %s876
      %s891 = sphi 0, %s877
      %s895 = sphi 0, %s895
      %s897 = sphi 0, %s895
      %s898 = sphi 0, %s897
      %s912 = sphi 0, %s898
      %s916 = sphi 0, %s916
      %s918 = sphi 0, %s916
      %s919 = sphi 0, %s918
      %s933 = sphi 0, %s919
      %s937 = sphi 0, %s937
      %s939 = sphi 0, %s937
      %s940 = sphi 0, %s939
      %s954 = sphi 0, %s940
      %s960 = sphi 0, %s962
      %s963 = sphi 0, %s960
      %s964 = sphi 0, %s963
      %s980 = sphi 0, %s964
    $region4: #{tpu_custom_call.1} parent=1 // loop_header_branch
      %108 = sbr.rel (%p106) target = $region8
    $region5: #{tpu_custom_call.1} parent=1 // loop_body
      %s110 = ssub.s32 %s105, 1
      %s111 = ssub.s32 %s105, 2
      %s112 = sadd.s32 %s105, 1
      %s113 = ssub.s32 %s105, %s112
      %p114 = scmp.eq.s32.totalorder %s113, 0
      %s116 = sadd.s32 %s115, 1
      %s117 = scalar_select %p114, %s115, %s116
      %p120 = pneg %p114
      %p121 = scmp.eq.s32.totalorder %s105, 1
      %p122 = por %p120, %p121
      %p123 = scmp.ne.s32.totalorder %s115, %s118
      %p124 = scmp.eq.s32.totalorder %s105, 0
      %p125 = por %p123, %p124
      %p126 = scmp.ne.s32.totalorder %s115, %s118
      %p127 = scmp.eq.s32.totalorder %s110, 1
      %p128 = por %p126, %p127
      %p129 = scmp.ne.s32.totalorder %s118, %s119
      %p130 = scmp.eq.s32.totalorder %s110, 0
      %p131 = por %p129, %p130
      %p132 = scmp.ne.s32.totalorder %s118, %s119
      %p133 = scmp.eq.s32.totalorder %s111, 1
      %p134 = por %p132, %p133
      %p136 = scmp.ne.s32.totalorder %s119, %s135
      %p137 = scmp.eq.s32.totalorder %s111, 0
      %p138 = por %p136, %p137
      %s140 = sadd.s32 %s139, 1
      %p143 = scmp.eq.s32.totalorder %s105, 1
      %p144 = scmp.ne.s32.totalorder %s139, %s141
      %p145 = scmp.eq.s32.totalorder %s105, 0
      %p146 = por %p144, %p145
      %p147 = scmp.ne.s32.totalorder %s139, %s141
      %p148 = scmp.eq.s32.totalorder %s110, 1
      %p149 = por %p147, %p148
      %p150 = scmp.ne.s32.totalorder %s141, %s142
      %p151 = scmp.eq.s32.totalorder %s110, 0
      %p152 = por %p150, %p151
      %p153 = scmp.ne.s32.totalorder %s141, %s142
      %p154 = scmp.eq.s32.totalorder %s111, 1
      %p155 = por %p153, %p154
      %p157 = scmp.ne.s32.totalorder %s142, %s156
      %p158 = scmp.eq.s32.totalorder %s111, 0
      %p159 = por %p157, %p158
      %s161 = sadd.s32 %s160, 1
      %p164 = scmp.eq.s32.totalorder %s105, 1
      %p165 = scmp.ne.s32.totalorder %s160, %s162
      %p166 = scmp.eq.s32.totalorder %s105, 0
      %p167 = por %p165, %p166
      %p168 = scmp.ne.s32.totalorder %s160, %s162
      %p169 = scmp.eq.s32.totalorder %s110, 1
      %p170 = por %p168, %p169
      %p171 = scmp.ne.s32.totalorder %s162, %s163
      %p172 = scmp.eq.s32.totalorder %s110, 0
      %p173 = por %p171, %p172
      %p174 = scmp.ne.s32.totalorder %s162, %s163
      %p175 = scmp.eq.s32.totalorder %s111, 1
      %p176 = por %p174, %p175
      %p178 = scmp.ne.s32.totalorder %s163, %s177
      %p179 = scmp.eq.s32.totalorder %s111, 0
      %p180 = por %p178, %p179
      %s182 = sadd.s32 %s181, 1
      %p185 = scmp.eq.s32.totalorder %s105, 1
      %p186 = scmp.ne.s32.totalorder %s181, %s183
      %p187 = scmp.eq.s32.totalorder %s105, 0
      %p188 = por %p186, %p187
      %p189 = scmp.ne.s32.totalorder %s181, %s183
      %p190 = scmp.eq.s32.totalorder %s110, 1
      %p191 = por %p189, %p190
      %p192 = scmp.ne.s32.totalorder %s183, %s184
      %p193 = scmp.eq.s32.totalorder %s110, 0
      %p194 = por %p192, %p193
      %p195 = scmp.ne.s32.totalorder %s183, %s184
      %p196 = scmp.eq.s32.totalorder %s111, 1
      %p197 = por %p195, %p196
      %p199 = scmp.ne.s32.totalorder %s184, %s198
      %p200 = scmp.eq.s32.totalorder %s111, 0
      %p201 = por %p199, %p200
      %s203 = sadd.s32 %s202, 1
      %p206 = scmp.eq.s32.totalorder %s105, 1
      %p207 = scmp.ne.s32.totalorder %s202, %s204
      %p208 = scmp.eq.s32.totalorder %s105, 0
      %p209 = por %p207, %p208
      %p210 = scmp.ne.s32.totalorder %s202, %s204
      %p211 = scmp.eq.s32.totalorder %s110, 1
      %p212 = por %p210, %p211
      %p213 = scmp.ne.s32.totalorder %s204, %s205
      %p214 = scmp.eq.s32.totalorder %s110, 0
      %p215 = por %p213, %p214
      %p216 = scmp.ne.s32.totalorder %s204, %s205
      %p217 = scmp.eq.s32.totalorder %s111, 1
      %p218 = por %p216, %p217
      %p220 = scmp.ne.s32.totalorder %s205, %s219
      %p221 = scmp.eq.s32.totalorder %s111, 0
      %p222 = por %p220, %p221
      %s224 = sadd.s32 %s223, 1
      %p227 = scmp.eq.s32.totalorder %s105, 1
      %p228 = scmp.ne.s32.totalorder %s223, %s225
      %p229 = scmp.eq.s32.totalorder %s105, 0
      %p230 = por %p228, %p229
      %p231 = scmp.ne.s32.totalorder %s223, %s225
      %p232 = scmp.eq.s32.totalorder %s110, 1
      %p233 = por %p231, %p232
      %p234 = scmp.ne.s32.totalorder %s225, %s226
      %p235 = scmp.eq.s32.totalorder %s110, 0
      %p236 = por %p234, %p235
      %p237 = scmp.ne.s32.totalorder %s225, %s226
      %p238 = scmp.eq.s32.totalorder %s111, 1
      %p239 = por %p237, %p238
      %p241 = scmp.ne.s32.totalorder %s226, %s240
      %p242 = scmp.eq.s32.totalorder %s111, 0
      %p243 = por %p241, %p242
      %s245 = sadd.s32 %s244, 1
      %p248 = scmp.eq.s32.totalorder %s105, 1
      %p249 = scmp.ne.s32.totalorder %s244, %s246
      %p250 = scmp.eq.s32.totalorder %s105, 0
      %p251 = por %p249, %p250
      %p252 = scmp.ne.s32.totalorder %s244, %s246
      %p253 = scmp.eq.s32.totalorder %s110, 1
      %p254 = por %p252, %p253
      %p255 = scmp.ne.s32.totalorder %s246, %s247
      %p256 = scmp.eq.s32.totalorder %s110, 0
      %p257 = por %p255, %p256
      %p258 = scmp.ne.s32.totalorder %s246, %s247
      %p259 = scmp.eq.s32.totalorder %s111, 1
      %p260 = por %p258, %p259
      %p262 = scmp.ne.s32.totalorder %s247, %s261
      %p263 = scmp.eq.s32.totalorder %s111, 0
      %p264 = por %p262, %p263
      %s266 = sadd.s32 %s265, 1
      %p269 = scmp.eq.s32.totalorder %s105, 1
      %p270 = scmp.ne.s32.totalorder %s265, %s267
      %p271 = scmp.eq.s32.totalorder %s105, 0
      %p272 = por %p270, %p271
      %p273 = scmp.ne.s32.totalorder %s265, %s267
      %p274 = scmp.eq.s32.totalorder %s110, 1
      %p275 = por %p273, %p274
      %p276 = scmp.ne.s32.totalorder %s267, %s268
      %p277 = scmp.eq.s32.totalorder %s110, 0
      %p278 = por %p276, %p277
      %p279 = scmp.ne.s32.totalorder %s267, %s268
      %p280 = scmp.eq.s32.totalorder %s111, 1
      %p281 = por %p279, %p280
      %p283 = scmp.ne.s32.totalorder %s268, %s282
      %p284 = scmp.eq.s32.totalorder %s111, 0
      %p285 = por %p283, %p284
      %s287 = sadd.s32 %s286, 1
      %p290 = scmp.eq.s32.totalorder %s105, 1
      %p291 = scmp.ne.s32.totalorder %s286, %s288
      %p292 = scmp.eq.s32.totalorder %s105, 0
      %p293 = por %p291, %p292
      %p294 = scmp.ne.s32.totalorder %s286, %s288
      %p295 = scmp.eq.s32.totalorder %s110, 1
      %p296 = por %p294, %p295
      %p297 = scmp.ne.s32.totalorder %s288, %s289
      %p298 = scmp.eq.s32.totalorder %s110, 0
      %p299 = por %p297, %p298
      %p300 = scmp.ne.s32.totalorder %s288, %s289
      %p301 = scmp.eq.s32.totalorder %s111, 1
      %p302 = por %p300, %p301
      %p304 = scmp.ne.s32.totalorder %s289, %s303
      %p305 = scmp.eq.s32.totalorder %s111, 0
      %p306 = por %p304, %p305
      %s308 = sadd.s32 %s307, 1
      %p311 = scmp.eq.s32.totalorder %s105, 1
      %p312 = scmp.ne.s32.totalorder %s307, %s309
      %p313 = scmp.eq.s32.totalorder %s105, 0
      %p314 = por %p312, %p313
      %p315 = scmp.ne.s32.totalorder %s307, %s309
      %p316 = scmp.eq.s32.totalorder %s110, 1
      %p317 = por %p315, %p316
      %p318 = scmp.ne.s32.totalorder %s309, %s310
      %p319 = scmp.eq.s32.totalorder %s110, 0
      %p320 = por %p318, %p319
      %p321 = scmp.ne.s32.totalorder %s309, %s310
      %p322 = scmp.eq.s32.totalorder %s111, 1
      %p323 = por %p321, %p322
      %p325 = scmp.ne.s32.totalorder %s310, %s324
      %p326 = scmp.eq.s32.totalorder %s111, 0
      %p327 = por %p325, %p326
      %s329 = sadd.s32 %s328, 1
      %p332 = scmp.eq.s32.totalorder %s105, 1
      %p333 = scmp.ne.s32.totalorder %s328, %s330
      %p334 = scmp.eq.s32.totalorder %s105, 0
      %p335 = por %p333, %p334
      %p336 = scmp.ne.s32.totalorder %s328, %s330
      %p337 = scmp.eq.s32.totalorder %s110, 1
      %p338 = por %p336, %p337
      %p339 = scmp.ne.s32.totalorder %s330, %s331
      %p340 = scmp.eq.s32.totalorder %s110, 0
      %p341 = por %p339, %p340
      %p342 = scmp.ne.s32.totalorder %s330, %s331
      %p343 = scmp.eq.s32.totalorder %s111, 1
      %p344 = por %p342, %p343
      %p346 = scmp.ne.s32.totalorder %s331, %s345
      %p347 = scmp.eq.s32.totalorder %s111, 0
      %p348 = por %p346, %p347
      %s350 = sadd.s32 %s349, 1
      %p353 = scmp.eq.s32.totalorder %s105, 1
      %p354 = scmp.ne.s32.totalorder %s349, %s351
      %p355 = scmp.eq.s32.totalorder %s105, 0
      %p356 = por %p354, %p355
      %p357 = scmp.ne.s32.totalorder %s349, %s351
      %p358 = scmp.eq.s32.totalorder %s110, 1
      %p359 = por %p357, %p358
      %p360 = scmp.ne.s32.totalorder %s351, %s352
      %p361 = scmp.eq.s32.totalorder %s110, 0
      %p362 = por %p360, %p361
      %p363 = scmp.ne.s32.totalorder %s351, %s352
      %p364 = scmp.eq.s32.totalorder %s111, 1
      %p365 = por %p363, %p364
      %p367 = scmp.ne.s32.totalorder %s352, %s366
      %p368 = scmp.eq.s32.totalorder %s111, 0
      %p369 = por %p367, %p368
      %s371 = sadd.s32 %s370, 1
      %p374 = scmp.eq.s32.totalorder %s105, 1
      %p375 = scmp.ne.s32.totalorder %s370, %s372
      %p376 = scmp.eq.s32.totalorder %s105, 0
      %p377 = por %p375, %p376
      %p378 = scmp.ne.s32.totalorder %s370, %s372
      %p379 = scmp.eq.s32.totalorder %s110, 1
      %p380 = por %p378, %p379
      %p381 = scmp.ne.s32.totalorder %s372, %s373
      %p382 = scmp.eq.s32.totalorder %s110, 0
      %p383 = por %p381, %p382
      %p384 = scmp.ne.s32.totalorder %s372, %s373
      %p385 = scmp.eq.s32.totalorder %s111, 1
      %p386 = por %p384, %p385
      %p388 = scmp.ne.s32.totalorder %s373, %s387
      %p389 = scmp.eq.s32.totalorder %s111, 0
      %p390 = por %p388, %p389
      %s392 = sadd.s32 %s391, 1
      %p395 = scmp.eq.s32.totalorder %s105, 1
      %p396 = scmp.ne.s32.totalorder %s391, %s393
      %p397 = scmp.eq.s32.totalorder %s105, 0
      %p398 = por %p396, %p397
      %p399 = scmp.ne.s32.totalorder %s391, %s393
      %p400 = scmp.eq.s32.totalorder %s110, 1
      %p401 = por %p399, %p400
      %p402 = scmp.ne.s32.totalorder %s393, %s394
      %p403 = scmp.eq.s32.totalorder %s110, 0
      %p404 = por %p402, %p403
      %p405 = scmp.ne.s32.totalorder %s393, %s394
      %p406 = scmp.eq.s32.totalorder %s111, 1
      %p407 = por %p405, %p406
      %p409 = scmp.ne.s32.totalorder %s394, %s408
      %p410 = scmp.eq.s32.totalorder %s111, 0
      %p411 = por %p409, %p410
      %s413 = sadd.s32 %s412, 1
      %p416 = scmp.eq.s32.totalorder %s105, 1
      %p417 = scmp.ne.s32.totalorder %s412, %s414
      %p418 = scmp.eq.s32.totalorder %s105, 0
      %p419 = por %p417, %p418
      %p420 = scmp.ne.s32.totalorder %s412, %s414
      %p421 = scmp.eq.s32.totalorder %s110, 1
      %p422 = por %p420, %p421
      %p423 = scmp.ne.s32.totalorder %s414, %s415
      %p424 = scmp.eq.s32.totalorder %s110, 0
      %p425 = por %p423, %p424
      %p426 = scmp.ne.s32.totalorder %s414, %s415
      %p427 = scmp.eq.s32.totalorder %s111, 1
      %p428 = por %p426, %p427
      %p430 = scmp.ne.s32.totalorder %s415, %s429
      %p431 = scmp.eq.s32.totalorder %s111, 0
      %p432 = por %p430, %p431
      %s434 = sadd.s32 %s433, 1
      %p437 = scmp.eq.s32.totalorder %s105, 1
      %p438 = scmp.ne.s32.totalorder %s433, %s435
      %p439 = scmp.eq.s32.totalorder %s105, 0
      %p440 = por %p438, %p439
      %p441 = scmp.ne.s32.totalorder %s433, %s435
      %p442 = scmp.eq.s32.totalorder %s110, 1
      %p443 = por %p441, %p442
      %p444 = scmp.ne.s32.totalorder %s435, %s436
      %p445 = scmp.eq.s32.totalorder %s110, 0
      %p446 = por %p444, %p445
      %p447 = scmp.ne.s32.totalorder %s435, %s436
      %p448 = scmp.eq.s32.totalorder %s111, 1
      %p449 = por %p447, %p448
      %p451 = scmp.ne.s32.totalorder %s436, %s450
      %p452 = scmp.eq.s32.totalorder %s111, 0
      %p453 = por %p451, %p452
      %s455 = sadd.s32 %s454, 1
      %p458 = scmp.eq.s32.totalorder %s105, 1
      %p459 = scmp.ne.s32.totalorder %s454, %s456
      %p460 = scmp.eq.s32.totalorder %s105, 0
      %p461 = por %p459, %p460
      %p462 = scmp.ne.s32.totalorder %s454, %s456
      %p463 = scmp.eq.s32.totalorder %s110, 1
      %p464 = por %p462, %p463
      %p465 = scmp.ne.s32.totalorder %s456, %s457
      %p466 = scmp.eq.s32.totalorder %s110, 0
      %p467 = por %p465, %p466
      %p468 = scmp.ne.s32.totalorder %s456, %s457
      %p469 = scmp.eq.s32.totalorder %s111, 1
      %p470 = por %p468, %p469
      %p472 = scmp.ne.s32.totalorder %s457, %s471
      %p473 = scmp.eq.s32.totalorder %s111, 0
      %p474 = por %p472, %p473
      %s476 = sadd.s32 %s475, 1
      %p479 = scmp.eq.s32.totalorder %s105, 1
      %p480 = scmp.ne.s32.totalorder %s475, %s477
      %p481 = scmp.eq.s32.totalorder %s105, 0
      %p482 = por %p480, %p481
      %p483 = scmp.ne.s32.totalorder %s475, %s477
      %p484 = scmp.eq.s32.totalorder %s110, 1
      %p485 = por %p483, %p484
      %p486 = scmp.ne.s32.totalorder %s477, %s478
      %p487 = scmp.eq.s32.totalorder %s110, 0
      %p488 = por %p486, %p487
      %p489 = scmp.ne.s32.totalorder %s477, %s478
      %p490 = scmp.eq.s32.totalorder %s111, 1
      %p491 = por %p489, %p490
      %p493 = scmp.ne.s32.totalorder %s478, %s492
      %p494 = scmp.eq.s32.totalorder %s111, 0
      %p495 = por %p493, %p494
      %s497 = sadd.s32 %s496, 1
      %p500 = scmp.eq.s32.totalorder %s105, 1
      %p501 = scmp.ne.s32.totalorder %s496, %s498
      %p502 = scmp.eq.s32.totalorder %s105, 0
      %p503 = por %p501, %p502
      %p504 = scmp.ne.s32.totalorder %s496, %s498
      %p505 = scmp.eq.s32.totalorder %s110, 1
      %p506 = por %p504, %p505
      %p507 = scmp.ne.s32.totalorder %s498, %s499
      %p508 = scmp.eq.s32.totalorder %s110, 0
      %p509 = por %p507, %p508
      %p510 = scmp.ne.s32.totalorder %s498, %s499
      %p511 = scmp.eq.s32.totalorder %s111, 1
      %p512 = por %p510, %p511
      %p514 = scmp.ne.s32.totalorder %s499, %s513
      %p515 = scmp.eq.s32.totalorder %s111, 0
      %p516 = por %p514, %p515
      %s518 = sadd.s32 %s517, 1
      %p521 = scmp.eq.s32.totalorder %s105, 1
      %p522 = scmp.ne.s32.totalorder %s517, %s519
      %p523 = scmp.eq.s32.totalorder %s105, 0
      %p524 = por %p522, %p523
      %p525 = scmp.ne.s32.totalorder %s517, %s519
      %p526 = scmp.eq.s32.totalorder %s110, 1
      %p527 = por %p525, %p526
      %p528 = scmp.ne.s32.totalorder %s519, %s520
      %p529 = scmp.eq.s32.totalorder %s110, 0
      %p530 = por %p528, %p529
      %p531 = scmp.ne.s32.totalorder %s519, %s520
      %p532 = scmp.eq.s32.totalorder %s111, 1
      %p533 = por %p531, %p532
      %p535 = scmp.ne.s32.totalorder %s520, %s534
      %p536 = scmp.eq.s32.totalorder %s111, 0
      %p537 = por %p535, %p536
      %s539 = sadd.s32 %s538, 1
      %p542 = scmp.eq.s32.totalorder %s105, 1
      %p543 = scmp.ne.s32.totalorder %s538, %s540
      %p544 = scmp.eq.s32.totalorder %s105, 0
      %p545 = por %p543, %p544
      %p546 = scmp.ne.s32.totalorder %s538, %s540
      %p547 = scmp.eq.s32.totalorder %s110, 1
      %p548 = por %p546, %p547
      %p549 = scmp.ne.s32.totalorder %s540, %s541
      %p550 = scmp.eq.s32.totalorder %s110, 0
      %p551 = por %p549, %p550
      %p552 = scmp.ne.s32.totalorder %s540, %s541
      %p553 = scmp.eq.s32.totalorder %s111, 1
      %p554 = por %p552, %p553
      %p556 = scmp.ne.s32.totalorder %s541, %s555
      %p557 = scmp.eq.s32.totalorder %s111, 0
      %p558 = por %p556, %p557
      %s560 = sadd.s32 %s559, 1
      %p563 = scmp.eq.s32.totalorder %s105, 1
      %p564 = scmp.ne.s32.totalorder %s559, %s561
      %p565 = scmp.eq.s32.totalorder %s105, 0
      %p566 = por %p564, %p565
      %p567 = scmp.ne.s32.totalorder %s559, %s561
      %p568 = scmp.eq.s32.totalorder %s110, 1
      %p569 = por %p567, %p568
      %p570 = scmp.ne.s32.totalorder %s561, %s562
      %p571 = scmp.eq.s32.totalorder %s110, 0
      %p572 = por %p570, %p571
      %p573 = scmp.ne.s32.totalorder %s561, %s562
      %p574 = scmp.eq.s32.totalorder %s111, 1
      %p575 = por %p573, %p574
      %p577 = scmp.ne.s32.totalorder %s562, %s576
      %p578 = scmp.eq.s32.totalorder %s111, 0
      %p579 = por %p577, %p578
      %s581 = sadd.s32 %s580, 1
      %p584 = scmp.eq.s32.totalorder %s105, 1
      %p585 = scmp.ne.s32.totalorder %s580, %s582
      %p586 = scmp.eq.s32.totalorder %s105, 0
      %p587 = por %p585, %p586
      %p588 = scmp.ne.s32.totalorder %s580, %s582
      %p589 = scmp.eq.s32.totalorder %s110, 1
      %p590 = por %p588, %p589
      %p591 = scmp.ne.s32.totalorder %s582, %s583
      %p592 = scmp.eq.s32.totalorder %s110, 0
      %p593 = por %p591, %p592
      %p594 = scmp.ne.s32.totalorder %s582, %s583
      %p595 = scmp.eq.s32.totalorder %s111, 1
      %p596 = por %p594, %p595
      %p598 = scmp.ne.s32.totalorder %s583, %s597
      %p599 = scmp.eq.s32.totalorder %s111, 0
      %p600 = por %p598, %p599
      %s602 = sadd.s32 %s601, 1
      %p605 = scmp.eq.s32.totalorder %s105, 1
      %p606 = scmp.ne.s32.totalorder %s601, %s603
      %p607 = scmp.eq.s32.totalorder %s105, 0
      %p608 = por %p606, %p607
      %p609 = scmp.ne.s32.totalorder %s601, %s603
      %p610 = scmp.eq.s32.totalorder %s110, 1
      %p611 = por %p609, %p610
      %p612 = scmp.ne.s32.totalorder %s603, %s604
      %p613 = scmp.eq.s32.totalorder %s110, 0
      %p614 = por %p612, %p613
      %p615 = scmp.ne.s32.totalorder %s603, %s604
      %p616 = scmp.eq.s32.totalorder %s111, 1
      %p617 = por %p615, %p616
      %p619 = scmp.ne.s32.totalorder %s604, %s618
      %p620 = scmp.eq.s32.totalorder %s111, 0
      %p621 = por %p619, %p620
      %s623 = sadd.s32 %s622, 1
      %p626 = scmp.eq.s32.totalorder %s105, 1
      %p627 = scmp.ne.s32.totalorder %s622, %s624
      %p628 = scmp.eq.s32.totalorder %s105, 0
      %p629 = por %p627, %p628
      %p630 = scmp.ne.s32.totalorder %s622, %s624
      %p631 = scmp.eq.s32.totalorder %s110, 1
      %p632 = por %p630, %p631
      %p633 = scmp.ne.s32.totalorder %s624, %s625
      %p634 = scmp.eq.s32.totalorder %s110, 0
      %p635 = por %p633, %p634
      %p636 = scmp.ne.s32.totalorder %s624, %s625
      %p637 = scmp.eq.s32.totalorder %s111, 1
      %p638 = por %p636, %p637
      %p640 = scmp.ne.s32.totalorder %s625, %s639
      %p641 = scmp.eq.s32.totalorder %s111, 0
      %p642 = por %p640, %p641
      %s644 = sadd.s32 %s643, 1
      %p647 = scmp.eq.s32.totalorder %s105, 1
      %p648 = scmp.ne.s32.totalorder %s643, %s645
      %p649 = scmp.eq.s32.totalorder %s105, 0
      %p650 = por %p648, %p649
      %p651 = scmp.ne.s32.totalorder %s643, %s645
      %p652 = scmp.eq.s32.totalorder %s110, 1
      %p653 = por %p651, %p652
      %p654 = scmp.ne.s32.totalorder %s645, %s646
      %p655 = scmp.eq.s32.totalorder %s110, 0
      %p656 = por %p654, %p655
      %p657 = scmp.ne.s32.totalorder %s645, %s646
      %p658 = scmp.eq.s32.totalorder %s111, 1
      %p659 = por %p657, %p658
      %p661 = scmp.ne.s32.totalorder %s646, %s660
      %p662 = scmp.eq.s32.totalorder %s111, 0
      %p663 = por %p661, %p662
      %s665 = sadd.s32 %s664, 1
      %p668 = scmp.eq.s32.totalorder %s105, 1
      %p669 = scmp.ne.s32.totalorder %s664, %s666
      %p670 = scmp.eq.s32.totalorder %s105, 0
      %p671 = por %p669, %p670
      %p672 = scmp.ne.s32.totalorder %s664, %s666
      %p673 = scmp.eq.s32.totalorder %s110, 1
      %p674 = por %p672, %p673
      %p675 = scmp.ne.s32.totalorder %s666, %s667
      %p676 = scmp.eq.s32.totalorder %s110, 0
      %p677 = por %p675, %p676
      %p678 = scmp.ne.s32.totalorder %s666, %s667
      %p679 = scmp.eq.s32.totalorder %s111, 1
      %p680 = por %p678, %p679
      %p682 = scmp.ne.s32.totalorder %s667, %s681
      %p683 = scmp.eq.s32.totalorder %s111, 0
      %p684 = por %p682, %p683
      %s686 = sadd.s32 %s685, 1
      %p689 = scmp.eq.s32.totalorder %s105, 1
      %p690 = scmp.ne.s32.totalorder %s685, %s687
      %p691 = scmp.eq.s32.totalorder %s105, 0
      %p692 = por %p690, %p691
      %p693 = scmp.ne.s32.totalorder %s685, %s687
      %p694 = scmp.eq.s32.totalorder %s110, 1
      %p695 = por %p693, %p694
      %p696 = scmp.ne.s32.totalorder %s687, %s688
      %p697 = scmp.eq.s32.totalorder %s110, 0
      %p698 = por %p696, %p697
      %p699 = scmp.ne.s32.totalorder %s687, %s688
      %p700 = scmp.eq.s32.totalorder %s111, 1
      %p701 = por %p699, %p700
      %p703 = scmp.ne.s32.totalorder %s688, %s702
      %p704 = scmp.eq.s32.totalorder %s111, 0
      %p705 = por %p703, %p704
      %s707 = sadd.s32 %s706, 1
      %p710 = scmp.eq.s32.totalorder %s105, 1
      %p711 = scmp.ne.s32.totalorder %s706, %s708
      %p712 = scmp.eq.s32.totalorder %s105, 0
      %p713 = por %p711, %p712
      %p714 = scmp.ne.s32.totalorder %s706, %s708
      %p715 = scmp.eq.s32.totalorder %s110, 1
      %p716 = por %p714, %p715
      %p717 = scmp.ne.s32.totalorder %s708, %s709
      %p718 = scmp.eq.s32.totalorder %s110, 0
      %p719 = por %p717, %p718
      %p720 = scmp.ne.s32.totalorder %s708, %s709
      %p721 = scmp.eq.s32.totalorder %s111, 1
      %p722 = por %p720, %p721
      %p724 = scmp.ne.s32.totalorder %s709, %s723
      %p725 = scmp.eq.s32.totalorder %s111, 0
      %p726 = por %p724, %p725
      %s728 = sadd.s32 %s727, 1
      %p731 = scmp.eq.s32.totalorder %s105, 1
      %p732 = scmp.ne.s32.totalorder %s727, %s729
      %p733 = scmp.eq.s32.totalorder %s105, 0
      %p734 = por %p732, %p733
      %p735 = scmp.ne.s32.totalorder %s727, %s729
      %p736 = scmp.eq.s32.totalorder %s110, 1
      %p737 = por %p735, %p736
      %p738 = scmp.ne.s32.totalorder %s729, %s730
      %p739 = scmp.eq.s32.totalorder %s110, 0
      %p740 = por %p738, %p739
      %p741 = scmp.ne.s32.totalorder %s729, %s730
      %p742 = scmp.eq.s32.totalorder %s111, 1
      %p743 = por %p741, %p742
      %p745 = scmp.ne.s32.totalorder %s730, %s744
      %p746 = scmp.eq.s32.totalorder %s111, 0
      %p747 = por %p745, %p746
      %s749 = sadd.s32 %s748, 1
      %p752 = scmp.eq.s32.totalorder %s105, 1
      %p753 = scmp.ne.s32.totalorder %s748, %s750
      %p754 = scmp.eq.s32.totalorder %s105, 0
      %p755 = por %p753, %p754
      %p756 = scmp.ne.s32.totalorder %s748, %s750
      %p757 = scmp.eq.s32.totalorder %s110, 1
      %p758 = por %p756, %p757
      %p759 = scmp.ne.s32.totalorder %s750, %s751
      %p760 = scmp.eq.s32.totalorder %s110, 0
      %p761 = por %p759, %p760
      %p762 = scmp.ne.s32.totalorder %s750, %s751
      %p763 = scmp.eq.s32.totalorder %s111, 1
      %p764 = por %p762, %p763
      %p766 = scmp.ne.s32.totalorder %s751, %s765
      %p767 = scmp.eq.s32.totalorder %s111, 0
      %p768 = por %p766, %p767
      %s770 = sadd.s32 %s769, 1
      %p773 = scmp.eq.s32.totalorder %s105, 1
      %p774 = scmp.ne.s32.totalorder %s769, %s771
      %p775 = scmp.eq.s32.totalorder %s105, 0
      %p776 = por %p774, %p775
      %p777 = scmp.ne.s32.totalorder %s769, %s771
      %p778 = scmp.eq.s32.totalorder %s110, 1
      %p779 = por %p777, %p778
      %p780 = scmp.ne.s32.totalorder %s771, %s772
      %p781 = scmp.eq.s32.totalorder %s110, 0
      %p782 = por %p780, %p781
      %p783 = scmp.ne.s32.totalorder %s771, %s772
      %p784 = scmp.eq.s32.totalorder %s111, 1
      %p785 = por %p783, %p784
      %p787 = scmp.ne.s32.totalorder %s772, %s786
      %p788 = scmp.eq.s32.totalorder %s111, 0
      %p789 = por %p787, %p788
      %s791 = sadd.s32 %s790, 1
      %p794 = scmp.eq.s32.totalorder %s105, 1
      %p795 = scmp.ne.s32.totalorder %s790, %s792
      %p796 = scmp.eq.s32.totalorder %s105, 0
      %p797 = por %p795, %p796
      %p798 = scmp.ne.s32.totalorder %s790, %s792
      %p799 = scmp.eq.s32.totalorder %s110, 1
      %p800 = por %p798, %p799
      %p801 = scmp.ne.s32.totalorder %s792, %s793
      %p802 = scmp.eq.s32.totalorder %s110, 0
      %p803 = por %p801, %p802
      %p804 = scmp.ne.s32.totalorder %s792, %s793
      %p805 = scmp.eq.s32.totalorder %s111, 1
      %p806 = por %p804, %p805
      %p808 = scmp.ne.s32.totalorder %s793, %s807
      %p809 = scmp.eq.s32.totalorder %s111, 0
      %p810 = por %p808, %p809
      %s812 = sadd.s32 %s811, 1
      %p815 = scmp.eq.s32.totalorder %s105, 1
      %p816 = scmp.ne.s32.totalorder %s811, %s813
      %p817 = scmp.eq.s32.totalorder %s105, 0
      %p818 = por %p816, %p817
      %p819 = scmp.ne.s32.totalorder %s811, %s813
      %p820 = scmp.eq.s32.totalorder %s110, 1
      %p821 = por %p819, %p820
      %p822 = scmp.ne.s32.totalorder %s813, %s814
      %p823 = scmp.eq.s32.totalorder %s110, 0
      %p824 = por %p822, %p823
      %p825 = scmp.ne.s32.totalorder %s813, %s814
      %p826 = scmp.eq.s32.totalorder %s111, 1
      %p827 = por %p825, %p826
      %p829 = scmp.ne.s32.totalorder %s814, %s828
      %p830 = scmp.eq.s32.totalorder %s111, 0
      %p831 = por %p829, %p830
      %s833 = sadd.s32 %s832, 1
      %p836 = scmp.eq.s32.totalorder %s105, 1
      %p837 = scmp.ne.s32.totalorder %s832, %s834
      %p838 = scmp.eq.s32.totalorder %s105, 0
      %p839 = por %p837, %p838
      %p840 = scmp.ne.s32.totalorder %s832, %s834
      %p841 = scmp.eq.s32.totalorder %s110, 1
      %p842 = por %p840, %p841
      %p843 = scmp.ne.s32.totalorder %s834, %s835
      %p844 = scmp.eq.s32.totalorder %s110, 0
      %p845 = por %p843, %p844
      %p846 = scmp.ne.s32.totalorder %s834, %s835
      %p847 = scmp.eq.s32.totalorder %s111, 1
      %p848 = por %p846, %p847
      %p850 = scmp.ne.s32.totalorder %s835, %s849
      %p851 = scmp.eq.s32.totalorder %s111, 0
      %p852 = por %p850, %p851
      %s854 = sadd.s32 %s853, 1
      %p857 = scmp.eq.s32.totalorder %s105, 1
      %p858 = scmp.ne.s32.totalorder %s853, %s855
      %p859 = scmp.eq.s32.totalorder %s105, 0
      %p860 = por %p858, %p859
      %p861 = scmp.ne.s32.totalorder %s853, %s855
      %p862 = scmp.eq.s32.totalorder %s110, 1
      %p863 = por %p861, %p862
      %p864 = scmp.ne.s32.totalorder %s855, %s856
      %p865 = scmp.eq.s32.totalorder %s110, 0
      %p866 = por %p864, %p865
      %p867 = scmp.ne.s32.totalorder %s855, %s856
      %p868 = scmp.eq.s32.totalorder %s111, 1
      %p869 = por %p867, %p868
      %p871 = scmp.ne.s32.totalorder %s856, %s870
      %p872 = scmp.eq.s32.totalorder %s111, 0
      %p873 = por %p871, %p872
      %s875 = sadd.s32 %s874, 1
      %p878 = scmp.eq.s32.totalorder %s105, 1
      %p879 = scmp.ne.s32.totalorder %s874, %s876
      %p880 = scmp.eq.s32.totalorder %s105, 0
      %p881 = por %p879, %p880
      %p882 = scmp.ne.s32.totalorder %s874, %s876
      %p883 = scmp.eq.s32.totalorder %s110, 1
      %p884 = por %p882, %p883
      %p885 = scmp.ne.s32.totalorder %s876, %s877
      %p886 = scmp.eq.s32.totalorder %s110, 0
      %p887 = por %p885, %p886
      %p888 = scmp.ne.s32.totalorder %s876, %s877
      %p889 = scmp.eq.s32.totalorder %s111, 1
      %p890 = por %p888, %p889
      %p892 = scmp.ne.s32.totalorder %s877, %s891
      %p893 = scmp.eq.s32.totalorder %s111, 0
      %p894 = por %p892, %p893
      %s896 = sadd.s32 %s895, 1
      %p899 = scmp.eq.s32.totalorder %s105, 1
      %p900 = scmp.ne.s32.totalorder %s895, %s897
      %p901 = scmp.eq.s32.totalorder %s105, 0
      %p902 = por %p900, %p901
      %p903 = scmp.ne.s32.totalorder %s895, %s897
      %p904 = scmp.eq.s32.totalorder %s110, 1
      %p905 = por %p903, %p904
      %p906 = scmp.ne.s32.totalorder %s897, %s898
      %p907 = scmp.eq.s32.totalorder %s110, 0
      %p908 = por %p906, %p907
      %p909 = scmp.ne.s32.totalorder %s897, %s898
      %p910 = scmp.eq.s32.totalorder %s111, 1
      %p911 = por %p909, %p910
      %p913 = scmp.ne.s32.totalorder %s898, %s912
      %p914 = scmp.eq.s32.totalorder %s111, 0
      %p915 = por %p913, %p914
      %s917 = sadd.s32 %s916, 1
      %p920 = scmp.eq.s32.totalorder %s105, 1
      %p921 = scmp.ne.s32.totalorder %s916, %s918
      %p922 = scmp.eq.s32.totalorder %s105, 0
      %p923 = por %p921, %p922
      %p924 = scmp.ne.s32.totalorder %s916, %s918
      %p925 = scmp.eq.s32.totalorder %s110, 1
      %p926 = por %p924, %p925
      %p927 = scmp.ne.s32.totalorder %s918, %s919
      %p928 = scmp.eq.s32.totalorder %s110, 0
      %p929 = por %p927, %p928
      %p930 = scmp.ne.s32.totalorder %s918, %s919
      %p931 = scmp.eq.s32.totalorder %s111, 1
      %p932 = por %p930, %p931
      %p934 = scmp.ne.s32.totalorder %s919, %s933
      %p935 = scmp.eq.s32.totalorder %s111, 0
      %p936 = por %p934, %p935
      %s938 = sadd.s32 %s937, 1
      %p941 = scmp.eq.s32.totalorder %s105, 1
      %p942 = scmp.ne.s32.totalorder %s937, %s939
      %p943 = scmp.eq.s32.totalorder %s105, 0
      %p944 = por %p942, %p943
      %p945 = scmp.ne.s32.totalorder %s937, %s939
      %p946 = scmp.eq.s32.totalorder %s110, 1
      %p947 = por %p945, %p946
      %p948 = scmp.ne.s32.totalorder %s939, %s940
      %p949 = scmp.eq.s32.totalorder %s110, 0
      %p950 = por %p948, %p949
      %p951 = scmp.ne.s32.totalorder %s939, %s940
      %p952 = scmp.eq.s32.totalorder %s111, 1
      %p953 = por %p951, %p952
      %p955 = scmp.ne.s32.totalorder %s940, %s954
      %p956 = scmp.eq.s32.totalorder %s111, 0
      %p957 = por %p955, %p956
      %s958 = ssub.s32 %s105, %s112
      %p959 = scmp.eq.s32.totalorder %s958, 0
      %s961 = sadd.s32 %s960, 1
      %s962 = scalar_select %p959, %s960, %s961
      %p965 = pneg %p959
      %p966 = scmp.eq.s32.totalorder %s105, 1
      %p967 = por %p965, %p966
      %p968 = scmp.ne.s32.totalorder %s960, %s963
      %p969 = scmp.eq.s32.totalorder %s105, 0
      %p970 = por %p968, %p969
      %p971 = scmp.ne.s32.totalorder %s960, %s963
      %p972 = scmp.eq.s32.totalorder %s110, 1
      %p973 = por %p971, %p972
      %p974 = scmp.ne.s32.totalorder %s963, %s964
      %p975 = scmp.eq.s32.totalorder %s110, 0
      %p976 = por %p974, %p975
      %p977 = scmp.ne.s32.totalorder %s963, %s964
      %p978 = scmp.eq.s32.totalorder %s111, 1
      %p979 = por %p977, %p978
      %p981 = scmp.ne.s32.totalorder %s964, %s980
      %p982 = scmp.eq.s32.totalorder %s111, 0
      %p983 = por %p981, %p982
      %p984 = scmp.le.s32.totalorder 1, %s105
      %p985 = scmp.lt.s32.totalorder %s105, 3
      %p986 = pnand %p984, %p985
      %p987 = pneg %p986
      // Predicated region
      $region9: #{tpu_custom_call.1} parent=5 // pred_check
        _
      $region10: #{tpu_custom_call.1} parent=5 // pred_check_branch
        %989 = sbr.rel (%p986) target = $region12
      $region11: #{tpu_custom_call.1} parent=5 // pred_region
        %s990 = ssub.s32 %s105, 1
        // Predicated region
        $region13: #{tpu_custom_call.1} parent=11 // pred_check
          %p991 = pneg %p152
        $region14: #{tpu_custom_call.1} parent=11 // pred_check_branch
          %993 = sbr.rel (%p991) target = $region16
        $region15: #{tpu_custom_call.1} parent=11 // pred_region
          _
        $region16: #{tpu_custom_call.1} parent=11 // pred_fallthru
          _
        // Predicated region
        $region17: #{tpu_custom_call.1} parent=11 // pred_check
          %p994 = pneg %p173
        $region18: #{tpu_custom_call.1} parent=11 // pred_check_branch
          %996 = sbr.rel (%p994) target = $region20
        $region19: #{tpu_custom_call.1} parent=11 // pred_region
          %998 = vsyncadd [#allocation6], 0
          %s1000 = sshll.u32 %s5, 4
          %s1001 = int_to_ptr.hbm [resolvable:$true] %s1000
          %s1002 = sshll.u32 [#allocation5], 4
          %s1003 = int_to_ptr.vmem [resolvable:$true] %s1002
          %1005 = dma.hbm_to_vmem [thread:$0]  %s1001, 16, %s1003, [#allocation6]
        $region20: #{tpu_custom_call.1} parent=11 // pred_fallthru
          _
        // Predicated region
        $region21: #{tpu_custom_call.1} parent=11 // pred_check
          %p1006 = pneg %p194
        $region22: #{tpu_custom_call.1} parent=11 // pred_check_branch
          %1008 = sbr.rel (%p1006) target = $region24
        $region23: #{tpu_custom_call.1} parent=11 // pred_region
          %1010 = vsyncadd [#allocation6], 0
          %s1011 = sshll.u32 %s7, 4
          %s1012 = int_to_ptr.hbm [resolvable:$true] %s1011
          %s1013 = sshll.u32 [#allocation7], 4
          %s1014 = int_to_ptr.vmem [resolvable:$true] %s1013
          %1019 = dma.hbm_to_vmem [thread:$0]  %s1012, 2048, %s1014, [#allocation6], 128, 128, 8
        $region24: #{tpu_custom_call.1} parent=11 // pred_fallthru
          _
        // Predicated region
        $region25: #{tpu_custom_call.1} parent=11 // pred_check
          %p1020 = pneg %p215
        $region26: #{tpu_custom_call.1} parent=11 // pred_check_branch
          %1022 = sbr.rel (%p1020) target = $region28
        $region27: #{tpu_custom_call.1} parent=11 // pred_region
          %1024 = vsyncadd [#allocation9], 0
          %s1026 = sshll.u32 %s9, 4
          %s1027 = int_to_ptr.hbm [resolvable:$true] %s1026
          %s1028 = sshll.u32 [#allocation8], 4
          %s1029 = int_to_ptr.vmem [resolvable:$true] %s1028
          %1031 = dma.hbm_to_vmem [thread:$0]  %s1027, 16, %s1029, [#allocation9]
        $region28: #{tpu_custom_call.1} parent=11 // pred_fallthru
          _
        // Predicated region
        $region29: #{tpu_custom_call.1} parent=11 // pred_check
          %p1032 = pneg %p236
        $region30: #{tpu_custom_call.1} parent=11 // pred_check_branch
          %1034 = sbr.rel (%p1032) target = $region32
        $region31: #{tpu_custom_call.1} parent=11 // pred_region
          %1036 = vsyncadd [#allocation9], 0
          %s1037 = sshll.u32 %s11, 4
          %s1038 = int_to_ptr.hbm [resolvable:$true] %s1037
          %s1039 = sshll.u32 [#allocation10], 4
          %s1040 = int_to_ptr.vmem [resolvable:$true] %s1039
          %1045 = dma.hbm_to_vmem [thread:$0]  %s1038, 2048, %s1040, [#allocation9], 128, 128, 8
        $region32: #{tpu_custom_call.1} parent=11 // pred_fallthru
          _
        // Predicated region
        $region33: #{tpu_custom_call.1} parent=11 // pred_check
          %p1046 = pneg %p257
        $region34: #{tpu_custom_call.1} parent=11 // pred_check_branch
          %1048 = sbr.rel (%p1046) target = $region36
        $region35: #{tpu_custom_call.1} parent=11 // pred_region
          %1050 = vsyncadd [#allocation12], 0
          %s1052 = sshll.u32 %s13, 4
          %s1053 = int_to_ptr.hbm [resolvable:$true] %s1052
          %s1054 = sshll.u32 [#allocation11], 4
          %s1055 = int_to_ptr.vmem [resolvable:$true] %s1054
          %1057 = dma.hbm_to_vmem [thread:$0]  %s1053, 16, %s1055, [#allocation12]
        $region36: #{tpu_custom_call.1} parent=11 // pred_fallthru
          _
        // Predicated region
        $region37: #{tpu_custom_call.1} parent=11 // pred_check
          %p1058 = pneg %p278
        $region38: #{tpu_custom_call.1} parent=11 // pred_check_branch
          %1060 = sbr.rel (%p1058) target = $region40
        $region39: #{tpu_custom_call.1} parent=11 // pred_region
          %1062 = vsyncadd [#allocation12], 0
          %s1064 = sshll.u32 %s15, 4
          %s1065 = int_to_ptr.hbm [resolvable:$true] %s1064
          %s1066 = sshll.u32 [#allocation13], 4
          %s1067 = int_to_ptr.vmem [resolvable:$true] %s1066
          %1069 = dma.hbm_to_vmem [thread:$0]  %s1065, 16, %s1067, [#allocation12]
        $region40: #{tpu_custom_call.1} parent=11 // pred_fallthru
          _
        // Predicated region
        $region41: #{tpu_custom_call.1} parent=11 // pred_check
          %p1070 = pneg %p299
        $region42: #{tpu_custom_call.1} parent=11 // pred_check_branch
          %1072 = sbr.rel (%p1070) target = $region44
        $region43: #{tpu_custom_call.1} parent=11 // pred_region
          %1074 = vsyncadd [#allocation15], 0
          %s1076 = sshll.u32 %s17, 4
          %s1077 = int_to_ptr.hbm [resolvable:$true] %s1076
          %s1078 = sshll.u32 [#allocation14], 4
          %s1079 = int_to_ptr.vmem [resolvable:$true] %s1078
          %1081 = dma.hbm_to_vmem [thread:$0]  %s1077, 16, %s1079, [#allocation15]
        $region44: #{tpu_custom_call.1} parent=11 // pred_fallthru
          _
        // Predicated region
        $region45: #{tpu_custom_call.1} parent=11 // pred_check
          %p1082 = pneg %p320
        $region46: #{tpu_custom_call.1} parent=11 // pred_check_branch
          %1084 = sbr.rel (%p1082) target = $region48
        $region47: #{tpu_custom_call.1} parent=11 // pred_region
          _
        $region48: #{tpu_custom_call.1} parent=11 // pred_fallthru
          _
        // Predicated region
        $region49: #{tpu_custom_call.1} parent=11 // pred_check
          %p1085 = pneg %p341
        $region50: #{tpu_custom_call.1} parent=11 // pred_check_branch
          %1087 = sbr.rel (%p1085) target = $region52
        $region51: #{tpu_custom_call.1} parent=11 // pred_region
          %1089 = vsyncadd [#allocation15], 0
          %s1090 = sshll.u32 %s21, 4
          %s1091 = int_to_ptr.hbm [resolvable:$true] %s1090
          %s1092 = sshll.u32 [#allocation16], 4
          %s1093 = int_to_ptr.vmem [resolvable:$true] %s1092
          %1098 = dma.hbm_to_vmem [thread:$0]  %s1091, 2048, %s1093, [#allocation15], 128, 128, 8
        $region52: #{tpu_custom_call.1} parent=11 // pred_fallthru
          _
        // Predicated region
        $region53: #{tpu_custom_call.1} parent=11 // pred_check
          %p1099 = pneg %p362
        $region54: #{tpu_custom_call.1} parent=11 // pred_check_branch
          %1101 = sbr.rel (%p1099) target = $region56
        $region55: #{tpu_custom_call.1} parent=11 // pred_region
          %1103 = vsyncadd [#allocation18], 0
          %s1105 = sshll.u32 %s23, 4
          %s1106 = int_to_ptr.hbm [resolvable:$true] %s1105
          %s1107 = sshll.u32 [#allocation17], 4
          %s1108 = int_to_ptr.vmem [resolvable:$true] %s1107
          %1110 = dma.hbm_to_vmem [thread:$0]  %s1106, 16, %s1108, [#allocation18]
        $region56: #{tpu_custom_call.1} parent=11 // pred_fallthru
          _
        // Predicated region
        $region57: #{tpu_custom_call.1} parent=11 // pred_check
          %p1111 = pneg %p383
        $region58: #{tpu_custom_call.1} parent=11 // pred_check_branch
          %1113 = sbr.rel (%p1111) target = $region60
        $region59: #{tpu_custom_call.1} parent=11 // pred_region
          %1115 = vsyncadd [#allocation18], 0
          %s1116 = sshll.u32 %s25, 4
          %s1117 = int_to_ptr.hbm [resolvable:$true] %s1116
          %s1118 = sshll.u32 [#allocation19], 4
          %s1119 = int_to_ptr.vmem [resolvable:$true] %s1118
          %1124 = dma.hbm_to_vmem [thread:$0]  %s1117, 2048, %s1119, [#allocation18], 128, 128, 8
        $region60: #{tpu_custom_call.1} parent=11 // pred_fallthru
          _
        // Predicated region
        $region61: #{tpu_custom_call.1} parent=11 // pred_check
          %p1125 = pneg %p404
        $region62: #{tpu_custom_call.1} parent=11 // pred_check_branch
          %1127 = sbr.rel (%p1125) target = $region64
        $region63: #{tpu_custom_call.1} parent=11 // pred_region
          %1129 = vsyncadd [#allocation21], 0
          %s1131 = sshll.u32 %s27, 4
          %s1132 = int_to_ptr.hbm [resolvable:$true] %s1131
          %s1133 = sshll.u32 [#allocation20], 4
          %s1134 = int_to_ptr.vmem [resolvable:$true] %s1133
          %1136 = dma.hbm_to_vmem [thread:$0]  %s1132, 16, %s1134, [#allocation21]
        $region64: #{tpu_custom_call.1} parent=11 // pred_fallthru
          _
        // Predicated region
        $region65: #{tpu_custom_call.1} parent=11 // pred_check
          %p1137 = pneg %p425
        $region66: #{tpu_custom_call.1} parent=11 // pred_check_branch
          %1139 = sbr.rel (%p1137) target = $region68
        $region67: #{tpu_custom_call.1} parent=11 // pred_region
          %1141 = vsyncadd [#allocation21], 0
          %s1142 = sshll.u32 %s29, 4
          %s1143 = int_to_ptr.hbm [resolvable:$true] %s1142
          %s1144 = sshll.u32 [#allocation22], 4
          %s1145 = int_to_ptr.vmem [resolvable:$true] %s1144
          %1150 = dma.hbm_to_vmem [thread:$0]  %s1143, 2048, %s1145, [#allocation21], 128, 128, 8
        $region68: #{tpu_custom_call.1} parent=11 // pred_fallthru
          _
        // Predicated region
        $region69: #{tpu_custom_call.1} parent=11 // pred_check
          %p1151 = pneg %p446
        $region70: #{tpu_custom_call.1} parent=11 // pred_check_branch
          %1153 = sbr.rel (%p1151) target = $region72
        $region71: #{tpu_custom_call.1} parent=11 // pred_region
          %1155 = vsyncadd [#allocation24], 0
          %s1157 = sshll.u32 %s31, 4
          %s1158 = int_to_ptr.hbm [resolvable:$true] %s1157
          %s1159 = sshll.u32 [#allocation23], 4
          %s1160 = int_to_ptr.vmem [resolvable:$true] %s1159
          %1162 = dma.hbm_to_vmem [thread:$0]  %s1158, 16, %s1160, [#allocation24]
        $region72: #{tpu_custom_call.1} parent=11 // pred_fallthru
          _
        // Predicated region
        $region73: #{tpu_custom_call.1} parent=11 // pred_check
          %p1163 = pneg %p467
        $region74: #{tpu_custom_call.1} parent=11 // pred_check_branch
          %1165 = sbr.rel (%p1163) target = $region76
        $region75: #{tpu_custom_call.1} parent=11 // pred_region
          %1167 = vsyncadd [#allocation24], 0
          %s1168 = sshll.u32 %s33, 4
          %s1169 = int_to_ptr.hbm [resolvable:$true] %s1168
          %s1170 = sshll.u32 [#allocation25], 4
          %s1171 = int_to_ptr.vmem [resolvable:$true] %s1170
          %1176 = dma.hbm_to_vmem [thread:$0]  %s1169, 2048, %s1171, [#allocation24], 128, 128, 8
        $region76: #{tpu_custom_call.1} parent=11 // pred_fallthru
          _
        // Predicated region
        $region77: #{tpu_custom_call.1} parent=11 // pred_check
          %p1177 = pneg %p488
        $region78: #{tpu_custom_call.1} parent=11 // pred_check_branch
          %1179 = sbr.rel (%p1177) target = $region80
        $region79: #{tpu_custom_call.1} parent=11 // pred_region
          %1181 = vsyncadd [#allocation27], 0
          %s1183 = sshll.u32 %s35, 4
          %s1184 = int_to_ptr.hbm [resolvable:$true] %s1183
          %s1185 = sshll.u32 [#allocation26], 4
          %s1186 = int_to_ptr.vmem [resolvable:$true] %s1185
          %1188 = dma.hbm_to_vmem [thread:$0]  %s1184, 16, %s1186, [#allocation27]
        $region80: #{tpu_custom_call.1} parent=11 // pred_fallthru
          _
        // Predicated region
        $region81: #{tpu_custom_call.1} parent=11 // pred_check
          %p1189 = pneg %p509
        $region82: #{tpu_custom_call.1} parent=11 // pred_check_branch
          %1191 = sbr.rel (%p1189) target = $region84
        $region83: #{tpu_custom_call.1} parent=11 // pred_region
          %1193 = vsyncadd [#allocation27], 0
          %s1195 = sshll.u32 %s37, 4
          %s1196 = int_to_ptr.hbm [resolvable:$true] %s1195
          %s1197 = sshll.u32 [#allocation28], 4
          %s1198 = int_to_ptr.vmem [resolvable:$true] %s1197
          %1200 = dma.hbm_to_vmem [thread:$0]  %s1196, 16, %s1198, [#allocation27]
        $region84: #{tpu_custom_call.1} parent=11 // pred_fallthru
          _
        // Predicated region
        $region85: #{tpu_custom_call.1} parent=11 // pred_check
          %p1201 = pneg %p530
        $region86: #{tpu_custom_call.1} parent=11 // pred_check_branch
          %1203 = sbr.rel (%p1201) target = $region88
        $region87: #{tpu_custom_call.1} parent=11 // pred_region
          %1205 = vsyncadd [#allocation30], 0
          %s1207 = sshll.u32 %s39, 4
          %s1208 = int_to_ptr.hbm [resolvable:$true] %s1207
          %s1209 = sshll.u32 [#allocation29], 4
          %s1210 = int_to_ptr.vmem [resolvable:$true] %s1209
          %1212 = dma.hbm_to_vmem [thread:$0]  %s1208, 16, %s1210, [#allocation30]
        $region88: #{tpu_custom_call.1} parent=11 // pred_fallthru
          _
        // Predicated region
        $region89: #{tpu_custom_call.1} parent=11 // pred_check
          %p1213 = pneg %p551
        $region90: #{tpu_custom_call.1} parent=11 // pred_check_branch
          %1215 = sbr.rel (%p1213) target = $region92
        $region91: #{tpu_custom_call.1} parent=11 // pred_region
          _
        $region92: #{tpu_custom_call.1} parent=11 // pred_fallthru
          _
        // Predicated region
        $region93: #{tpu_custom_call.1} parent=11 // pred_check
          %p1216 = pneg %p572
        $region94: #{tpu_custom_call.1} parent=11 // pred_check_branch
          %1218 = sbr.rel (%p1216) target = $region96
        $region95: #{tpu_custom_call.1} parent=11 // pred_region
          %1220 = vsyncadd [#allocation30], 0
          %s1222 = sshll.u32 %s43, 4
          %s1223 = int_to_ptr.hbm [resolvable:$true] %s1222
          %s1224 = sshll.u32 [#allocation31], 4
          %s1225 = int_to_ptr.vmem [resolvable:$true] %s1224
          %1227 = dma.hbm_to_vmem [thread:$0]  %s1223, 16, %s1225, [#allocation30]
        $region96: #{tpu_custom_call.1} parent=11 // pred_fallthru
          _
        // Predicated region
        $region97: #{tpu_custom_call.1} parent=11 // pred_check
          %p1228 = pneg %p593
        $region98: #{tpu_custom_call.1} parent=11 // pred_check_branch
          %1230 = sbr.rel (%p1228) target = $region100
        $region99: #{tpu_custom_call.1} parent=11 // pred_region
          _
        $region100: #{tpu_custom_call.1} parent=11 // pred_fallthru
          _
        // Predicated region
        $region101: #{tpu_custom_call.1} parent=11 // pred_check
          %p1231 = pneg %p614
        $region102: #{tpu_custom_call.1} parent=11 // pred_check_branch
          %1233 = sbr.rel (%p1231) target = $region104
        $region103: #{tpu_custom_call.1} parent=11 // pred_region
          _
        $region104: #{tpu_custom_call.1} parent=11 // pred_fallthru
          _
        // Predicated region
        $region105: #{tpu_custom_call.1} parent=11 // pred_check
          %p1234 = pneg %p635
        $region106: #{tpu_custom_call.1} parent=11 // pred_check_branch
          %1236 = sbr.rel (%p1234) target = $region108
        $region107: #{tpu_custom_call.1} parent=11 // pred_region
          %1238 = vsyncadd [#allocation33], 0
          %s1240 = sshll.u32 %s49, 4
          %s1241 = int_to_ptr.hbm [resolvable:$true] %s1240
          %s1242 = sshll.u32 [#allocation32], 4
          %s1243 = int_to_ptr.vmem [resolvable:$true] %s1242
          %1245 = dma.hbm_to_vmem [thread:$0]  %s1241, 128, %s1243, [#allocation33]
        $region108: #{tpu_custom_call.1} parent=11 // pred_fallthru
          _
        // Predicated region
        $region109: #{tpu_custom_call.1} parent=11 // pred_check
          %p1246 = pneg %p656
        $region110: #{tpu_custom_call.1} parent=11 // pred_check_branch
          %1248 = sbr.rel (%p1246) target = $region112
        $region111: #{tpu_custom_call.1} parent=11 // pred_region
          _
        $region112: #{tpu_custom_call.1} parent=11 // pred_fallthru
          _
        // Predicated region
        $region113: #{tpu_custom_call.1} parent=11 // pred_check
          %p1249 = pneg %p677
        $region114: #{tpu_custom_call.1} parent=11 // pred_check_branch
          %1251 = sbr.rel (%p1249) target = $region116
        $region115: #{tpu_custom_call.1} parent=11 // pred_region
          %1253 = vsyncadd [#allocation33], 0
          %s1255 = sshll.u32 %s53, 4
          %s1256 = int_to_ptr.hbm [resolvable:$true] %s1255
          %s1257 = sshll.u32 [#allocation34], 4
          %s1258 = int_to_ptr.vmem [resolvable:$true] %s1257
          %1260 = dma.hbm_to_vmem [thread:$0]  %s1256, 128, %s1258, [#allocation33]
        $region116: #{tpu_custom_call.1} parent=11 // pred_fallthru
          _
        // Predicated region
        $region117: #{tpu_custom_call.1} parent=11 // pred_check
          %p1261 = pneg %p698
        $region118: #{tpu_custom_call.1} parent=11 // pred_check_branch
          %1263 = sbr.rel (%p1261) target = $region120
        $region119: #{tpu_custom_call.1} parent=11 // pred_region
          _
        $region120: #{tpu_custom_call.1} parent=11 // pred_fallthru
          _
        // Predicated region
        $region121: #{tpu_custom_call.1} parent=11 // pred_check
          %p1264 = pneg %p719
        $region122: #{tpu_custom_call.1} parent=11 // pred_check_branch
          %1266 = sbr.rel (%p1264) target = $region124
        $region123: #{tpu_custom_call.1} parent=11 // pred_region
          _
        $region124: #{tpu_custom_call.1} parent=11 // pred_fallthru
          _
        // Predicated region
        $region125: #{tpu_custom_call.1} parent=11 // pred_check
          %p1267 = pneg %p740
        $region126: #{tpu_custom_call.1} parent=11 // pred_check_branch
          %1269 = sbr.rel (%p1267) target = $region128
        $region127: #{tpu_custom_call.1} parent=11 // pred_region
          _
        $region128: #{tpu_custom_call.1} parent=11 // pred_fallthru
          _
        // Predicated region
        $region129: #{tpu_custom_call.1} parent=11 // pred_check
          %p1270 = pneg %p761
        $region130: #{tpu_custom_call.1} parent=11 // pred_check_branch
          %1272 = sbr.rel (%p1270) target = $region132
        $region131: #{tpu_custom_call.1} parent=11 // pred_region
          %1274 = vsyncadd [#allocation36], 0
          %s1275 = sshll.u32 %s61, 4
          %s1276 = int_to_ptr.hbm [resolvable:$true] %s1275
          %s1277 = sshll.u32 [#allocation35], 4
          %s1278 = int_to_ptr.vmem [resolvable:$true] %s1277
          %1283 = dma.hbm_to_vmem [thread:$0]  %s1276, 2048, %s1278, [#allocation36], 128, 128, 8
        $region132: #{tpu_custom_call.1} parent=11 // pred_fallthru
          _
        // Predicated region
        $region133: #{tpu_custom_call.1} parent=11 // pred_check
          %p1284 = pneg %p782
        $region134: #{tpu_custom_call.1} parent=11 // pred_check_branch
          %1286 = sbr.rel (%p1284) target = $region136
        $region135: #{tpu_custom_call.1} parent=11 // pred_region
          _
        $region136: #{tpu_custom_call.1} parent=11 // pred_fallthru
          _
        // Predicated region
        $region137: #{tpu_custom_call.1} parent=11 // pred_check
          %p1287 = pneg %p803
        $region138: #{tpu_custom_call.1} parent=11 // pred_check_branch
          %1289 = sbr.rel (%p1287) target = $region140
        $region139: #{tpu_custom_call.1} parent=11 // pred_region
          %1291 = vsyncadd [#allocation36], 0
          %s1292 = sshll.u32 %s65, 4
          %s1293 = int_to_ptr.hbm [resolvable:$true] %s1292
          %s1294 = sshll.u32 [#allocation37], 4
          %s1295 = int_to_ptr.vmem [resolvable:$true] %s1294
          %1300 = dma.hbm_to_vmem [thread:$0]  %s1293, 2048, %s1295, [#allocation36], 128, 128, 8
        $region140: #{tpu_custom_call.1} parent=11 // pred_fallthru
          _
        // Predicated region
        $region141: #{tpu_custom_call.1} parent=11 // pred_check
          %p1301 = pneg %p824
        $region142: #{tpu_custom_call.1} parent=11 // pred_check_branch
          %1303 = sbr.rel (%p1301) target = $region144
        $region143: #{tpu_custom_call.1} parent=11 // pred_region
          _
        $region144: #{tpu_custom_call.1} parent=11 // pred_fallthru
          _
        // Predicated region
        $region145: #{tpu_custom_call.1} parent=11 // pred_check
          %p1304 = pneg %p845
        $region146: #{tpu_custom_call.1} parent=11 // pred_check_branch
          %1306 = sbr.rel (%p1304) target = $region148
        $region147: #{tpu_custom_call.1} parent=11 // pred_region
          _
        $region148: #{tpu_custom_call.1} parent=11 // pred_fallthru
          _
        // Predicated region
        $region149: #{tpu_custom_call.1} parent=11 // pred_check
          %p1307 = pneg %p866
        $region150: #{tpu_custom_call.1} parent=11 // pred_check_branch
          %1309 = sbr.rel (%p1307) target = $region152
        $region151: #{tpu_custom_call.1} parent=11 // pred_region
          _
        $region152: #{tpu_custom_call.1} parent=11 // pred_fallthru
          _
        // Predicated region
        $region153: #{tpu_custom_call.1} parent=11 // pred_check
          %p1310 = pneg %p887
        $region154: #{tpu_custom_call.1} parent=11 // pred_check_branch
          %1312 = sbr.rel (%p1310) target = $region156
        $region155: #{tpu_custom_call.1} parent=11 // pred_region
          %1314 = vsyncadd [#allocation39], 0
          %s1315 = sshll.u32 %s73, 4
          %s1316 = int_to_ptr.hbm [resolvable:$true] %s1315
          %s1317 = sshll.u32 [#allocation38], 4
          %s1318 = int_to_ptr.vmem [resolvable:$true] %s1317
          %1323 = dma.hbm_to_vmem [thread:$0]  %s1316, 2048, %s1318, [#allocation39], 128, 128, 8
        $region156: #{tpu_custom_call.1} parent=11 // pred_fallthru
          _
        // Predicated region
        $region157: #{tpu_custom_call.1} parent=11 // pred_check
          %p1324 = pneg %p908
        $region158: #{tpu_custom_call.1} parent=11 // pred_check_branch
          %1326 = sbr.rel (%p1324) target = $region160
        $region159: #{tpu_custom_call.1} parent=11 // pred_region
          _
        $region160: #{tpu_custom_call.1} parent=11 // pred_fallthru
          _
        // Predicated region
        $region161: #{tpu_custom_call.1} parent=11 // pred_check
          %p1327 = pneg %p929
        $region162: #{tpu_custom_call.1} parent=11 // pred_check_branch
          %1329 = sbr.rel (%p1327) target = $region164
        $region163: #{tpu_custom_call.1} parent=11 // pred_region
          _
        $region164: #{tpu_custom_call.1} parent=11 // pred_fallthru
          _
        // Predicated region
        $region165: #{tpu_custom_call.1} parent=11 // pred_check
          %p1330 = pneg %p950
        $region166: #{tpu_custom_call.1} parent=11 // pred_check_branch
          %1332 = sbr.rel (%p1330) target = $region168
        $region167: #{tpu_custom_call.1} parent=11 // pred_region
          _
        $region168: #{tpu_custom_call.1} parent=11 // pred_fallthru
          _
      $region12: #{tpu_custom_call.1} parent=5 // pred_fallthru
        _
      %p1333 = scmp.lt.s32.totalorder %s105, 2
      // Predicated region
      $region169: #{tpu_custom_call.1} parent=5 // pred_check
        %p1334 = pneg %p1333
      $region170: #{tpu_custom_call.1} parent=5 // pred_check_branch
        %1336 = sbr.rel (%p1334) target = $region172
      $region171: #{tpu_custom_call.1} parent=5 // pred_region
        // Predicated region
        $region173: #{tpu_custom_call.1} parent=171 // pred_check
          %p1337 = pneg %p125
        $region174: #{tpu_custom_call.1} parent=171 // pred_check_branch
          %1339 = sbr.rel (%p1337) target = $region176
        $region175: #{tpu_custom_call.1} parent=171 // pred_region
          %s1340 = sand.u32 %s115, 1
          %s1341 = scalar_lea.sflag [#allocation3], %s1340
          %s1342 = sand.u32 %s115, 1
          %s1343 = smul.addr %s1342, 8
          %s1344 = scalar_lea.vmem [#allocation2], %s1343
          %1346 = vsyncadd %s1341, 0
          %s1347 = smul.addr %s105, 8
          %s1348 = scalar_lea.hbm %s1, %s1347
          %s1350 = sshll.u32 %s1348, 4
          %s1351 = int_to_ptr.hbm [resolvable:$true] %s1350
          %s1352 = sshll.u32 %s1344, 4
          %s1353 = int_to_ptr.vmem [resolvable:$true] %s1352
          %1355 = dma.hbm_to_vmem [thread:$0]  %s1351, 128, %s1353, %s1341
        $region176: #{tpu_custom_call.1} parent=171 // pred_fallthru
          _
      $region172: #{tpu_custom_call.1} parent=5 // pred_fallthru
        _
      %p1356 = scmp.le.s32.totalorder 1, %s105
      %p1357 = scmp.lt.s32.totalorder %s105, 3
      %p1358 = pnand %p1356, %p1357
      %p1359 = pneg %p1358
      // Predicated region
      $region177: #{tpu_custom_call.1} parent=5 // pred_check
        _
      $region178: #{tpu_custom_call.1} parent=5 // pred_check_branch
        %1361 = sbr.rel (%p1358) target = $region180
      $region179: #{tpu_custom_call.1} parent=5 // pred_region
        %s1362 = ssub.s32 %s105, 1
        %s1363 = sand.u32 %s118, 1
        %s1364 = scalar_lea.sflag [#allocation3], %s1363
        %s1365 = sand.u32 %s118, 1
        %s1366 = smul.addr %s1365, 8
        %s1367 = scalar_lea.vmem [#allocation2], %s1366
        // Predicated region
        $region181: #{tpu_custom_call.1} parent=179 // pred_check
          %p1368 = pneg %p131
        $region182: #{tpu_custom_call.1} parent=179 // pred_check_branch
          %1370 = sbr.rel (%p1368) target = $region184
        $region183: #{tpu_custom_call.1} parent=179 // pred_region
          %1372 = dma.done %s1364, 128
        $region184: #{tpu_custom_call.1} parent=179 // pred_fallthru
          _
        // Predicated region
        $region185: #{tpu_custom_call.1} parent=179 // pred_check
          %p1373 = pneg %p173
        $region186: #{tpu_custom_call.1} parent=179 // pred_check_branch
          %1375 = sbr.rel (%p1373) target = $region188
        $region187: #{tpu_custom_call.1} parent=179 // pred_region
          %1377 = dma.done [#allocation6], 16
        $region188: #{tpu_custom_call.1} parent=179 // pred_fallthru
          _
        // Predicated region
        $region189: #{tpu_custom_call.1} parent=179 // pred_check
          %p1378 = pneg %p194
        $region190: #{tpu_custom_call.1} parent=179 // pred_check_branch
          %1380 = sbr.rel (%p1378) target = $region192
        $region191: #{tpu_custom_call.1} parent=179 // pred_region
          %1382 = dma.done [#allocation6], 2048
        $region192: #{tpu_custom_call.1} parent=179 // pred_fallthru
          _
        // Predicated region
        $region193: #{tpu_custom_call.1} parent=179 // pred_check
          %p1383 = pneg %p215
        $region194: #{tpu_custom_call.1} parent=179 // pred_check_branch
          %1385 = sbr.rel (%p1383) target = $region196
        $region195: #{tpu_custom_call.1} parent=179 // pred_region
          %1387 = dma.done [#allocation9], 16
        $region196: #{tpu_custom_call.1} parent=179 // pred_fallthru
          _
        // Predicated region
        $region197: #{tpu_custom_call.1} parent=179 // pred_check
          %p1388 = pneg %p236
        $region198: #{tpu_custom_call.1} parent=179 // pred_check_branch
          %1390 = sbr.rel (%p1388) target = $region200
        $region199: #{tpu_custom_call.1} parent=179 // pred_region
          %1392 = dma.done [#allocation9], 2048
        $region200: #{tpu_custom_call.1} parent=179 // pred_fallthru
          _
        // Predicated region
        $region201: #{tpu_custom_call.1} parent=179 // pred_check
          %p1393 = pneg %p257
        $region202: #{tpu_custom_call.1} parent=179 // pred_check_branch
          %1395 = sbr.rel (%p1393) target = $region204
        $region203: #{tpu_custom_call.1} parent=179 // pred_region
          %1397 = dma.done [#allocation12], 16
        $region204: #{tpu_custom_call.1} parent=179 // pred_fallthru
          _
        // Predicated region
        $region205: #{tpu_custom_call.1} parent=179 // pred_check
          %p1398 = pneg %p278
        $region206: #{tpu_custom_call.1} parent=179 // pred_check_branch
          %1400 = sbr.rel (%p1398) target = $region208
        $region207: #{tpu_custom_call.1} parent=179 // pred_region
          %1402 = dma.done [#allocation12], 16
        $region208: #{tpu_custom_call.1} parent=179 // pred_fallthru
          _
        // Predicated region
        $region209: #{tpu_custom_call.1} parent=179 // pred_check
          %p1403 = pneg %p299
        $region210: #{tpu_custom_call.1} parent=179 // pred_check_branch
          %1405 = sbr.rel (%p1403) target = $region212
        $region211: #{tpu_custom_call.1} parent=179 // pred_region
          %1407 = dma.done [#allocation15], 16
        $region212: #{tpu_custom_call.1} parent=179 // pred_fallthru
          _
        // Predicated region
        $region213: #{tpu_custom_call.1} parent=179 // pred_check
          %p1408 = pneg %p341
        $region214: #{tpu_custom_call.1} parent=179 // pred_check_branch
          %1410 = sbr.rel (%p1408) target = $region216
        $region215: #{tpu_custom_call.1} parent=179 // pred_region
          %1412 = dma.done [#allocation15], 2048
        $region216: #{tpu_custom_call.1} parent=179 // pred_fallthru
          _
        // Predicated region
        $region217: #{tpu_custom_call.1} parent=179 // pred_check
          %p1413 = pneg %p362
        $region218: #{tpu_custom_call.1} parent=179 // pred_check_branch
          %1415 = sbr.rel (%p1413) target = $region220
        $region219: #{tpu_custom_call.1} parent=179 // pred_region
          %1417 = dma.done [#allocation18], 16
        $region220: #{tpu_custom_call.1} parent=179 // pred_fallthru
          _
        // Predicated region
        $region221: #{tpu_custom_call.1} parent=179 // pred_check
          %p1418 = pneg %p383
        $region222: #{tpu_custom_call.1} parent=179 // pred_check_branch
          %1420 = sbr.rel (%p1418) target = $region224
        $region223: #{tpu_custom_call.1} parent=179 // pred_region
          %1422 = dma.done [#allocation18], 2048
        $region224: #{tpu_custom_call.1} parent=179 // pred_fallthru
          _
        // Predicated region
        $region225: #{tpu_custom_call.1} parent=179 // pred_check
          %p1423 = pneg %p404
        $region226: #{tpu_custom_call.1} parent=179 // pred_check_branch
          %1425 = sbr.rel (%p1423) target = $region228
        $region227: #{tpu_custom_call.1} parent=179 // pred_region
          %1427 = dma.done [#allocation21], 16
        $region228: #{tpu_custom_call.1} parent=179 // pred_fallthru
          _
        // Predicated region
        $region229: #{tpu_custom_call.1} parent=179 // pred_check
          %p1428 = pneg %p425
        $region230: #{tpu_custom_call.1} parent=179 // pred_check_branch
          %1430 = sbr.rel (%p1428) target = $region232
        $region231: #{tpu_custom_call.1} parent=179 // pred_region
          %1432 = dma.done [#allocation21], 2048
        $region232: #{tpu_custom_call.1} parent=179 // pred_fallthru
          _
        // Predicated region
        $region233: #{tpu_custom_call.1} parent=179 // pred_check
          %p1433 = pneg %p446
        $region234: #{tpu_custom_call.1} parent=179 // pred_check_branch
          %1435 = sbr.rel (%p1433) target = $region236
        $region235: #{tpu_custom_call.1} parent=179 // pred_region
          %1437 = dma.done [#allocation24], 16
        $region236: #{tpu_custom_call.1} parent=179 // pred_fallthru
          _
        // Predicated region
        $region237: #{tpu_custom_call.1} parent=179 // pred_check
          %p1438 = pneg %p467
        $region238: #{tpu_custom_call.1} parent=179 // pred_check_branch
          %1440 = sbr.rel (%p1438) target = $region240
        $region239: #{tpu_custom_call.1} parent=179 // pred_region
          %1442 = dma.done [#allocation24], 2048
        $region240: #{tpu_custom_call.1} parent=179 // pred_fallthru
          _
        // Predicated region
        $region241: #{tpu_custom_call.1} parent=179 // pred_check
          %p1443 = pneg %p488
        $region242: #{tpu_custom_call.1} parent=179 // pred_check_branch
          %1445 = sbr.rel (%p1443) target = $region244
        $region243: #{tpu_custom_call.1} parent=179 // pred_region
          %1447 = dma.done [#allocation27], 16
        $region244: #{tpu_custom_call.1} parent=179 // pred_fallthru
          _
        // Predicated region
        $region245: #{tpu_custom_call.1} parent=179 // pred_check
          %p1448 = pneg %p509
        $region246: #{tpu_custom_call.1} parent=179 // pred_check_branch
          %1450 = sbr.rel (%p1448) target = $region248
        $region247: #{tpu_custom_call.1} parent=179 // pred_region
          %1452 = dma.done [#allocation27], 16
        $region248: #{tpu_custom_call.1} parent=179 // pred_fallthru
          _
        // Predicated region
        $region249: #{tpu_custom_call.1} parent=179 // pred_check
          %p1453 = pneg %p530
        $region250: #{tpu_custom_call.1} parent=179 // pred_check_branch
          %1455 = sbr.rel (%p1453) target = $region252
        $region251: #{tpu_custom_call.1} parent=179 // pred_region
          %1457 = dma.done [#allocation30], 16
        $region252: #{tpu_custom_call.1} parent=179 // pred_fallthru
          _
        // Predicated region
        $region253: #{tpu_custom_call.1} parent=179 // pred_check
          %p1458 = pneg %p572
        $region254: #{tpu_custom_call.1} parent=179 // pred_check_branch
          %1460 = sbr.rel (%p1458) target = $region256
        $region255: #{tpu_custom_call.1} parent=179 // pred_region
          %1462 = dma.done [#allocation30], 16
        $region256: #{tpu_custom_call.1} parent=179 // pred_fallthru
          _
        // Predicated region
        $region257: #{tpu_custom_call.1} parent=179 // pred_check
          %p1463 = pneg %p635
        $region258: #{tpu_custom_call.1} parent=179 // pred_check_branch
          %1465 = sbr.rel (%p1463) target = $region260
        $region259: #{tpu_custom_call.1} parent=179 // pred_region
          %1467 = dma.done [#allocation33], 128
        $region260: #{tpu_custom_call.1} parent=179 // pred_fallthru
          _
        // Predicated region
        $region261: #{tpu_custom_call.1} parent=179 // pred_check
          %p1468 = pneg %p677
        $region262: #{tpu_custom_call.1} parent=179 // pred_check_branch
          %1470 = sbr.rel (%p1468) target = $region264
        $region263: #{tpu_custom_call.1} parent=179 // pred_region
          %1472 = dma.done [#allocation33], 128
        $region264: #{tpu_custom_call.1} parent=179 // pred_fallthru
          _
        // Predicated region
        $region265: #{tpu_custom_call.1} parent=179 // pred_check
          %p1473 = pneg %p761
        $region266: #{tpu_custom_call.1} parent=179 // pred_check_branch
          %1475 = sbr.rel (%p1473) target = $region268
        $region267: #{tpu_custom_call.1} parent=179 // pred_region
          %1477 = dma.done [#allocation36], 2048
        $region268: #{tpu_custom_call.1} parent=179 // pred_fallthru
          _
        // Predicated region
        $region269: #{tpu_custom_call.1} parent=179 // pred_check
          %p1478 = pneg %p803
        $region270: #{tpu_custom_call.1} parent=179 // pred_check_branch
          %1480 = sbr.rel (%p1478) target = $region272
        $region271: #{tpu_custom_call.1} parent=179 // pred_region
          %1482 = dma.done [#allocation36], 2048
        $region272: #{tpu_custom_call.1} parent=179 // pred_fallthru
          _
        // Predicated region
        $region273: #{tpu_custom_call.1} parent=179 // pred_check
          %p1483 = pneg %p887
        $region274: #{tpu_custom_call.1} parent=179 // pred_check_branch
          %1485 = sbr.rel (%p1483) target = $region276
        $region275: #{tpu_custom_call.1} parent=179 // pred_region
          %1487 = dma.done [#allocation39], 2048
        $region276: #{tpu_custom_call.1} parent=179 // pred_fallthru
          _
        %s1488 = sand.u32 %s118, 1
        %s1489 = scalar_lea.sflag [#allocation3], %s1488
        %s1490 = sand.u32 %s118, 1
        %s1491 = smul.addr %s1490, 8
        %s1492 = scalar_lea.vmem [#allocation2], %s1491
        %p1493 = pneg %p131
        %p1494 = pneg %p128
        %p1495 = pneg %p152
        %p1496 = pneg %p149
        %p1497 = pneg %p173
        %p1498 = pneg %p170
        %p1499 = pneg %p194
        %p1500 = pneg %p191
        %p1501 = pneg %p215
        %p1502 = pneg %p212
        %p1503 = pneg %p236
        %p1504 = pneg %p233
        %p1505 = pneg %p257
        %p1506 = pneg %p254
        %p1507 = pneg %p278
        %p1508 = pneg %p275
        %p1509 = pneg %p299
        %p1510 = pneg %p296
        %p1511 = pneg %p320
        %p1512 = pneg %p317
        %p1513 = pneg %p341
        %p1514 = pneg %p338
        %p1515 = pneg %p362
        %p1516 = pneg %p359
        %p1517 = pneg %p383
        %p1518 = pneg %p380
        %p1519 = pneg %p404
        %p1520 = pneg %p401
        %p1521 = pneg %p425
        %p1522 = pneg %p422
        %p1523 = pneg %p446
        %p1524 = pneg %p443
        %p1525 = pneg %p467
        %p1526 = pneg %p464
        %p1527 = pneg %p488
        %p1528 = pneg %p485
        %p1529 = pneg %p509
        %p1530 = pneg %p506
        %p1531 = pneg %p530
        %p1532 = pneg %p527
        %p1533 = pneg %p551
        %p1534 = pneg %p548
        %p1535 = pneg %p572
        %p1536 = pneg %p569
        %p1537 = pneg %p593
        %p1538 = pneg %p590
        %p1539 = pneg %p614
        %p1540 = pneg %p611
        %p1541 = pneg %p635
        %p1542 = pneg %p632
        %p1543 = pneg %p656
        %p1544 = pneg %p653
        %p1545 = pneg %p677
        %p1546 = pneg %p674
        %p1547 = pneg %p698
        %p1548 = pneg %p695
        %p1549 = pneg %p719
        %p1550 = pneg %p716
        %p1551 = pneg %p740
        %p1552 = pneg %p737
        %p1553 = pneg %p761
        %p1554 = pneg %p758
        %p1555 = pneg %p782
        %p1556 = pneg %p779
        %p1557 = pneg %p803
        %p1558 = pneg %p800
        %p1559 = pneg %p824
        %p1560 = pneg %p821
        %p1561 = pneg %p845
        %p1562 = pneg %p842
        %p1563 = pneg %p866
        %p1564 = pneg %p863
        %p1565 = pneg %p887
        %p1566 = pneg %p884
        %p1567 = pneg %p908
        %p1568 = pneg %p905
        %p1569 = pneg %p929
        %p1570 = pneg %p926
        %p1571 = pneg %p950
        %p1572 = pneg %p947
        %p1573 = pneg %p976
        %p1574 = pneg %p973
        %s1575 = sand.u32 %s963, 1
        %s1576 = scalar_lea.sflag [#allocation4], %s1575
        %s1577 = sand.u32 %s963, 1
        %s1578 = smul.addr %s1577, 8
        %s1579 = scalar_lea.vmem [#allocation40], %s1578
        %v1580 = vld [vmem:[%s1367] sm:$0xff]
        %v1581 = vld [vmem:[%s3] sm:$0x1]
        %v1582 = vld [vmem:[#allocation5] sm:$0x1]
        %1583 = vadd.xlane.f32.xlu0 %v1580
        %v1584 = vpop.xlane.xlu0 %1583
        %v1585 = vrcp.pop 128.0
        %v1586 = vmul.f32 128.0, %v1585
        %v1587 = vsub.f32 1.0, %v1586
        %v1588 = vmul.f32 %v1585, %v1587
        %v1589 = vadd.f32 %v1585, %v1588
        %vm1590 = vweird.f32 %v1585
        %v1591 = vsel %vm1590, %v1585, %v1589
        %v1592 = vmul.f32 %v1584, %v1591
        %v1593 = vsub.f32 %v1580, %v1592
        %v1594 = vmul.f32 %v1593, %v1593
        %1595 = vadd.xlane.f32.xlu0 %v1594
        %v1596 = vpop.xlane.xlu0 %1595
        %v1597 = vmul.f32 %v1596, %v1591
        %v1598 = vadd.f32 %v1597, 1e-05
        %v1599 = vrsqrt.pop %v1598
        %v1600 = vmul.f32 %v1599, %v1598
        %v1601 = vmul.f32 %v1600, %v1599
        %v1602 = vmul.f32 0.5, %v1601
        %v1603 = vsub.f32 1.5, %v1602
        %v1604 = vmul.f32 %v1599, %v1603
        %vm1605 = vweird.f32 %v1598
        %vm1606 = vweird.f32 %v1599
        %vm1607 = vmor %vm1605, %vm1606
        %v1608 = vsel %vm1607, %v1599, %v1604
        %v1609 = vmul.f32 %v1593, %v1608
        %v1611 = vperm.slane %v1581, 0
        %v1613 = vmul.f32 %v1609, %v1611
        %v1615 = vperm.slane %v1582, 0
        %v1617 = vadd.f32 %v1613, %v1615
        %v1618 = vld [vmem:[#allocation7] sm:$0xff]
        %v1619 = vld [vmem:[#allocation7 + $0x8] sm:$0xff]
        %v1620 = vld [vmem:[#allocation7 + $0x10] sm:$0xff]
        %v1621 = vld [vmem:[#allocation7 + $0x18] sm:$0xff]
        %v1622 = vld [vmem:[#allocation7 + $0x20] sm:$0xff]
        %v1623 = vld [vmem:[#allocation7 + $0x28] sm:$0xff]
        %v1624 = vld [vmem:[#allocation7 + $0x30] sm:$0xff]
        %v1625 = vld [vmem:[#allocation7 + $0x38] sm:$0xff]
        %v1626 = vld [vmem:[#allocation7 + $0x40] sm:$0xff]
        %v1627 = vld [vmem:[#allocation7 + $0x48] sm:$0xff]
        %v1628 = vld [vmem:[#allocation7 + $0x50] sm:$0xff]
        %v1629 = vld [vmem:[#allocation7 + $0x58] sm:$0xff]
        %v1630 = vld [vmem:[#allocation7 + $0x60] sm:$0xff]
        %v1631 = vld [vmem:[#allocation7 + $0x68] sm:$0xff]
        %v1632 = vld [vmem:[#allocation7 + $0x70] sm:$0xff]
        %v1633 = vld [vmem:[#allocation7 + $0x78] sm:$0xff]
        %v1634 = vld [vmem:[#allocation8] sm:$0x1]
        %v1636 = vperm.slane %v1634, 0
        %1638 = vmatpush.msra.mxu0 %v1633
        %1639 = vmatpush.msra.mxu0 %v1632
        %1640 = vmatpush.msra.mxu0 %v1631
        %1641 = vmatpush.msra.mxu0 %v1630
        %1642 = vmatpush.msra.mxu0 %v1629
        %1643 = vmatpush.msra.mxu0 %v1628
        %1644 = vmatpush.msra.mxu0 %v1627
        %1645 = vmatpush.msra.mxu0 %v1626
        %1646 = vmatpush.msra.mxu0 %v1625
        %1647 = vmatpush.msra.mxu0 %v1624
        %1648 = vmatpush.msra.mxu0 %v1623
        %1649 = vmatpush.msra.mxu0 %v1622
        %1650 = vmatpush.msra.mxu0 %v1621
        %1651 = vmatpush.msra.mxu0 %v1620
        %1652 = vmatpush.msra.mxu0 %v1619
        %1653 = vmatpush.msra.mxu0 %v1618
        %1654 = vmatmul.f32.gmra.mxu0 %v1617
        %v1655 = vpop.f32.mrf.mxu0
        %v1656 = vadd.f32 %v1636, %v1655
        %1657 = vdwg.mxu0
        %v1658 = vxor.u32 %v1656, 2147483648
        %v1659 = vmul.f32 %v1658, 1.442695
        %v1660 = vpow.pop %v1659
        %v1661 = vadd.f32 %v1660, 1.0
        %v1662 = vrcp.pop %v1661
        %v1663 = vmul.f32 %v1661, %v1662
        %v1664 = vsub.f32 1.0, %v1663
        %v1665 = vmul.f32 %v1662, %v1664
        %v1666 = vadd.f32 %v1662, %v1665
        %vm1667 = vweird.f32 %v1661
        %vm1668 = vweird.f32 %v1662
        %vm1669 = vmor %vm1667, %vm1668
        %v1670 = vsel %vm1669, %v1662, %v1666
        %v1671 = vand.u32 2147483647, %v1661
        %vm1672 = vcmp.eq.f32.partialorder %v1671, 8.507059e+37
        %v1673 = vand.u32 %v1661, 2147483648
        %v1674 = vor.u32 1.1754944e-38, %v1673
        %v1675 = vsel %vm1672, %v1674, %v1670
        %v1676 = vmul.f32 1.0, %v1675
        %v1677 = vmul.f32 %v1656, %v1676
        %v1678 = vld [vmem:[#allocation10] sm:$0xff]
        %v1679 = vld [vmem:[#allocation10 + $0x8] sm:$0xff]
        %v1680 = vld [vmem:[#allocation10 + $0x10] sm:$0xff]
        %v1681 = vld [vmem:[#allocation10 + $0x18] sm:$0xff]
        %v1682 = vld [vmem:[#allocation10 + $0x20] sm:$0xff]
        %v1683 = vld [vmem:[#allocation10 + $0x28] sm:$0xff]
        %v1684 = vld [vmem:[#allocation10 + $0x30] sm:$0xff]
        %v1685 = vld [vmem:[#allocation10 + $0x38] sm:$0xff]
        %v1686 = vld [vmem:[#allocation10 + $0x40] sm:$0xff]
        %v1687 = vld [vmem:[#allocation10 + $0x48] sm:$0xff]
        %v1688 = vld [vmem:[#allocation10 + $0x50] sm:$0xff]
        %v1689 = vld [vmem:[#allocation10 + $0x58] sm:$0xff]
        %v1690 = vld [vmem:[#allocation10 + $0x60] sm:$0xff]
        %v1691 = vld [vmem:[#allocation10 + $0x68] sm:$0xff]
        %v1692 = vld [vmem:[#allocation10 + $0x70] sm:$0xff]
        %v1693 = vld [vmem:[#allocation10 + $0x78] sm:$0xff]
        %v1694 = vld [vmem:[#allocation11] sm:$0x1]
        %v1696 = vperm.slane %v1694, 0
        %1698 = vmatpush.msra.mxu0 %v1693
        %1699 = vmatpush.msra.mxu0 %v1692
        %1700 = vmatpush.msra.mxu0 %v1691
        %1701 = vmatpush.msra.mxu0 %v1690
        %1702 = vmatpush.msra.mxu0 %v1689
        %1703 = vmatpush.msra.mxu0 %v1688
        %1704 = vmatpush.msra.mxu0 %v1687
        %1705 = vmatpush.msra.mxu0 %v1686
        %1706 = vmatpush.msra.mxu0 %v1685
        %1707 = vmatpush.msra.mxu0 %v1684
        %1708 = vmatpush.msra.mxu0 %v1683
        %1709 = vmatpush.msra.mxu0 %v1682
        %1710 = vmatpush.msra.mxu0 %v1681
        %1711 = vmatpush.msra.mxu0 %v1680
        %1712 = vmatpush.msra.mxu0 %v1679
        %1713 = vmatpush.msra.mxu0 %v1678
        %1714 = vmatmul.f32.gmra.mxu0 %v1677
        %v1715 = vpop.f32.mrf.mxu0
        %v1716 = vadd.f32 %v1696, %v1715
        %1717 = vdwg.mxu0
        %v1718 = vmul.f32 %v1716, 0.5
        %v1719 = vadd.f32 %v1580, %v1718
        %v1720 = vld [vmem:[#allocation13] sm:$0x1]
        %v1721 = vld [vmem:[#allocation14] sm:$0x1]
        %1722 = vadd.xlane.f32.xlu0 %v1719
        %v1723 = vpop.xlane.xlu0 %1722
        %v1724 = vmul.f32 %v1723, %v1591
        %v1725 = vsub.f32 %v1719, %v1724
        %v1726 = vmul.f32 %v1725, %v1725
        %1727 = vadd.xlane.f32.xlu0 %v1726
        %v1728 = vpop.xlane.xlu0 %1727
        %v1729 = vmul.f32 %v1728, %v1591
        %v1730 = vadd.f32 %v1729, 1e-05
        %v1731 = vrsqrt.pop %v1730
        %v1732 = vmul.f32 %v1731, %v1730
        %v1733 = vmul.f32 %v1732, %v1731
        %v1734 = vmul.f32 0.5, %v1733
        %v1735 = vsub.f32 1.5, %v1734
        %v1736 = vmul.f32 %v1731, %v1735
        %vm1737 = vweird.f32 %v1730
        %vm1738 = vweird.f32 %v1731
        %vm1739 = vmor %vm1737, %vm1738
        %v1740 = vsel %vm1739, %v1731, %v1736
        %v1741 = vmul.f32 %v1725, %v1740
        %v1743 = vperm.slane %v1720, 0
        %v1745 = vmul.f32 %v1741, %v1743
        %v1747 = vperm.slane %v1721, 0
        %v1749 = vadd.f32 %v1745, %v1747
        %v1750 = vld [vmem:[%s19] sm:$0xff]
        %v1751 = vadd.f32 %v1749, %v1750
        %v1752 = vld [vmem:[#allocation16] sm:$0xff]
        %v1753 = vld [vmem:[#allocation16 + $0x8] sm:$0xff]
        %v1754 = vld [vmem:[#allocation16 + $0x10] sm:$0xff]
        %v1755 = vld [vmem:[#allocation16 + $0x18] sm:$0xff]
        %v1756 = vld [vmem:[#allocation16 + $0x20] sm:$0xff]
        %v1757 = vld [vmem:[#allocation16 + $0x28] sm:$0xff]
        %v1758 = vld [vmem:[#allocation16 + $0x30] sm:$0xff]
        %v1759 = vld [vmem:[#allocation16 + $0x38] sm:$0xff]
        %v1760 = vld [vmem:[#allocation16 + $0x40] sm:$0xff]
        %v1761 = vld [vmem:[#allocation16 + $0x48] sm:$0xff]
        %v1762 = vld [vmem:[#allocation16 + $0x50] sm:$0xff]
        %v1763 = vld [vmem:[#allocation16 + $0x58] sm:$0xff]
        %v1764 = vld [vmem:[#allocation16 + $0x60] sm:$0xff]
        %v1765 = vld [vmem:[#allocation16 + $0x68] sm:$0xff]
        %v1766 = vld [vmem:[#allocation16 + $0x70] sm:$0xff]
        %v1767 = vld [vmem:[#allocation16 + $0x78] sm:$0xff]
        %v1768 = vld [vmem:[#allocation17] sm:$0x1]
        %v1770 = vperm.slane %v1768, 0
        %1772 = vmatpush.msra.mxu0 %v1767
        %1773 = vmatpush.msra.mxu0 %v1766
        %1774 = vmatpush.msra.mxu0 %v1765
        %1775 = vmatpush.msra.mxu0 %v1764
        %1776 = vmatpush.msra.mxu0 %v1763
        %1777 = vmatpush.msra.mxu0 %v1762
        %1778 = vmatpush.msra.mxu0 %v1761
        %1779 = vmatpush.msra.mxu0 %v1760
        %1780 = vmatpush.msra.mxu0 %v1759
        %1781 = vmatpush.msra.mxu0 %v1758
        %1782 = vmatpush.msra.mxu0 %v1757
        %1783 = vmatpush.msra.mxu0 %v1756
        %1784 = vmatpush.msra.mxu0 %v1755
        %1785 = vmatpush.msra.mxu0 %v1754
        %1786 = vmatpush.msra.mxu0 %v1753
        %1787 = vmatpush.msra.mxu0 %v1752
        %1788 = vmatmul.f32.gmra.mxu0 %v1751
        %v1789 = vpop.f32.mrf.mxu0
        %v1790 = vadd.f32 %v1770, %v1789
        %1791 = vdwg.mxu0
        %v1792 = vld [vmem:[#allocation19] sm:$0xff]
        %v1793 = vld [vmem:[#allocation19 + $0x8] sm:$0xff]
        %v1794 = vld [vmem:[#allocation19 + $0x10] sm:$0xff]
        %v1795 = vld [vmem:[#allocation19 + $0x18] sm:$0xff]
        %v1796 = vld [vmem:[#allocation19 + $0x20] sm:$0xff]
        %v1797 = vld [vmem:[#allocation19 + $0x28] sm:$0xff]
        %v1798 = vld [vmem:[#allocation19 + $0x30] sm:$0xff]
        %v1799 = vld [vmem:[#allocation19 + $0x38] sm:$0xff]
        %v1800 = vld [vmem:[#allocation19 + $0x40] sm:$0xff]
        %v1801 = vld [vmem:[#allocation19 + $0x48] sm:$0xff]
        %v1802 = vld [vmem:[#allocation19 + $0x50] sm:$0xff]
        %v1803 = vld [vmem:[#allocation19 + $0x58] sm:$0xff]
        %v1804 = vld [vmem:[#allocation19 + $0x60] sm:$0xff]
        %v1805 = vld [vmem:[#allocation19 + $0x68] sm:$0xff]
        %v1806 = vld [vmem:[#allocation19 + $0x70] sm:$0xff]
        %v1807 = vld [vmem:[#allocation19 + $0x78] sm:$0xff]
        %v1808 = vld [vmem:[#allocation20] sm:$0x1]
        %v1810 = vperm.slane %v1808, 0
        %1812 = vmatpush.msra.mxu0 %v1807
        %1813 = vmatpush.msra.mxu0 %v1806
        %1814 = vmatpush.msra.mxu0 %v1805
        %1815 = vmatpush.msra.mxu0 %v1804
        %1816 = vmatpush.msra.mxu0 %v1803
        %1817 = vmatpush.msra.mxu0 %v1802
        %1818 = vmatpush.msra.mxu0 %v1801
        %1819 = vmatpush.msra.mxu0 %v1800
        %1820 = vmatpush.msra.mxu0 %v1799
        %1821 = vmatpush.msra.mxu0 %v1798
        %1822 = vmatpush.msra.mxu0 %v1797
        %1823 = vmatpush.msra.mxu0 %v1796
        %1824 = vmatpush.msra.mxu0 %v1795
        %1825 = vmatpush.msra.mxu0 %v1794
        %1826 = vmatpush.msra.mxu0 %v1793
        %1827 = vmatpush.msra.mxu0 %v1792
        %1828 = vmatmul.f32.gmra.mxu0 %v1751
        %v1829 = vpop.f32.mrf.mxu0
        %v1830 = vadd.f32 %v1810, %v1829
        %1831 = vdwg.mxu0
        %v1832 = vld [vmem:[#allocation22] sm:$0xff]
        %v1833 = vld [vmem:[#allocation22 + $0x8] sm:$0xff]
        %v1834 = vld [vmem:[#allocation22 + $0x10] sm:$0xff]
        %v1835 = vld [vmem:[#allocation22 + $0x18] sm:$0xff]
        %v1836 = vld [vmem:[#allocation22 + $0x20] sm:$0xff]
        %v1837 = vld [vmem:[#allocation22 + $0x28] sm:$0xff]
        %v1838 = vld [vmem:[#allocation22 + $0x30] sm:$0xff]
        %v1839 = vld [vmem:[#allocation22 + $0x38] sm:$0xff]
        %v1840 = vld [vmem:[#allocation22 + $0x40] sm:$0xff]
        %v1841 = vld [vmem:[#allocation22 + $0x48] sm:$0xff]
        %v1842 = vld [vmem:[#allocation22 + $0x50] sm:$0xff]
        %v1843 = vld [vmem:[#allocation22 + $0x58] sm:$0xff]
        %v1844 = vld [vmem:[#allocation22 + $0x60] sm:$0xff]
        %v1845 = vld [vmem:[#allocation22 + $0x68] sm:$0xff]
        %v1846 = vld [vmem:[#allocation22 + $0x70] sm:$0xff]
        %v1847 = vld [vmem:[#allocation22 + $0x78] sm:$0xff]
        %v1848 = vld [vmem:[#allocation23] sm:$0x1]
        %v1850 = vperm.slane %v1848, 0
        %1852 = vmatpush.msra.mxu0 %v1847
        %1853 = vmatpush.msra.mxu0 %v1846
        %1854 = vmatpush.msra.mxu0 %v1845
        %1855 = vmatpush.msra.mxu0 %v1844
        %1856 = vmatpush.msra.mxu0 %v1843
        %1857 = vmatpush.msra.mxu0 %v1842
        %1858 = vmatpush.msra.mxu0 %v1841
        %1859 = vmatpush.msra.mxu0 %v1840
        %1860 = vmatpush.msra.mxu0 %v1839
        %1861 = vmatpush.msra.mxu0 %v1838
        %1862 = vmatpush.msra.mxu0 %v1837
        %1863 = vmatpush.msra.mxu0 %v1836
        %1864 = vmatpush.msra.mxu0 %v1835
        %1865 = vmatpush.msra.mxu0 %v1834
        %1866 = vmatpush.msra.mxu0 %v1833
        %1867 = vmatpush.msra.mxu0 %v1832
        %1868 = vmatmul.f32.gmra.mxu0 %v1751
        %v1869 = vpop.f32.mrf.mxu0
        %v1870 = vadd.f32 %v1850, %v1869
        %1871 = vdwg.mxu0
        %1872 = vmatpush.xpose.msra.mxu0 0.0
        %1873 = vmatpush.xpose.msra.mxu0 0.0
        %1874 = vmatpush.xpose.msra.mxu0 0.0
        %1875 = vmatpush.xpose.msra.mxu0 0.0
        %1876 = vmatpush.xpose.msra.mxu0 0.0
        %1877 = vmatpush.xpose.msra.mxu0 0.0
        %1878 = vmatpush.xpose.msra.mxu0 0.0
        %1879 = vmatpush.xpose.msra.mxu0 0.0
        %1880 = vmatpush.xpose.msra.mxu0 0.0
        %1881 = vmatpush.xpose.msra.mxu0 0.0
        %1882 = vmatpush.xpose.msra.mxu0 0.0
        %1883 = vmatpush.xpose.msra.mxu0 0.0
        %1884 = vmatpush.xpose.msra.mxu0 0.0
        %1885 = vmatpush.xpose.msra.mxu0 0.0
        %1886 = vmatpush.xpose.msra.mxu0 0.0
        %1887 = vmatpush.xpose.msra.mxu0 %v1830
        %1888 = vmatmul.f32.gmra.mxu0 %v1790
        %v1889 = vpop.f32.mrf.mxu0
        %v1890 = vadd.f32 0.0, %v1889
        %1891 = vdwg.mxu0
        %v1892 = vmul.f32 %v1890, 0.088388346
        %vm1893 = vcmask 64512
        %v1894 = vsel %vm1893, %v1892, -inf
        %1895 = vmax.xlane.f32.xlu0 %v1894
        %v1896 = vpop.xlane.xlu0 %1895
        %v1897 = vsub.f32 %v1892, %v1896
        %v1898 = vmul.f32 %v1897, 1.442695
        %v1899 = vpow.pop %v1898
        %v1900 = vsel %vm1893, %v1899, 0.0
        %1901 = vadd.xlane.f32.xlu0 %v1900
        %v1902 = vpop.xlane.xlu0 %1901
        %v1903 = vrcp.pop %v1902
        %v1904 = vmul.f32 %v1902, %v1903
        %v1905 = vsub.f32 1.0, %v1904
        %v1906 = vmul.f32 %v1903, %v1905
        %v1907 = vadd.f32 %v1903, %v1906
        %vm1908 = vweird.f32 %v1902
        %vm1909 = vweird.f32 %v1903
        %vm1910 = vmor %vm1908, %vm1909
        %v1911 = vsel %vm1910, %v1903, %v1907
        %v1912 = vand.u32 2147483647, %v1902
        %vm1913 = vcmp.eq.f32.partialorder %v1912, 8.507059e+37
        %v1914 = vand.u32 %v1902, 2147483648
        %v1915 = vor.u32 1.1754944e-38, %v1914
        %v1916 = vsel %vm1913, %v1915, %v1911
        %v1917 = vmul.f32 %v1899, %v1916
        %v1919 = vsel %vm1893, %v1917, 0
        %1921 = vmatpush.msra.mxu0 0.0
        %1922 = vmatpush.msra.mxu0 0.0
        %1923 = vmatpush.msra.mxu0 0.0
        %1924 = vmatpush.msra.mxu0 0.0
        %1925 = vmatpush.msra.mxu0 0.0
        %1926 = vmatpush.msra.mxu0 0.0
        %1927 = vmatpush.msra.mxu0 0.0
        %1928 = vmatpush.msra.mxu0 0.0
        %1929 = vmatpush.msra.mxu0 0.0
        %1930 = vmatpush.msra.mxu0 0.0
        %1931 = vmatpush.msra.mxu0 0.0
        %1932 = vmatpush.msra.mxu0 0.0
        %1933 = vmatpush.msra.mxu0 0.0
        %1934 = vmatpush.msra.mxu0 0.0
        %1935 = vmatpush.msra.mxu0 0.0
        %1936 = vmatpush.msra.mxu0 %v1870
        %1937 = vmatmul.f32.gmra.mxu0 %v1919
        %v1938 = vpop.f32.mrf.mxu0
        %v1939 = vadd.f32 0.0, %v1938
        %1940 = vdwg.mxu0
        %v1941 = vld [vmem:[#allocation25] sm:$0xff]
        %v1942 = vld [vmem:[#allocation25 + $0x8] sm:$0xff]
        %v1943 = vld [vmem:[#allocation25 + $0x10] sm:$0xff]
        %v1944 = vld [vmem:[#allocation25 + $0x18] sm:$0xff]
        %v1945 = vld [vmem:[#allocation25 + $0x20] sm:$0xff]
        %v1946 = vld [vmem:[#allocation25 + $0x28] sm:$0xff]
        %v1947 = vld [vmem:[#allocation25 + $0x30] sm:$0xff]
        %v1948 = vld [vmem:[#allocation25 + $0x38] sm:$0xff]
        %v1949 = vld [vmem:[#allocation25 + $0x40] sm:$0xff]
        %v1950 = vld [vmem:[#allocation25 + $0x48] sm:$0xff]
        %v1951 = vld [vmem:[#allocation25 + $0x50] sm:$0xff]
        %v1952 = vld [vmem:[#allocation25 + $0x58] sm:$0xff]
        %v1953 = vld [vmem:[#allocation25 + $0x60] sm:$0xff]
        %v1954 = vld [vmem:[#allocation25 + $0x68] sm:$0xff]
        %v1955 = vld [vmem:[#allocation25 + $0x70] sm:$0xff]
        %v1956 = vld [vmem:[#allocation25 + $0x78] sm:$0xff]
        %1957 = vmatpush.msra.mxu0 %v1956
        %1958 = vmatpush.msra.mxu0 %v1955
        %1959 = vmatpush.msra.mxu0 %v1954
        %1960 = vmatpush.msra.mxu0 %v1953
        %1961 = vmatpush.msra.mxu0 %v1952
        %1962 = vmatpush.msra.mxu0 %v1951
        %1963 = vmatpush.msra.mxu0 %v1950
        %1964 = vmatpush.msra.mxu0 %v1949
        %1965 = vmatpush.msra.mxu0 %v1948
        %1966 = vmatpush.msra.mxu0 %v1947
        %1967 = vmatpush.msra.mxu0 %v1946
        %1968 = vmatpush.msra.mxu0 %v1945
        %1969 = vmatpush.msra.mxu0 %v1944
        %1970 = vmatpush.msra.mxu0 %v1943
        %1971 = vmatpush.msra.mxu0 %v1942
        %1972 = vmatpush.msra.mxu0 %v1941
        %1973 = vmatmul.f32.gmra.mxu0 %v1939
        %v1974 = vpop.f32.mrf.mxu0
        %v1975 = vadd.f32 0.0, %v1974
        %1976 = vdwg.mxu0
        %v1977 = vadd.f32 %v1719, %v1975
        %v1978 = vld [vmem:[#allocation26] sm:$0x1]
        %v1980 = vperm.slane %v1978, 0
        %v1982 = vadd.f32 %v1977, %v1980
        %v1983 = vld [vmem:[#allocation28] sm:$0x1]
        %v1984 = vld [vmem:[#allocation29] sm:$0x1]
        %1985 = vadd.xlane.f32.xlu0 %v1982
        %v1986 = vpop.xlane.xlu0 %1985
        %v1987 = vmul.f32 %v1986, %v1591
        %v1988 = vsub.f32 %v1982, %v1987
        %v1989 = vmul.f32 %v1988, %v1988
        %1990 = vadd.xlane.f32.xlu0 %v1989
        %v1991 = vpop.xlane.xlu0 %1990
        %v1992 = vmul.f32 %v1991, %v1591
        %v1993 = vadd.f32 %v1992, 1e-05
        %v1994 = vrsqrt.pop %v1993
        %v1995 = vmul.f32 %v1994, %v1993
        %v1996 = vmul.f32 %v1995, %v1994
        %v1997 = vmul.f32 0.5, %v1996
        %v1998 = vsub.f32 1.5, %v1997
        %v1999 = vmul.f32 %v1994, %v1998
        %vm2000 = vweird.f32 %v1993
        %vm2001 = vweird.f32 %v1994
        %vm2002 = vmor %vm2000, %vm2001
        %v2003 = vsel %vm2002, %v1994, %v1999
        %v2004 = vmul.f32 %v1988, %v2003
        %v2006 = vperm.slane %v1983, 0
        %v2008 = vmul.f32 %v2004, %v2006
        %v2010 = vperm.slane %v1984, 0
        %v2012 = vadd.f32 %v2008, %v2010
        %v2013 = vadd.f32 %v2012, %v1750
        %v2014 = vld [vmem:[%s41] sm:$0xff]
        %v2015 = vld [vmem:[#allocation31] sm:$0x1]
        %v2017 = vperm.slane %v2015, 0
        %2019 = vxpose.xlu0.b32.start [1/16] %v2013, 128
        %2020 = vxpose.xlu0.b32.cont [2/16] 0.0, 128
        %2021 = vxpose.xlu0.b32.cont [3/16] 0.0, 128
        %2022 = vxpose.xlu0.b32.cont [4/16] 0.0, 128
        %2023 = vxpose.xlu0.b32.cont [5/16] 0.0, 128
        %2024 = vxpose.xlu0.b32.cont [6/16] 0.0, 128
        %2025 = vxpose.xlu0.b32.cont [7/16] 0.0, 128
        %2026 = vxpose.xlu0.b32.cont [8/16] 0.0, 128
        %2027 = vxpose.xlu0.b32.cont [9/16] 0.0, 128
        %2028 = vxpose.xlu0.b32.cont [10/16] 0.0, 128
        %2029 = vxpose.xlu0.b32.cont [11/16] 0.0, 128
        %2030 = vxpose.xlu0.b32.cont [12/16] 0.0, 128
        %2031 = vxpose.xlu0.b32.cont [13/16] 0.0, 128
        %2032 = vxpose.xlu0.b32.cont [14/16] 0.0, 128
        %2033 = vxpose.xlu0.b32.cont [15/16] 0.0, 128
        %2034 = vxpose.xlu0.b32.end [16/16] 0.0, 128
        %v2035 = vpop.trf.xlu0
        %v2036 = vpop.trf.xlu0
        %v2037 = vpop.trf.xlu0
        %v2038 = vpop.trf.xlu0
        %v2039 = vpop.trf.xlu0
        %v2040 = vpop.trf.xlu0
        %v2041 = vpop.trf.xlu0
        %v2042 = vpop.trf.xlu0
        %v2043 = vpop.trf.xlu0
        %v2044 = vpop.trf.xlu0
        %v2045 = vpop.trf.xlu0
        %v2046 = vpop.trf.xlu0
        %v2047 = vpop.trf.xlu0
        %v2048 = vpop.trf.xlu0
        %v2049 = vpop.trf.xlu0
        %v2050 = vpop.trf.xlu0
        %v2052 = vsel %vm1893, %v2035, 0
        %v2055 = vsel %vm1893, %v2036, 0
        %v2058 = vsel %vm1893, %v2037, 0
        %v2061 = vsel %vm1893, %v2038, 0
        %v2064 = vsel %vm1893, %v2039, 0
        %v2067 = vsel %vm1893, %v2040, 0
        %v2070 = vsel %vm1893, %v2041, 0
        %v2073 = vsel %vm1893, %v2042, 0
        %v2076 = vsel %vm1893, %v2043, 0
        %v2079 = vsel %vm1893, %v2044, 0
        %v2082 = vsel %vm1893, %v2045, 0
        %v2085 = vsel %vm1893, %v2046, 0
        %v2088 = vsel %vm1893, %v2047, 0
        %v2091 = vsel %vm1893, %v2048, 0
        %v2094 = vsel %vm1893, %v2049, 0
        %v2097 = vsel %vm1893, %v2050, 0
        %2099 = vmatpush.msra.mxu0 0.0
        %2100 = vmatpush.msra.mxu0 0.0
        %2101 = vmatpush.msra.mxu0 0.0
        %2102 = vmatpush.msra.mxu0 0.0
        %2103 = vmatpush.msra.mxu0 0.0
        %2104 = vmatpush.msra.mxu0 0.0
        %2105 = vmatpush.msra.mxu0 0.0
        %2106 = vmatpush.msra.mxu0 0.0
        %2107 = vmatpush.msra.mxu0 0.0
        %2108 = vmatpush.msra.mxu0 0.0
        %2109 = vmatpush.msra.mxu0 0.0
        %2110 = vmatpush.msra.mxu0 0.0
        %2111 = vmatpush.msra.mxu0 0.0
        %2112 = vmatpush.msra.mxu0 0.0
        %2113 = vmatpush.msra.mxu0 0.0
        %2114 = vmatpush.msra.mxu0 %v2014
        %2115 = vmatmul.f32.gmra.mxu0 %v2052
        %v2116 = vpop.f32.mrf.mxu0
        %v2117 = vadd.f32 %v2017, %v2116
        %2118 = vmatmul.f32.gmra.mxu0 %v2055
        %v2119 = vpop.f32.mrf.mxu0
        %v2120 = vadd.f32 %v2017, %v2119
        %2121 = vmatmul.f32.gmra.mxu0 %v2058
        %v2122 = vpop.f32.mrf.mxu0
        %v2123 = vadd.f32 %v2017, %v2122
        %2124 = vmatmul.f32.gmra.mxu0 %v2061
        %v2125 = vpop.f32.mrf.mxu0
        %v2126 = vadd.f32 %v2017, %v2125
        %2127 = vmatmul.f32.gmra.mxu0 %v2064
        %v2128 = vpop.f32.mrf.mxu0
        %v2129 = vadd.f32 %v2017, %v2128
        %2130 = vmatmul.f32.gmra.mxu0 %v2067
        %v2131 = vpop.f32.mrf.mxu0
        %v2132 = vadd.f32 %v2017, %v2131
        %2133 = vmatmul.f32.gmra.mxu0 %v2070
        %v2134 = vpop.f32.mrf.mxu0
        %v2135 = vadd.f32 %v2017, %v2134
        %2136 = vmatmul.f32.gmra.mxu0 %v2073
        %v2137 = vpop.f32.mrf.mxu0
        %v2138 = vadd.f32 %v2017, %v2137
        %2139 = vmatmul.f32.gmra.mxu0 %v2076
        %v2140 = vpop.f32.mrf.mxu0
        %v2141 = vadd.f32 %v2017, %v2140
        %2142 = vmatmul.f32.gmra.mxu0 %v2079
        %v2143 = vpop.f32.mrf.mxu0
        %v2144 = vadd.f32 %v2017, %v2143
        %2145 = vmatmul.f32.gmra.mxu0 %v2082
        %v2146 = vpop.f32.mrf.mxu0
        %v2147 = vadd.f32 %v2017, %v2146
        %2148 = vmatmul.f32.gmra.mxu0 %v2085
        %v2149 = vpop.f32.mrf.mxu0
        %v2150 = vadd.f32 %v2017, %v2149
        %2151 = vmatmul.f32.gmra.mxu0 %v2088
        %v2152 = vpop.f32.mrf.mxu0
        %v2153 = vadd.f32 %v2017, %v2152
        %2154 = vmatmul.f32.gmra.mxu0 %v2091
        %v2155 = vpop.f32.mrf.mxu0
        %v2156 = vadd.f32 %v2017, %v2155
        %2157 = vmatmul.f32.gmra.mxu0 %v2094
        %v2158 = vpop.f32.mrf.mxu0
        %v2159 = vadd.f32 %v2017, %v2158
        %2160 = vmatmul.f32.gmra.mxu0 %v2097
        %v2161 = vpop.f32.mrf.mxu0
        %v2162 = vadd.f32 %v2017, %v2161
        %2163 = vdwg.mxu0
        %v2164 = vld [vmem:[%s45] sm:$0xff]
        %v2165 = vld [vmem:[%s47] sm:$0x1]
        %v2167 = vperm.slane %v2165, 0
        %2169 = vmatpush.msra.mxu0 0.0
        %2170 = vmatpush.msra.mxu0 0.0
        %2171 = vmatpush.msra.mxu0 0.0
        %2172 = vmatpush.msra.mxu0 0.0
        %2173 = vmatpush.msra.mxu0 0.0
        %2174 = vmatpush.msra.mxu0 0.0
        %2175 = vmatpush.msra.mxu0 0.0
        %2176 = vmatpush.msra.mxu0 0.0
        %2177 = vmatpush.msra.mxu0 0.0
        %2178 = vmatpush.msra.mxu0 0.0
        %2179 = vmatpush.msra.mxu0 0.0
        %2180 = vmatpush.msra.mxu0 0.0
        %2181 = vmatpush.msra.mxu0 0.0
        %2182 = vmatpush.msra.mxu0 0.0
        %2183 = vmatpush.msra.mxu0 0.0
        %2184 = vmatpush.msra.mxu0 %v2164
        %2185 = vmatmul.f32.gmra.mxu0 %v2052
        %v2186 = vpop.f32.mrf.mxu0
        %v2187 = vadd.f32 %v2167, %v2186
        %2188 = vmatmul.f32.gmra.mxu0 %v2055
        %v2189 = vpop.f32.mrf.mxu0
        %v2190 = vadd.f32 %v2167, %v2189
        %2191 = vmatmul.f32.gmra.mxu0 %v2058
        %v2192 = vpop.f32.mrf.mxu0
        %v2193 = vadd.f32 %v2167, %v2192
        %2194 = vmatmul.f32.gmra.mxu0 %v2061
        %v2195 = vpop.f32.mrf.mxu0
        %v2196 = vadd.f32 %v2167, %v2195
        %2197 = vmatmul.f32.gmra.mxu0 %v2064
        %v2198 = vpop.f32.mrf.mxu0
        %v2199 = vadd.f32 %v2167, %v2198
        %2200 = vmatmul.f32.gmra.mxu0 %v2067
        %v2201 = vpop.f32.mrf.mxu0
        %v2202 = vadd.f32 %v2167, %v2201
        %2203 = vmatmul.f32.gmra.mxu0 %v2070
        %v2204 = vpop.f32.mrf.mxu0
        %v2205 = vadd.f32 %v2167, %v2204
        %2206 = vmatmul.f32.gmra.mxu0 %v2073
        %v2207 = vpop.f32.mrf.mxu0
        %v2208 = vadd.f32 %v2167, %v2207
        %2209 = vmatmul.f32.gmra.mxu0 %v2076
        %v2210 = vpop.f32.mrf.mxu0
        %v2211 = vadd.f32 %v2167, %v2210
        %2212 = vmatmul.f32.gmra.mxu0 %v2079
        %v2213 = vpop.f32.mrf.mxu0
        %v2214 = vadd.f32 %v2167, %v2213
        %2215 = vmatmul.f32.gmra.mxu0 %v2082
        %v2216 = vpop.f32.mrf.mxu0
        %v2217 = vadd.f32 %v2167, %v2216
        %2218 = vmatmul.f32.gmra.mxu0 %v2085
        %v2219 = vpop.f32.mrf.mxu0
        %v2220 = vadd.f32 %v2167, %v2219
        %2221 = vmatmul.f32.gmra.mxu0 %v2088
        %v2222 = vpop.f32.mrf.mxu0
        %v2223 = vadd.f32 %v2167, %v2222
        %2224 = vmatmul.f32.gmra.mxu0 %v2091
        %v2225 = vpop.f32.mrf.mxu0
        %v2226 = vadd.f32 %v2167, %v2225
        %2227 = vmatmul.f32.gmra.mxu0 %v2094
        %v2228 = vpop.f32.mrf.mxu0
        %v2229 = vadd.f32 %v2167, %v2228
        %2230 = vmatmul.f32.gmra.mxu0 %v2097
        %v2231 = vpop.f32.mrf.mxu0
        %v2232 = vadd.f32 %v2167, %v2231
        %2233 = vdwg.mxu0
        %v2234 = vld [vmem:[#allocation32] sm:$0xff]
        %v2235 = vld [vmem:[%s51] sm:$0x1]
        %v2237 = vperm.slane %v2235, 0
        %2239 = vmatpush.msra.mxu0 0.0
        %2240 = vmatpush.msra.mxu0 0.0
        %2241 = vmatpush.msra.mxu0 0.0
        %2242 = vmatpush.msra.mxu0 0.0
        %2243 = vmatpush.msra.mxu0 0.0
        %2244 = vmatpush.msra.mxu0 0.0
        %2245 = vmatpush.msra.mxu0 0.0
        %2246 = vmatpush.msra.mxu0 0.0
        %2247 = vmatpush.msra.mxu0 0.0
        %2248 = vmatpush.msra.mxu0 0.0
        %2249 = vmatpush.msra.mxu0 0.0
        %2250 = vmatpush.msra.mxu0 0.0
        %2251 = vmatpush.msra.mxu0 0.0
        %2252 = vmatpush.msra.mxu0 0.0
        %2253 = vmatpush.msra.mxu0 0.0
        %2254 = vmatpush.msra.mxu0 %v2234
        %2255 = vmatmul.f32.gmra.mxu0 %v2052
        %v2256 = vpop.f32.mrf.mxu0
        %v2257 = vadd.f32 %v2237, %v2256
        %2258 = vmatmul.f32.gmra.mxu0 %v2055
        %v2259 = vpop.f32.mrf.mxu0
        %v2260 = vadd.f32 %v2237, %v2259
        %2261 = vmatmul.f32.gmra.mxu0 %v2058
        %v2262 = vpop.f32.mrf.mxu0
        %v2263 = vadd.f32 %v2237, %v2262
        %2264 = vmatmul.f32.gmra.mxu0 %v2061
        %v2265 = vpop.f32.mrf.mxu0
        %v2266 = vadd.f32 %v2237, %v2265
        %2267 = vmatmul.f32.gmra.mxu0 %v2064
        %v2268 = vpop.f32.mrf.mxu0
        %v2269 = vadd.f32 %v2237, %v2268
        %2270 = vmatmul.f32.gmra.mxu0 %v2067
        %v2271 = vpop.f32.mrf.mxu0
        %v2272 = vadd.f32 %v2237, %v2271
        %2273 = vmatmul.f32.gmra.mxu0 %v2070
        %v2274 = vpop.f32.mrf.mxu0
        %v2275 = vadd.f32 %v2237, %v2274
        %2276 = vmatmul.f32.gmra.mxu0 %v2073
        %v2277 = vpop.f32.mrf.mxu0
        %v2278 = vadd.f32 %v2237, %v2277
        %2279 = vmatmul.f32.gmra.mxu0 %v2076
        %v2280 = vpop.f32.mrf.mxu0
        %v2281 = vadd.f32 %v2237, %v2280
        %2282 = vmatmul.f32.gmra.mxu0 %v2079
        %v2283 = vpop.f32.mrf.mxu0
        %v2284 = vadd.f32 %v2237, %v2283
        %2285 = vmatmul.f32.gmra.mxu0 %v2082
        %v2286 = vpop.f32.mrf.mxu0
        %v2287 = vadd.f32 %v2237, %v2286
        %2288 = vmatmul.f32.gmra.mxu0 %v2085
        %v2289 = vpop.f32.mrf.mxu0
        %v2290 = vadd.f32 %v2237, %v2289
        %2291 = vmatmul.f32.gmra.mxu0 %v2088
        %v2292 = vpop.f32.mrf.mxu0
        %v2293 = vadd.f32 %v2237, %v2292
        %2294 = vmatmul.f32.gmra.mxu0 %v2091
        %v2295 = vpop.f32.mrf.mxu0
        %v2296 = vadd.f32 %v2237, %v2295
        %2297 = vmatmul.f32.gmra.mxu0 %v2094
        %v2298 = vpop.f32.mrf.mxu0
        %v2299 = vadd.f32 %v2237, %v2298
        %2300 = vmatmul.f32.gmra.mxu0 %v2097
        %v2301 = vpop.f32.mrf.mxu0
        %v2302 = vadd.f32 %v2237, %v2301
        %2303 = vdwg.mxu0
        %v2305 = vsel %vm1893, %v2117, 0
        %v2308 = vsel %vm1893, %v2120, 0
        %v2311 = vsel %vm1893, %v2123, 0
        %v2314 = vsel %vm1893, %v2126, 0
        %v2317 = vsel %vm1893, %v2129, 0
        %v2320 = vsel %vm1893, %v2132, 0
        %v2323 = vsel %vm1893, %v2135, 0
        %v2326 = vsel %vm1893, %v2138, 0
        %v2329 = vsel %vm1893, %v2141, 0
        %v2332 = vsel %vm1893, %v2144, 0
        %v2335 = vsel %vm1893, %v2147, 0
        %v2338 = vsel %vm1893, %v2150, 0
        %v2341 = vsel %vm1893, %v2153, 0
        %v2344 = vsel %vm1893, %v2156, 0
        %v2347 = vsel %vm1893, %v2159, 0
        %v2350 = vsel %vm1893, %v2162, 0
        %v2353 = vsel %vm1893, %v2187, 0
        %v2356 = vsel %vm1893, %v2190, 0
        %v2359 = vsel %vm1893, %v2193, 0
        %v2362 = vsel %vm1893, %v2196, 0
        %v2365 = vsel %vm1893, %v2199, 0
        %v2368 = vsel %vm1893, %v2202, 0
        %v2371 = vsel %vm1893, %v2205, 0
        %v2374 = vsel %vm1893, %v2208, 0
        %v2377 = vsel %vm1893, %v2211, 0
        %v2380 = vsel %vm1893, %v2214, 0
        %v2383 = vsel %vm1893, %v2217, 0
        %v2386 = vsel %vm1893, %v2220, 0
        %v2389 = vsel %vm1893, %v2223, 0
        %v2392 = vsel %vm1893, %v2226, 0
        %v2395 = vsel %vm1893, %v2229, 0
        %v2398 = vsel %vm1893, %v2232, 0
        %2400 = vmatpush.xpose.msra.mxu0 %v2398
        %2401 = vmatpush.xpose.msra.mxu0 %v2395
        %2402 = vmatpush.xpose.msra.mxu0 %v2392
        %2403 = vmatpush.xpose.msra.mxu0 %v2389
        %2404 = vmatpush.xpose.msra.mxu0 %v2386
        %2405 = vmatpush.xpose.msra.mxu0 %v2383
        %2406 = vmatpush.xpose.msra.mxu0 %v2380
        %2407 = vmatpush.xpose.msra.mxu0 %v2377
        %2408 = vmatpush.xpose.msra.mxu0 %v2374
        %2409 = vmatpush.xpose.msra.mxu0 %v2371
        %2410 = vmatpush.xpose.msra.mxu0 %v2368
        %2411 = vmatpush.xpose.msra.mxu0 %v2365
        %2412 = vmatpush.xpose.msra.mxu0 %v2362
        %2413 = vmatpush.xpose.msra.mxu0 %v2359
        %2414 = vmatpush.xpose.msra.mxu0 %v2356
        %2415 = vmatpush.xpose.msra.mxu0 %v2353
        %2416 = vmatmul.f32.gmra.mxu0 %v2305
        %v2417 = vpop.f32.mrf.mxu0
        %v2418 = vadd.f32 0.0, %v2417
        %2419 = vmatmul.f32.gmra.mxu0 %v2308
        %v2420 = vpop.f32.mrf.mxu0
        %v2421 = vadd.f32 0.0, %v2420
        %2422 = vmatmul.f32.gmra.mxu0 %v2311
        %v2423 = vpop.f32.mrf.mxu0
        %v2424 = vadd.f32 0.0, %v2423
        %2425 = vmatmul.f32.gmra.mxu0 %v2314
        %v2426 = vpop.f32.mrf.mxu0
        %v2427 = vadd.f32 0.0, %v2426
        %2428 = vmatmul.f32.gmra.mxu0 %v2317
        %v2429 = vpop.f32.mrf.mxu0
        %v2430 = vadd.f32 0.0, %v2429
        %2431 = vmatmul.f32.gmra.mxu0 %v2320
        %v2432 = vpop.f32.mrf.mxu0
        %v2433 = vadd.f32 0.0, %v2432
        %2434 = vmatmul.f32.gmra.mxu0 %v2323
        %v2435 = vpop.f32.mrf.mxu0
        %v2436 = vadd.f32 0.0, %v2435
        %2437 = vmatmul.f32.gmra.mxu0 %v2326
        %v2438 = vpop.f32.mrf.mxu0
        %v2439 = vadd.f32 0.0, %v2438
        %2440 = vmatmul.f32.gmra.mxu0 %v2329
        %v2441 = vpop.f32.mrf.mxu0
        %v2442 = vadd.f32 0.0, %v2441
        %2443 = vmatmul.f32.gmra.mxu0 %v2332
        %v2444 = vpop.f32.mrf.mxu0
        %v2445 = vadd.f32 0.0, %v2444
        %2446 = vmatmul.f32.gmra.mxu0 %v2335
        %v2447 = vpop.f32.mrf.mxu0
        %v2448 = vadd.f32 0.0, %v2447
        %2449 = vmatmul.f32.gmra.mxu0 %v2338
        %v2450 = vpop.f32.mrf.mxu0
        %v2451 = vadd.f32 0.0, %v2450
        %2452 = vmatmul.f32.gmra.mxu0 %v2341
        %v2453 = vpop.f32.mrf.mxu0
        %v2454 = vadd.f32 0.0, %v2453
        %2455 = vmatmul.f32.gmra.mxu0 %v2344
        %v2456 = vpop.f32.mrf.mxu0
        %v2457 = vadd.f32 0.0, %v2456
        %2458 = vmatmul.f32.gmra.mxu0 %v2347
        %v2459 = vpop.f32.mrf.mxu0
        %v2460 = vadd.f32 0.0, %v2459
        %2461 = vmatmul.f32.gmra.mxu0 %v2350
        %v2462 = vpop.f32.mrf.mxu0
        %v2463 = vadd.f32 0.0, %v2462
        %2464 = vdwg.mxu0
        %v2465 = vmul.f32 %v2418, 0.35355338
        %v2466 = vmul.f32 %v2421, 0.35355338
        %v2467 = vmul.f32 %v2424, 0.35355338
        %v2468 = vmul.f32 %v2427, 0.35355338
        %v2469 = vmul.f32 %v2430, 0.35355338
        %v2470 = vmul.f32 %v2433, 0.35355338
        %v2471 = vmul.f32 %v2436, 0.35355338
        %v2472 = vmul.f32 %v2439, 0.35355338
        %v2473 = vmul.f32 %v2442, 0.35355338
        %v2474 = vmul.f32 %v2445, 0.35355338
        %v2475 = vmul.f32 %v2448, 0.35355338
        %v2476 = vmul.f32 %v2451, 0.35355338
        %v2477 = vmul.f32 %v2454, 0.35355338
        %v2478 = vmul.f32 %v2457, 0.35355338
        %v2479 = vmul.f32 %v2460, 0.35355338
        %v2480 = vmul.f32 %v2463, 0.35355338
        %2481 = vmax.xlane.f32.xlu0 %v2465
        %v2482 = vpop.xlane.xlu0 %2481
        %2483 = vmax.xlane.f32.xlu0 %v2466
        %v2484 = vpop.xlane.xlu0 %2483
        %2485 = vmax.xlane.f32.xlu0 %v2467
        %v2486 = vpop.xlane.xlu0 %2485
        %2487 = vmax.xlane.f32.xlu0 %v2468
        %v2488 = vpop.xlane.xlu0 %2487
        %2489 = vmax.xlane.f32.xlu0 %v2469
        %v2490 = vpop.xlane.xlu0 %2489
        %2491 = vmax.xlane.f32.xlu0 %v2470
        %v2492 = vpop.xlane.xlu0 %2491
        %2493 = vmax.xlane.f32.xlu0 %v2471
        %v2494 = vpop.xlane.xlu0 %2493
        %2495 = vmax.xlane.f32.xlu0 %v2472
        %v2496 = vpop.xlane.xlu0 %2495
        %2497 = vmax.xlane.f32.xlu0 %v2473
        %v2498 = vpop.xlane.xlu0 %2497
        %2499 = vmax.xlane.f32.xlu0 %v2474
        %v2500 = vpop.xlane.xlu0 %2499
        %2501 = vmax.xlane.f32.xlu0 %v2475
        %v2502 = vpop.xlane.xlu0 %2501
        %2503 = vmax.xlane.f32.xlu0 %v2476
        %v2504 = vpop.xlane.xlu0 %2503
        %2505 = vmax.xlane.f32.xlu0 %v2477
        %v2506 = vpop.xlane.xlu0 %2505
        %2507 = vmax.xlane.f32.xlu0 %v2478
        %v2508 = vpop.xlane.xlu0 %2507
        %2509 = vmax.xlane.f32.xlu0 %v2479
        %v2510 = vpop.xlane.xlu0 %2509
        %2511 = vmax.xlane.f32.xlu0 %v2480
        %v2512 = vpop.xlane.xlu0 %2511
        %v2513 = vsub.f32 %v2465, %v2482
        %v2514 = vsub.f32 %v2466, %v2484
        %v2515 = vsub.f32 %v2467, %v2486
        %v2516 = vsub.f32 %v2468, %v2488
        %v2517 = vsub.f32 %v2469, %v2490
        %v2518 = vsub.f32 %v2470, %v2492
        %v2519 = vsub.f32 %v2471, %v2494
        %v2520 = vsub.f32 %v2472, %v2496
        %v2521 = vsub.f32 %v2473, %v2498
        %v2522 = vsub.f32 %v2474, %v2500
        %v2523 = vsub.f32 %v2475, %v2502
        %v2524 = vsub.f32 %v2476, %v2504
        %v2525 = vsub.f32 %v2477, %v2506
        %v2526 = vsub.f32 %v2478, %v2508
        %v2527 = vsub.f32 %v2479, %v2510
        %v2528 = vsub.f32 %v2480, %v2512
        %v2529 = vmul.f32 %v2513, 1.442695
        %v2530 = vpow.pop %v2529
        %v2531 = vmul.f32 %v2514, 1.442695
        %v2532 = vpow.pop %v2531
        %v2533 = vmul.f32 %v2515, 1.442695
        %v2534 = vpow.pop %v2533
        %v2535 = vmul.f32 %v2516, 1.442695
        %v2536 = vpow.pop %v2535
        %v2537 = vmul.f32 %v2517, 1.442695
        %v2538 = vpow.pop %v2537
        %v2539 = vmul.f32 %v2518, 1.442695
        %v2540 = vpow.pop %v2539
        %v2541 = vmul.f32 %v2519, 1.442695
        %v2542 = vpow.pop %v2541
        %v2543 = vmul.f32 %v2520, 1.442695
        %v2544 = vpow.pop %v2543
        %v2545 = vmul.f32 %v2521, 1.442695
        %v2546 = vpow.pop %v2545
        %v2547 = vmul.f32 %v2522, 1.442695
        %v2548 = vpow.pop %v2547
        %v2549 = vmul.f32 %v2523, 1.442695
        %v2550 = vpow.pop %v2549
        %v2551 = vmul.f32 %v2524, 1.442695
        %v2552 = vpow.pop %v2551
        %v2553 = vmul.f32 %v2525, 1.442695
        %v2554 = vpow.pop %v2553
        %v2555 = vmul.f32 %v2526, 1.442695
        %v2556 = vpow.pop %v2555
        %v2557 = vmul.f32 %v2527, 1.442695
        %v2558 = vpow.pop %v2557
        %v2559 = vmul.f32 %v2528, 1.442695
        %v2560 = vpow.pop %v2559
        %2561 = vadd.xlane.f32.xlu0 %v2530
        %v2562 = vpop.xlane.xlu0 %2561
        %2563 = vadd.xlane.f32.xlu0 %v2532
        %v2564 = vpop.xlane.xlu0 %2563
        %2565 = vadd.xlane.f32.xlu0 %v2534
        %v2566 = vpop.xlane.xlu0 %2565
        %2567 = vadd.xlane.f32.xlu0 %v2536
        %v2568 = vpop.xlane.xlu0 %2567
        %2569 = vadd.xlane.f32.xlu0 %v2538
        %v2570 = vpop.xlane.xlu0 %2569
        %2571 = vadd.xlane.f32.xlu0 %v2540
        %v2572 = vpop.xlane.xlu0 %2571
        %2573 = vadd.xlane.f32.xlu0 %v2542
        %v2574 = vpop.xlane.xlu0 %2573
        %2575 = vadd.xlane.f32.xlu0 %v2544
        %v2576 = vpop.xlane.xlu0 %2575
        %2577 = vadd.xlane.f32.xlu0 %v2546
        %v2578 = vpop.xlane.xlu0 %2577
        %2579 = vadd.xlane.f32.xlu0 %v2548
        %v2580 = vpop.xlane.xlu0 %2579
        %2581 = vadd.xlane.f32.xlu0 %v2550
        %v2582 = vpop.xlane.xlu0 %2581
        %2583 = vadd.xlane.f32.xlu0 %v2552
        %v2584 = vpop.xlane.xlu0 %2583
        %2585 = vadd.xlane.f32.xlu0 %v2554
        %v2586 = vpop.xlane.xlu0 %2585
        %2587 = vadd.xlane.f32.xlu0 %v2556
        %v2588 = vpop.xlane.xlu0 %2587
        %2589 = vadd.xlane.f32.xlu0 %v2558
        %v2590 = vpop.xlane.xlu0 %2589
        %2591 = vadd.xlane.f32.xlu0 %v2560
        %v2592 = vpop.xlane.xlu0 %2591
        %v2593 = vrcp.pop %v2562
        %v2594 = vmul.f32 %v2562, %v2593
        %v2595 = vsub.f32 1.0, %v2594
        %v2596 = vmul.f32 %v2593, %v2595
        %v2597 = vadd.f32 %v2593, %v2596
        %vm2598 = vweird.f32 %v2562
        %vm2599 = vweird.f32 %v2593
        %vm2600 = vmor %vm2598, %vm2599
        %v2601 = vsel %vm2600, %v2593, %v2597
        %v2602 = vand.u32 2147483647, %v2562
        %vm2603 = vcmp.eq.f32.partialorder %v2602, 8.507059e+37
        %v2604 = vand.u32 %v2562, 2147483648
        %v2605 = vor.u32 1.1754944e-38, %v2604
        %v2606 = vsel %vm2603, %v2605, %v2601
        %v2607 = vmul.f32 %v2530, %v2606
        %v2608 = vrcp.pop %v2564
        %v2609 = vmul.f32 %v2564, %v2608
        %v2610 = vsub.f32 1.0, %v2609
        %v2611 = vmul.f32 %v2608, %v2610
        %v2612 = vadd.f32 %v2608, %v2611
        %vm2613 = vweird.f32 %v2564
        %vm2614 = vweird.f32 %v2608
        %vm2615 = vmor %vm2613, %vm2614
        %v2616 = vsel %vm2615, %v2608, %v2612
        %v2617 = vand.u32 2147483647, %v2564
        %vm2618 = vcmp.eq.f32.partialorder %v2617, 8.507059e+37
        %v2619 = vand.u32 %v2564, 2147483648
        %v2620 = vor.u32 1.1754944e-38, %v2619
        %v2621 = vsel %vm2618, %v2620, %v2616
        %v2622 = vmul.f32 %v2532, %v2621
        %v2623 = vrcp.pop %v2566
        %v2624 = vmul.f32 %v2566, %v2623
        %v2625 = vsub.f32 1.0, %v2624
        %v2626 = vmul.f32 %v2623, %v2625
        %v2627 = vadd.f32 %v2623, %v2626
        %vm2628 = vweird.f32 %v2566
        %vm2629 = vweird.f32 %v2623
        %vm2630 = vmor %vm2628, %vm2629
        %v2631 = vsel %vm2630, %v2623, %v2627
        %v2632 = vand.u32 2147483647, %v2566
        %vm2633 = vcmp.eq.f32.partialorder %v2632, 8.507059e+37
        %v2634 = vand.u32 %v2566, 2147483648
        %v2635 = vor.u32 1.1754944e-38, %v2634
        %v2636 = vsel %vm2633, %v2635, %v2631
        %v2637 = vmul.f32 %v2534, %v2636
        %v2638 = vrcp.pop %v2568
        %v2639 = vmul.f32 %v2568, %v2638
        %v2640 = vsub.f32 1.0, %v2639
        %v2641 = vmul.f32 %v2638, %v2640
        %v2642 = vadd.f32 %v2638, %v2641
        %vm2643 = vweird.f32 %v2568
        %vm2644 = vweird.f32 %v2638
        %vm2645 = vmor %vm2643, %vm2644
        %v2646 = vsel %vm2645, %v2638, %v2642
        %v2647 = vand.u32 2147483647, %v2568
        %vm2648 = vcmp.eq.f32.partialorder %v2647, 8.507059e+37
        %v2649 = vand.u32 %v2568, 2147483648
        %v2650 = vor.u32 1.1754944e-38, %v2649
        %v2651 = vsel %vm2648, %v2650, %v2646
        %v2652 = vmul.f32 %v2536, %v2651
        %v2653 = vrcp.pop %v2570
        %v2654 = vmul.f32 %v2570, %v2653
        %v2655 = vsub.f32 1.0, %v2654
        %v2656 = vmul.f32 %v2653, %v2655
        %v2657 = vadd.f32 %v2653, %v2656
        %vm2658 = vweird.f32 %v2570
        %vm2659 = vweird.f32 %v2653
        %vm2660 = vmor %vm2658, %vm2659
        %v2661 = vsel %vm2660, %v2653, %v2657
        %v2662 = vand.u32 2147483647, %v2570
        %vm2663 = vcmp.eq.f32.partialorder %v2662, 8.507059e+37
        %v2664 = vand.u32 %v2570, 2147483648
        %v2665 = vor.u32 1.1754944e-38, %v2664
        %v2666 = vsel %vm2663, %v2665, %v2661
        %v2667 = vmul.f32 %v2538, %v2666
        %v2668 = vrcp.pop %v2572
        %v2669 = vmul.f32 %v2572, %v2668
        %v2670 = vsub.f32 1.0, %v2669
        %v2671 = vmul.f32 %v2668, %v2670
        %v2672 = vadd.f32 %v2668, %v2671
        %vm2673 = vweird.f32 %v2572
        %vm2674 = vweird.f32 %v2668
        %vm2675 = vmor %vm2673, %vm2674
        %v2676 = vsel %vm2675, %v2668, %v2672
        %v2677 = vand.u32 2147483647, %v2572
        %vm2678 = vcmp.eq.f32.partialorder %v2677, 8.507059e+37
        %v2679 = vand.u32 %v2572, 2147483648
        %v2680 = vor.u32 1.1754944e-38, %v2679
        %v2681 = vsel %vm2678, %v2680, %v2676
        %v2682 = vmul.f32 %v2540, %v2681
        %v2683 = vrcp.pop %v2574
        %v2684 = vmul.f32 %v2574, %v2683
        %v2685 = vsub.f32 1.0, %v2684
        %v2686 = vmul.f32 %v2683, %v2685
        %v2687 = vadd.f32 %v2683, %v2686
        %vm2688 = vweird.f32 %v2574
        %vm2689 = vweird.f32 %v2683
        %vm2690 = vmor %vm2688, %vm2689
        %v2691 = vsel %vm2690, %v2683, %v2687
        %v2692 = vand.u32 2147483647, %v2574
        %vm2693 = vcmp.eq.f32.partialorder %v2692, 8.507059e+37
        %v2694 = vand.u32 %v2574, 2147483648
        %v2695 = vor.u32 1.1754944e-38, %v2694
        %v2696 = vsel %vm2693, %v2695, %v2691
        %v2697 = vmul.f32 %v2542, %v2696
        %v2698 = vrcp.pop %v2576
        %v2699 = vmul.f32 %v2576, %v2698
        %v2700 = vsub.f32 1.0, %v2699
        %v2701 = vmul.f32 %v2698, %v2700
        %v2702 = vadd.f32 %v2698, %v2701
        %vm2703 = vweird.f32 %v2576
        %vm2704 = vweird.f32 %v2698
        %vm2705 = vmor %vm2703, %vm2704
        %v2706 = vsel %vm2705, %v2698, %v2702
        %v2707 = vand.u32 2147483647, %v2576
        %vm2708 = vcmp.eq.f32.partialorder %v2707, 8.507059e+37
        %v2709 = vand.u32 %v2576, 2147483648
        %v2710 = vor.u32 1.1754944e-38, %v2709
        %v2711 = vsel %vm2708, %v2710, %v2706
        %v2712 = vmul.f32 %v2544, %v2711
        %v2713 = vrcp.pop %v2578
        %v2714 = vmul.f32 %v2578, %v2713
        %v2715 = vsub.f32 1.0, %v2714
        %v2716 = vmul.f32 %v2713, %v2715
        %v2717 = vadd.f32 %v2713, %v2716
        %vm2718 = vweird.f32 %v2578
        %vm2719 = vweird.f32 %v2713
        %vm2720 = vmor %vm2718, %vm2719
        %v2721 = vsel %vm2720, %v2713, %v2717
        %v2722 = vand.u32 2147483647, %v2578
        %vm2723 = vcmp.eq.f32.partialorder %v2722, 8.507059e+37
        %v2724 = vand.u32 %v2578, 2147483648
        %v2725 = vor.u32 1.1754944e-38, %v2724
        %v2726 = vsel %vm2723, %v2725, %v2721
        %v2727 = vmul.f32 %v2546, %v2726
        %v2728 = vrcp.pop %v2580
        %v2729 = vmul.f32 %v2580, %v2728
        %v2730 = vsub.f32 1.0, %v2729
        %v2731 = vmul.f32 %v2728, %v2730
        %v2732 = vadd.f32 %v2728, %v2731
        %vm2733 = vweird.f32 %v2580
        %vm2734 = vweird.f32 %v2728
        %vm2735 = vmor %vm2733, %vm2734
        %v2736 = vsel %vm2735, %v2728, %v2732
        %v2737 = vand.u32 2147483647, %v2580
        %vm2738 = vcmp.eq.f32.partialorder %v2737, 8.507059e+37
        %v2739 = vand.u32 %v2580, 2147483648
        %v2740 = vor.u32 1.1754944e-38, %v2739
        %v2741 = vsel %vm2738, %v2740, %v2736
        %v2742 = vmul.f32 %v2548, %v2741
        %v2743 = vrcp.pop %v2582
        %v2744 = vmul.f32 %v2582, %v2743
        %v2745 = vsub.f32 1.0, %v2744
        %v2746 = vmul.f32 %v2743, %v2745
        %v2747 = vadd.f32 %v2743, %v2746
        %vm2748 = vweird.f32 %v2582
        %vm2749 = vweird.f32 %v2743
        %vm2750 = vmor %vm2748, %vm2749
        %v2751 = vsel %vm2750, %v2743, %v2747
        %v2752 = vand.u32 2147483647, %v2582
        %vm2753 = vcmp.eq.f32.partialorder %v2752, 8.507059e+37
        %v2754 = vand.u32 %v2582, 2147483648
        %v2755 = vor.u32 1.1754944e-38, %v2754
        %v2756 = vsel %vm2753, %v2755, %v2751
        %v2757 = vmul.f32 %v2550, %v2756
        %v2758 = vrcp.pop %v2584
        %v2759 = vmul.f32 %v2584, %v2758
        %v2760 = vsub.f32 1.0, %v2759
        %v2761 = vmul.f32 %v2758, %v2760
        %v2762 = vadd.f32 %v2758, %v2761
        %vm2763 = vweird.f32 %v2584
        %vm2764 = vweird.f32 %v2758
        %vm2765 = vmor %vm2763, %vm2764
        %v2766 = vsel %vm2765, %v2758, %v2762
        %v2767 = vand.u32 2147483647, %v2584
        %vm2768 = vcmp.eq.f32.partialorder %v2767, 8.507059e+37
        %v2769 = vand.u32 %v2584, 2147483648
        %v2770 = vor.u32 1.1754944e-38, %v2769
        %v2771 = vsel %vm2768, %v2770, %v2766
        %v2772 = vmul.f32 %v2552, %v2771
        %v2773 = vrcp.pop %v2586
        %v2774 = vmul.f32 %v2586, %v2773
        %v2775 = vsub.f32 1.0, %v2774
        %v2776 = vmul.f32 %v2773, %v2775
        %v2777 = vadd.f32 %v2773, %v2776
        %vm2778 = vweird.f32 %v2586
        %vm2779 = vweird.f32 %v2773
        %vm2780 = vmor %vm2778, %vm2779
        %v2781 = vsel %vm2780, %v2773, %v2777
        %v2782 = vand.u32 2147483647, %v2586
        %vm2783 = vcmp.eq.f32.partialorder %v2782, 8.507059e+37
        %v2784 = vand.u32 %v2586, 2147483648
        %v2785 = vor.u32 1.1754944e-38, %v2784
        %v2786 = vsel %vm2783, %v2785, %v2781
        %v2787 = vmul.f32 %v2554, %v2786
        %v2788 = vrcp.pop %v2588
        %v2789 = vmul.f32 %v2588, %v2788
        %v2790 = vsub.f32 1.0, %v2789
        %v2791 = vmul.f32 %v2788, %v2790
        %v2792 = vadd.f32 %v2788, %v2791
        %vm2793 = vweird.f32 %v2588
        %vm2794 = vweird.f32 %v2788
        %vm2795 = vmor %vm2793, %vm2794
        %v2796 = vsel %vm2795, %v2788, %v2792
        %v2797 = vand.u32 2147483647, %v2588
        %vm2798 = vcmp.eq.f32.partialorder %v2797, 8.507059e+37
        %v2799 = vand.u32 %v2588, 2147483648
        %v2800 = vor.u32 1.1754944e-38, %v2799
        %v2801 = vsel %vm2798, %v2800, %v2796
        %v2802 = vmul.f32 %v2556, %v2801
        %v2803 = vrcp.pop %v2590
        %v2804 = vmul.f32 %v2590, %v2803
        %v2805 = vsub.f32 1.0, %v2804
        %v2806 = vmul.f32 %v2803, %v2805
        %v2807 = vadd.f32 %v2803, %v2806
        %vm2808 = vweird.f32 %v2590
        %vm2809 = vweird.f32 %v2803
        %vm2810 = vmor %vm2808, %vm2809
        %v2811 = vsel %vm2810, %v2803, %v2807
        %v2812 = vand.u32 2147483647, %v2590
        %vm2813 = vcmp.eq.f32.partialorder %v2812, 8.507059e+37
        %v2814 = vand.u32 %v2590, 2147483648
        %v2815 = vor.u32 1.1754944e-38, %v2814
        %v2816 = vsel %vm2813, %v2815, %v2811
        %v2817 = vmul.f32 %v2558, %v2816
        %v2818 = vrcp.pop %v2592
        %v2819 = vmul.f32 %v2592, %v2818
        %v2820 = vsub.f32 1.0, %v2819
        %v2821 = vmul.f32 %v2818, %v2820
        %v2822 = vadd.f32 %v2818, %v2821
        %vm2823 = vweird.f32 %v2592
        %vm2824 = vweird.f32 %v2818
        %vm2825 = vmor %vm2823, %vm2824
        %v2826 = vsel %vm2825, %v2818, %v2822
        %v2827 = vand.u32 2147483647, %v2592
        %vm2828 = vcmp.eq.f32.partialorder %v2827, 8.507059e+37
        %v2829 = vand.u32 %v2592, 2147483648
        %v2830 = vor.u32 1.1754944e-38, %v2829
        %v2831 = vsel %vm2828, %v2830, %v2826
        %v2832 = vmul.f32 %v2560, %v2831
        %2833 = vmatpush.msra.mxu0 %v2302
        %2834 = vmatpush.msra.mxu0 %v2299
        %2835 = vmatpush.msra.mxu0 %v2296
        %2836 = vmatpush.msra.mxu0 %v2293
        %2837 = vmatpush.msra.mxu0 %v2290
        %2838 = vmatpush.msra.mxu0 %v2287
        %2839 = vmatpush.msra.mxu0 %v2284
        %2840 = vmatpush.msra.mxu0 %v2281
        %2841 = vmatpush.msra.mxu0 %v2278
        %2842 = vmatpush.msra.mxu0 %v2275
        %2843 = vmatpush.msra.mxu0 %v2272
        %2844 = vmatpush.msra.mxu0 %v2269
        %2845 = vmatpush.msra.mxu0 %v2266
        %2846 = vmatpush.msra.mxu0 %v2263
        %2847 = vmatpush.msra.mxu0 %v2260
        %2848 = vmatpush.msra.mxu0 %v2257
        %2849 = vmatmul.f32.gmra.mxu0 %v2607
        %v2850 = vpop.f32.mrf.mxu0
        %v2851 = vadd.f32 0.0, %v2850
        %2852 = vmatmul.f32.gmra.mxu0 %v2622
        %v2853 = vpop.f32.mrf.mxu0
        %v2854 = vadd.f32 0.0, %v2853
        %2855 = vmatmul.f32.gmra.mxu0 %v2637
        %v2856 = vpop.f32.mrf.mxu0
        %v2857 = vadd.f32 0.0, %v2856
        %2858 = vmatmul.f32.gmra.mxu0 %v2652
        %v2859 = vpop.f32.mrf.mxu0
        %v2860 = vadd.f32 0.0, %v2859
        %2861 = vmatmul.f32.gmra.mxu0 %v2667
        %v2862 = vpop.f32.mrf.mxu0
        %v2863 = vadd.f32 0.0, %v2862
        %2864 = vmatmul.f32.gmra.mxu0 %v2682
        %v2865 = vpop.f32.mrf.mxu0
        %v2866 = vadd.f32 0.0, %v2865
        %2867 = vmatmul.f32.gmra.mxu0 %v2697
        %v2868 = vpop.f32.mrf.mxu0
        %v2869 = vadd.f32 0.0, %v2868
        %2870 = vmatmul.f32.gmra.mxu0 %v2712
        %v2871 = vpop.f32.mrf.mxu0
        %v2872 = vadd.f32 0.0, %v2871
        %2873 = vmatmul.f32.gmra.mxu0 %v2727
        %v2874 = vpop.f32.mrf.mxu0
        %v2875 = vadd.f32 0.0, %v2874
        %2876 = vmatmul.f32.gmra.mxu0 %v2742
        %v2877 = vpop.f32.mrf.mxu0
        %v2878 = vadd.f32 0.0, %v2877
        %2879 = vmatmul.f32.gmra.mxu0 %v2757
        %v2880 = vpop.f32.mrf.mxu0
        %v2881 = vadd.f32 0.0, %v2880
        %2882 = vmatmul.f32.gmra.mxu0 %v2772
        %v2883 = vpop.f32.mrf.mxu0
        %v2884 = vadd.f32 0.0, %v2883
        %2885 = vmatmul.f32.gmra.mxu0 %v2787
        %v2886 = vpop.f32.mrf.mxu0
        %v2887 = vadd.f32 0.0, %v2886
        %2888 = vmatmul.f32.gmra.mxu0 %v2802
        %v2889 = vpop.f32.mrf.mxu0
        %v2890 = vadd.f32 0.0, %v2889
        %2891 = vmatmul.f32.gmra.mxu0 %v2817
        %v2892 = vpop.f32.mrf.mxu0
        %v2893 = vadd.f32 0.0, %v2892
        %2894 = vmatmul.f32.gmra.mxu0 %v2832
        %v2895 = vpop.f32.mrf.mxu0
        %v2896 = vadd.f32 0.0, %v2895
        %2897 = vdwg.mxu0
        %v2898 = vld [vmem:[#allocation34] sm:$0xff]
        %2899 = vxpose.xlu0.b32.start [1/16] %v2898, 128
        %2900 = vxpose.xlu0.b32.cont [2/16] 0.0, 128
        %2901 = vxpose.xlu0.b32.cont [3/16] 0.0, 128
        %2902 = vxpose.xlu0.b32.cont [4/16] 0.0, 128
        %2903 = vxpose.xlu0.b32.cont [5/16] 0.0, 128
        %2904 = vxpose.xlu0.b32.cont [6/16] 0.0, 128
        %2905 = vxpose.xlu0.b32.cont [7/16] 0.0, 128
        %2906 = vxpose.xlu0.b32.cont [8/16] 0.0, 128
        %2907 = vxpose.xlu0.b32.cont [9/16] 0.0, 128
        %2908 = vxpose.xlu0.b32.cont [10/16] 0.0, 128
        %2909 = vxpose.xlu0.b32.cont [11/16] 0.0, 128
        %2910 = vxpose.xlu0.b32.cont [12/16] 0.0, 128
        %2911 = vxpose.xlu0.b32.cont [13/16] 0.0, 128
        %2912 = vxpose.xlu0.b32.cont [14/16] 0.0, 128
        %2913 = vxpose.xlu0.b32.cont [15/16] 0.0, 128
        %2914 = vxpose.xlu0.b32.end [16/16] 0.0, 128
        %v2915 = vpop.trf.xlu0
        %v2916 = vpop.trf.xlu0
        %v2917 = vpop.trf.xlu0
        %v2918 = vpop.trf.xlu0
        %v2919 = vpop.trf.xlu0
        %v2920 = vpop.trf.xlu0
        %v2921 = vpop.trf.xlu0
        %v2922 = vpop.trf.xlu0
        %v2923 = vpop.trf.xlu0
        %v2924 = vpop.trf.xlu0
        %v2925 = vpop.trf.xlu0
        %v2926 = vpop.trf.xlu0
        %v2927 = vpop.trf.xlu0
        %v2928 = vpop.trf.xlu0
        %v2929 = vpop.trf.xlu0
        %v2930 = vpop.trf.xlu0
        %v2932 = vsel %vm1893, %v2915, 0
        %v2935 = vsel %vm1893, %v2851, 0
        %v2938 = vsel %vm1893, %v2854, 0
        %v2941 = vsel %vm1893, %v2857, 0
        %v2944 = vsel %vm1893, %v2860, 0
        %v2947 = vsel %vm1893, %v2863, 0
        %v2950 = vsel %vm1893, %v2866, 0
        %v2953 = vsel %vm1893, %v2869, 0
        %v2956 = vsel %vm1893, %v2872, 0
        %v2959 = vsel %vm1893, %v2875, 0
        %v2962 = vsel %vm1893, %v2878, 0
        %v2965 = vsel %vm1893, %v2881, 0
        %v2968 = vsel %vm1893, %v2884, 0
        %v2971 = vsel %vm1893, %v2887, 0
        %v2974 = vsel %vm1893, %v2890, 0
        %v2977 = vsel %vm1893, %v2893, 0
        %v2980 = vsel %vm1893, %v2896, 0
        %2982 = vmatpush.xpose.msra.mxu0 %v2980
        %2983 = vmatpush.xpose.msra.mxu0 %v2977
        %2984 = vmatpush.xpose.msra.mxu0 %v2974
        %2985 = vmatpush.xpose.msra.mxu0 %v2971
        %2986 = vmatpush.xpose.msra.mxu0 %v2968
        %2987 = vmatpush.xpose.msra.mxu0 %v2965
        %2988 = vmatpush.xpose.msra.mxu0 %v2962
        %2989 = vmatpush.xpose.msra.mxu0 %v2959
        %2990 = vmatpush.xpose.msra.mxu0 %v2956
        %2991 = vmatpush.xpose.msra.mxu0 %v2953
        %2992 = vmatpush.xpose.msra.mxu0 %v2950
        %2993 = vmatpush.xpose.msra.mxu0 %v2947
        %2994 = vmatpush.xpose.msra.mxu0 %v2944
        %2995 = vmatpush.xpose.msra.mxu0 %v2941
        %2996 = vmatpush.xpose.msra.mxu0 %v2938
        %2997 = vmatpush.xpose.msra.mxu0 %v2935
        %2998 = vmatmul.f32.gmra.mxu0 %v2932
        %v2999 = vpop.f32.mrf.mxu0
        %v3000 = vadd.f32 0.0, %v2999
        %3001 = vdwg.mxu0
        %v3002 = vadd.f32 %v1982, %v3000
        %v3003 = vld [vmem:[%s55] sm:$0xff]
        %3005 = vset.pattern.permute.xlu0 0
        %3006 = vperm.xlu0 %3005, %v3003
        %v3007 = vpop.permute.xlu0 %3006
        %v3009 = vadd.f32 %v3002, %v3007
        %v3010 = vld [vmem:[%s57] sm:$0x1]
        %v3011 = vld [vmem:[%s59] sm:$0x1]
        %3012 = vadd.xlane.f32.xlu0 %v3009
        %v3013 = vpop.xlane.xlu0 %3012
        %v3014 = vmul.f32 %v3013, %v1591
        %v3015 = vsub.f32 %v3009, %v3014
        %v3016 = vmul.f32 %v3015, %v3015
        %3017 = vadd.xlane.f32.xlu0 %v3016
        %v3018 = vpop.xlane.xlu0 %3017
        %v3019 = vmul.f32 %v3018, %v1591
        %v3020 = vadd.f32 %v3019, 1e-05
        %v3021 = vrsqrt.pop %v3020
        %v3022 = vmul.f32 %v3021, %v3020
        %v3023 = vmul.f32 %v3022, %v3021
        %v3024 = vmul.f32 0.5, %v3023
        %v3025 = vsub.f32 1.5, %v3024
        %v3026 = vmul.f32 %v3021, %v3025
        %vm3027 = vweird.f32 %v3020
        %vm3028 = vweird.f32 %v3021
        %vm3029 = vmor %vm3027, %vm3028
        %v3030 = vsel %vm3029, %v3021, %v3026
        %v3031 = vmul.f32 %v3015, %v3030
        %v3033 = vperm.slane %v3010, 0
        %v3035 = vmul.f32 %v3031, %v3033
        %v3037 = vperm.slane %v3011, 0
        %v3039 = vadd.f32 %v3035, %v3037
        %v3040 = vld [vmem:[#allocation35] sm:$0xff]
        %v3041 = vld [vmem:[#allocation35 + $0x8] sm:$0xff]
        %v3042 = vld [vmem:[#allocation35 + $0x10] sm:$0xff]
        %v3043 = vld [vmem:[#allocation35 + $0x18] sm:$0xff]
        %v3044 = vld [vmem:[#allocation35 + $0x20] sm:$0xff]
        %v3045 = vld [vmem:[#allocation35 + $0x28] sm:$0xff]
        %v3046 = vld [vmem:[#allocation35 + $0x30] sm:$0xff]
        %v3047 = vld [vmem:[#allocation35 + $0x38] sm:$0xff]
        %v3048 = vld [vmem:[#allocation35 + $0x40] sm:$0xff]
        %v3049 = vld [vmem:[#allocation35 + $0x48] sm:$0xff]
        %v3050 = vld [vmem:[#allocation35 + $0x50] sm:$0xff]
        %v3051 = vld [vmem:[#allocation35 + $0x58] sm:$0xff]
        %v3052 = vld [vmem:[#allocation35 + $0x60] sm:$0xff]
        %v3053 = vld [vmem:[#allocation35 + $0x68] sm:$0xff]
        %v3054 = vld [vmem:[#allocation35 + $0x70] sm:$0xff]
        %v3055 = vld [vmem:[#allocation35 + $0x78] sm:$0xff]
        %v3056 = vld [vmem:[%s63] sm:$0x1]
        %v3058 = vperm.slane %v3056, 0
        %3060 = vmatpush.msra.mxu0 %v3055
        %3061 = vmatpush.msra.mxu0 %v3054
        %3062 = vmatpush.msra.mxu0 %v3053
        %3063 = vmatpush.msra.mxu0 %v3052
        %3064 = vmatpush.msra.mxu0 %v3051
        %3065 = vmatpush.msra.mxu0 %v3050
        %3066 = vmatpush.msra.mxu0 %v3049
        %3067 = vmatpush.msra.mxu0 %v3048
        %3068 = vmatpush.msra.mxu0 %v3047
        %3069 = vmatpush.msra.mxu0 %v3046
        %3070 = vmatpush.msra.mxu0 %v3045
        %3071 = vmatpush.msra.mxu0 %v3044
        %3072 = vmatpush.msra.mxu0 %v3043
        %3073 = vmatpush.msra.mxu0 %v3042
        %3074 = vmatpush.msra.mxu0 %v3041
        %3075 = vmatpush.msra.mxu0 %v3040
        %3076 = vmatmul.f32.gmra.mxu0 %v3039
        %v3077 = vpop.f32.mrf.mxu0
        %v3078 = vadd.f32 %v3058, %v3077
        %3079 = vdwg.mxu0
        %v3080 = vld [vmem:[#allocation37] sm:$0xff]
        %v3081 = vld [vmem:[#allocation37 + $0x8] sm:$0xff]
        %v3082 = vld [vmem:[#allocation37 + $0x10] sm:$0xff]
        %v3083 = vld [vmem:[#allocation37 + $0x18] sm:$0xff]
        %v3084 = vld [vmem:[#allocation37 + $0x20] sm:$0xff]
        %v3085 = vld [vmem:[#allocation37 + $0x28] sm:$0xff]
        %v3086 = vld [vmem:[#allocation37 + $0x30] sm:$0xff]
        %v3087 = vld [vmem:[#allocation37 + $0x38] sm:$0xff]
        %v3088 = vld [vmem:[#allocation37 + $0x40] sm:$0xff]
        %v3089 = vld [vmem:[#allocation37 + $0x48] sm:$0xff]
        %v3090 = vld [vmem:[#allocation37 + $0x50] sm:$0xff]
        %v3091 = vld [vmem:[#allocation37 + $0x58] sm:$0xff]
        %v3092 = vld [vmem:[#allocation37 + $0x60] sm:$0xff]
        %v3093 = vld [vmem:[#allocation37 + $0x68] sm:$0xff]
        %v3094 = vld [vmem:[#allocation37 + $0x70] sm:$0xff]
        %v3095 = vld [vmem:[#allocation37 + $0x78] sm:$0xff]
        %v3096 = vld [vmem:[%s67] sm:$0x1]
        %v3098 = vperm.slane %v3096, 0
        %3100 = vmatpush.msra.mxu0 %v3095
        %3101 = vmatpush.msra.mxu0 %v3094
        %3102 = vmatpush.msra.mxu0 %v3093
        %3103 = vmatpush.msra.mxu0 %v3092
        %3104 = vmatpush.msra.mxu0 %v3091
        %3105 = vmatpush.msra.mxu0 %v3090
        %3106 = vmatpush.msra.mxu0 %v3089
        %3107 = vmatpush.msra.mxu0 %v3088
        %3108 = vmatpush.msra.mxu0 %v3087
        %3109 = vmatpush.msra.mxu0 %v3086
        %3110 = vmatpush.msra.mxu0 %v3085
        %3111 = vmatpush.msra.mxu0 %v3084
        %3112 = vmatpush.msra.mxu0 %v3083
        %3113 = vmatpush.msra.mxu0 %v3082
        %3114 = vmatpush.msra.mxu0 %v3081
        %3115 = vmatpush.msra.mxu0 %v3080
        %3116 = vmatmul.f32.gmra.mxu0 %v3039
        %v3117 = vpop.f32.mrf.mxu0
        %v3118 = vadd.f32 %v3098, %v3117
        %3119 = vdwg.mxu0
        %v3120 = vxor.u32 %v3118, 2147483648
        %v3121 = vmul.f32 %v3120, 1.442695
        %v3122 = vpow.pop %v3121
        %v3123 = vadd.f32 %v3122, 1.0
        %v3124 = vrcp.pop %v3123
        %v3125 = vmul.f32 %v3123, %v3124
        %v3126 = vsub.f32 1.0, %v3125
        %v3127 = vmul.f32 %v3124, %v3126
        %v3128 = vadd.f32 %v3124, %v3127
        %vm3129 = vweird.f32 %v3123
        %vm3130 = vweird.f32 %v3124
        %vm3131 = vmor %vm3129, %vm3130
        %v3132 = vsel %vm3131, %v3124, %v3128
        %v3133 = vand.u32 2147483647, %v3123
        %vm3134 = vcmp.eq.f32.partialorder %v3133, 8.507059e+37
        %v3135 = vand.u32 %v3123, 2147483648
        %v3136 = vor.u32 1.1754944e-38, %v3135
        %v3137 = vsel %vm3134, %v3136, %v3132
        %v3138 = vmul.f32 1.0, %v3137
        %v3139 = vmul.f32 %v3078, %v3138
        %v3140 = vld [vmem:[%s69] sm:$0x7]
        %v3141 = vlaneseq
        %v3142 = vshrl.u32 %v3141, 7
        %v3143 = vrot.slane %v3139, 7
        %v3144 = vperm.slane %v3140, 0
        %v3145 = vmul.f32 %v3143, %v3144
        %vm3146 = vcmp.ge.s32.totalorder %v3142, 1
        %v3147 = vsel %vm3146, 1, 0
        %vm3148 = vcmp.eq.s32.totalorder %v3147, 1
        %v3149 = vsel %vm3148, %v3145, 0.0
        %v3150 = vadd.f32 %v3149, 0.0
        %v3151 = vperm.slane %v3140, 1
        %v3152 = vmul.f32 %v3139, %v3151
        %v3153 = vadd.f32 %v3150, %v3152
        %v3154 = vrot.slane %v3139, 1
        %v3155 = vperm.slane %v3140, 2
        %v3156 = vmul.f32 %v3154, %v3155
        %vm3157 = vcmp.lt.s32.totalorder %v3142, 7
        %v3158 = vsel %vm3157, 1, 0
        %vm3159 = vcmp.eq.s32.totalorder %v3158, 1
        %v3160 = vsel %vm3159, %v3156, 0.0
        %v3161 = vadd.f32 %v3153, %v3160
        %v3162 = vld [vmem:[%s71] sm:$0x1]
        %v3164 = vperm.slane %v3162, 0
        %v3166 = vadd.f32 %v3161, %v3164
        %v3167 = vxor.u32 %v3166, 2147483648
        %v3168 = vmul.f32 %v3167, 1.442695
        %v3169 = vpow.pop %v3168
        %v3170 = vadd.f32 %v3169, 1.0
        %v3171 = vrcp.pop %v3170
        %v3172 = vmul.f32 %v3170, %v3171
        %v3173 = vsub.f32 1.0, %v3172
        %v3174 = vmul.f32 %v3171, %v3173
        %v3175 = vadd.f32 %v3171, %v3174
        %vm3176 = vweird.f32 %v3170
        %vm3177 = vweird.f32 %v3171
        %vm3178 = vmor %vm3176, %vm3177
        %v3179 = vsel %vm3178, %v3171, %v3175
        %v3180 = vand.u32 2147483647, %v3170
        %vm3181 = vcmp.eq.f32.partialorder %v3180, 8.507059e+37
        %v3182 = vand.u32 %v3170, 2147483648
        %v3183 = vor.u32 1.1754944e-38, %v3182
        %v3184 = vsel %vm3181, %v3183, %v3179
        %v3185 = vmul.f32 1.0, %v3184
        %v3186 = vmul.f32 %v3166, %v3185
        %v3187 = vld [vmem:[#allocation38] sm:$0xff]
        %v3188 = vld [vmem:[#allocation38 + $0x8] sm:$0xff]
        %v3189 = vld [vmem:[#allocation38 + $0x10] sm:$0xff]
        %v3190 = vld [vmem:[#allocation38 + $0x18] sm:$0xff]
        %v3191 = vld [vmem:[#allocation38 + $0x20] sm:$0xff]
        %v3192 = vld [vmem:[#allocation38 + $0x28] sm:$0xff]
        %v3193 = vld [vmem:[#allocation38 + $0x30] sm:$0xff]
        %v3194 = vld [vmem:[#allocation38 + $0x38] sm:$0xff]
        %v3195 = vld [vmem:[#allocation38 + $0x40] sm:$0xff]
        %v3196 = vld [vmem:[#allocation38 + $0x48] sm:$0xff]
        %v3197 = vld [vmem:[#allocation38 + $0x50] sm:$0xff]
        %v3198 = vld [vmem:[#allocation38 + $0x58] sm:$0xff]
        %v3199 = vld [vmem:[#allocation38 + $0x60] sm:$0xff]
        %v3200 = vld [vmem:[#allocation38 + $0x68] sm:$0xff]
        %v3201 = vld [vmem:[#allocation38 + $0x70] sm:$0xff]
        %v3202 = vld [vmem:[#allocation38 + $0x78] sm:$0xff]
        %v3203 = vld [vmem:[%s75] sm:$0x1]
        %v3205 = vperm.slane %v3203, 0
        %3207 = vmatpush.msra.mxu0 %v3202
        %3208 = vmatpush.msra.mxu0 %v3201
        %3209 = vmatpush.msra.mxu0 %v3200
        %3210 = vmatpush.msra.mxu0 %v3199
        %3211 = vmatpush.msra.mxu0 %v3198
        %3212 = vmatpush.msra.mxu0 %v3197
        %3213 = vmatpush.msra.mxu0 %v3196
        %3214 = vmatpush.msra.mxu0 %v3195
        %3215 = vmatpush.msra.mxu0 %v3194
        %3216 = vmatpush.msra.mxu0 %v3193
        %3217 = vmatpush.msra.mxu0 %v3192
        %3218 = vmatpush.msra.mxu0 %v3191
        %3219 = vmatpush.msra.mxu0 %v3190
        %3220 = vmatpush.msra.mxu0 %v3189
        %3221 = vmatpush.msra.mxu0 %v3188
        %3222 = vmatpush.msra.mxu0 %v3187
        %3223 = vmatmul.f32.gmra.mxu0 %v3186
        %v3224 = vpop.f32.mrf.mxu0
        %v3225 = vadd.f32 %v3205, %v3224
        %3226 = vdwg.mxu0
        %v3227 = vadd.f32 %v3009, %v3225
        %3228 = vadd.xlane.f32.xlu0 %v3227
        %v3229 = vpop.xlane.xlu0 %3228
        %v3230 = vmul.f32 %v3229, %v1591
        %v3231 = vsub.f32 %v3227, %v3230
        %v3232 = vmul.f32 %v3231, %v3231
        %3233 = vadd.xlane.f32.xlu0 %v3232
        %v3234 = vpop.xlane.xlu0 %3233
        %v3235 = vmul.f32 %v3234, %v1591
        %v3236 = vadd.f32 %v3235, 1e-05
        %v3237 = vrsqrt.pop %v3236
        %v3238 = vmul.f32 %v3237, %v3236
        %v3239 = vmul.f32 %v3238, %v3237
        %v3240 = vmul.f32 0.5, %v3239
        %v3241 = vsub.f32 1.5, %v3240
        %v3242 = vmul.f32 %v3237, %v3241
        %vm3243 = vweird.f32 %v3236
        %vm3244 = vweird.f32 %v3237
        %vm3245 = vmor %vm3243, %vm3244
        %v3246 = vsel %vm3245, %v3237, %v3242
        %v3247 = vmul.f32 %v3231, %v3246
        %v3248 = vmul.f32 %v3247, %v1611
        %v3249 = vadd.f32 %v3248, %v1615
        %3250 = vmatpush.msra.mxu0 %v1633
        %3251 = vmatpush.msra.mxu0 %v1632
        %3252 = vmatpush.msra.mxu0 %v1631
        %3253 = vmatpush.msra.mxu0 %v1630
        %3254 = vmatpush.msra.mxu0 %v1629
        %3255 = vmatpush.msra.mxu0 %v1628
        %3256 = vmatpush.msra.mxu0 %v1627
        %3257 = vmatpush.msra.mxu0 %v1626
        %3258 = vmatpush.msra.mxu0 %v1625
        %3259 = vmatpush.msra.mxu0 %v1624
        %3260 = vmatpush.msra.mxu0 %v1623
        %3261 = vmatpush.msra.mxu0 %v1622
        %3262 = vmatpush.msra.mxu0 %v1621
        %3263 = vmatpush.msra.mxu0 %v1620
        %3264 = vmatpush.msra.mxu0 %v1619
        %3265 = vmatpush.msra.mxu0 %v1618
        %3266 = vmatmul.f32.gmra.mxu0 %v3249
        %v3267 = vpop.f32.mrf.mxu0
        %v3268 = vadd.f32 %v1636, %v3267
        %3269 = vdwg.mxu0
        %v3270 = vxor.u32 %v3268, 2147483648
        %v3271 = vmul.f32 %v3270, 1.442695
        %v3272 = vpow.pop %v3271
        %v3273 = vadd.f32 %v3272, 1.0
        %v3274 = vrcp.pop %v3273
        %v3275 = vmul.f32 %v3273, %v3274
        %v3276 = vsub.f32 1.0, %v3275
        %v3277 = vmul.f32 %v3274, %v3276
        %v3278 = vadd.f32 %v3274, %v3277
        %vm3279 = vweird.f32 %v3273
        %vm3280 = vweird.f32 %v3274
        %vm3281 = vmor %vm3279, %vm3280
        %v3282 = vsel %vm3281, %v3274, %v3278
        %v3283 = vand.u32 2147483647, %v3273
        %vm3284 = vcmp.eq.f32.partialorder %v3283, 8.507059e+37
        %v3285 = vand.u32 %v3273, 2147483648
        %v3286 = vor.u32 1.1754944e-38, %v3285
        %v3287 = vsel %vm3284, %v3286, %v3282
        %v3288 = vmul.f32 1.0, %v3287
        %v3289 = vmul.f32 %v3268, %v3288
        %3290 = vmatpush.msra.mxu0 %v1693
        %3291 = vmatpush.msra.mxu0 %v1692
        %3292 = vmatpush.msra.mxu0 %v1691
        %3293 = vmatpush.msra.mxu0 %v1690
        %3294 = vmatpush.msra.mxu0 %v1689
        %3295 = vmatpush.msra.mxu0 %v1688
        %3296 = vmatpush.msra.mxu0 %v1687
        %3297 = vmatpush.msra.mxu0 %v1686
        %3298 = vmatpush.msra.mxu0 %v1685
        %3299 = vmatpush.msra.mxu0 %v1684
        %3300 = vmatpush.msra.mxu0 %v1683
        %3301 = vmatpush.msra.mxu0 %v1682
        %3302 = vmatpush.msra.mxu0 %v1681
        %3303 = vmatpush.msra.mxu0 %v1680
        %3304 = vmatpush.msra.mxu0 %v1679
        %3305 = vmatpush.msra.mxu0 %v1678
        %3306 = vmatmul.f32.gmra.mxu0 %v3289
        %v3307 = vpop.f32.mrf.mxu0
        %v3308 = vadd.f32 %v1696, %v3307
        %3309 = vdwg.mxu0
        %v3310 = vmul.f32 %v3308, 0.5
        %v3311 = vadd.f32 %v3227, %v3310
        %v3312 = vld [vmem:[%s77] sm:$0x1]
        %v3313 = vld [vmem:[%s79] sm:$0x1]
        %3314 = vadd.xlane.f32.xlu0 %v3311
        %v3315 = vpop.xlane.xlu0 %3314
        %v3316 = vmul.f32 %v3315, %v1591
        %v3317 = vsub.f32 %v3311, %v3316
        %v3318 = vmul.f32 %v3317, %v3317
        %3319 = vadd.xlane.f32.xlu0 %v3318
        %v3320 = vpop.xlane.xlu0 %3319
        %v3321 = vmul.f32 %v3320, %v1591
        %v3322 = vadd.f32 %v3321, 1e-05
        %v3323 = vrsqrt.pop %v3322
        %v3324 = vmul.f32 %v3323, %v3322
        %v3325 = vmul.f32 %v3324, %v3323
        %v3326 = vmul.f32 0.5, %v3325
        %v3327 = vsub.f32 1.5, %v3326
        %v3328 = vmul.f32 %v3323, %v3327
        %vm3329 = vweird.f32 %v3322
        %vm3330 = vweird.f32 %v3323
        %vm3331 = vmor %vm3329, %vm3330
        %v3332 = vsel %vm3331, %v3323, %v3328
        %v3333 = vmul.f32 %v3317, %v3332
        %v3335 = vperm.slane %v3312, 0
        %v3337 = vmul.f32 %v3333, %v3335
        %v3339 = vperm.slane %v3313, 0
        %v3341 = vadd.f32 %v3337, %v3339
        %3342 = vst [vmem:[%s1579] sm:$0xff] %v3341
        %s3343 = sand.u32 %s963, 1
        %s3344 = scalar_lea.sflag [#allocation4], %s3343
        %s3345 = sand.u32 %s963, 1
        %s3346 = smul.addr %s3345, 8
        %s3347 = scalar_lea.vmem [#allocation40], %s3346
        // Predicated region
        $region277: #{tpu_custom_call.1} parent=179 // pred_check
          %p3348 = pneg %p973
        $region278: #{tpu_custom_call.1} parent=179 // pred_check_branch
          %3350 = sbr.rel (%p3348) target = $region280
        $region279: #{tpu_custom_call.1} parent=179 // pred_region
          %3352 = vsyncadd %s3344, 0
          %s3353 = smul.addr %s110, 8
          %s3354 = scalar_lea.hbm %s81, %s3353
          %s3356 = sshll.u32 %s3347, 4
          %s3357 = int_to_ptr.vmem [resolvable:$true] %s3356
          %s3358 = sshll.u32 %s3354, 4
          %s3359 = int_to_ptr.hbm [resolvable:$true] %s3358
          %3361 = dma.vmem_to_hbm [thread:$0]  %s3357, 128, %s3359, %s3344
        $region280: #{tpu_custom_call.1} parent=179 // pred_fallthru
          _
      $region180: #{tpu_custom_call.1} parent=5 // pred_fallthru
        _
      %p3362 = scmp.le.s32.totalorder 2, %s105
      // Predicated region
      $region281: #{tpu_custom_call.1} parent=5 // pred_check
        %p3363 = pneg %p3362
      $region282: #{tpu_custom_call.1} parent=5 // pred_check_branch
        %3365 = sbr.rel (%p3363) target = $region284
      $region283: #{tpu_custom_call.1} parent=5 // pred_region
        %s3366 = ssub.s32 %s105, 2
        // Predicated region
        $region285: #{tpu_custom_call.1} parent=283 // pred_check
          %p3367 = pneg %p979
        $region286: #{tpu_custom_call.1} parent=283 // pred_check_branch
          %3369 = sbr.rel (%p3367) target = $region288
        $region287: #{tpu_custom_call.1} parent=283 // pred_region
          %s3370 = sand.u32 %s964, 1
          %s3371 = scalar_lea.sflag [#allocation4], %s3370
          %s3372 = sand.u32 %s964, 1
          %s3373 = smul.addr %s3372, 8
          %s3374 = scalar_lea.vmem [#allocation40], %s3373
          %3376 = dma.done %s3371, 128
        $region288: #{tpu_custom_call.1} parent=283 // pred_fallthru
          _
      $region284: #{tpu_custom_call.1} parent=5 // pred_fallthru
        _
    $region6: #{tpu_custom_call.1} parent=1 // loop_footer
      %s109 = sadd.s32 1, %s105
    $region7: #{tpu_custom_call.1} parent=1 // loop_footer_branch
      %104 = sbr.rel target = $region3
    $region8: #{tpu_custom_call.1} parent=1 // loop_exit
      _
    %3377 = vsyncpa [#allocation3], 1
    %s3378 = scalar_lea.sflag [#allocation3], 1
    %3379 = vsyncpa %s3378, 1
    %3380 = vsyncpa [#allocation6], 1
    %3381 = vsyncpa [#allocation9], 1
    %3382 = vsyncpa [#allocation12], 1
    %3383 = vsyncpa [#allocation15], 1
    %3384 = vsyncpa [#allocation18], 1
    %3385 = vsyncpa [#allocation21], 1
    %3386 = vsyncpa [#allocation24], 1
    %3387 = vsyncpa [#allocation27], 1
    %3388 = vsyncpa [#allocation30], 1
    %3389 = vsyncpa [#allocation33], 1
    %3390 = vsyncpa [#allocation36], 1
    %3391 = vsyncpa [#allocation39], 1
    %3392 = vsyncpa [#allocation4], 1
    %s3393 = scalar_lea.sflag [#allocation4], 1
    %3394 = vsyncpa %s3393, 1

</llo_original>
